<compile_context>
chip_gen: v7x
topology: tpu7x:2x2x1
jax: 0.10.0
libtpu: 0.0.40
codegen_flags: <defaults>
</compile_context>

<pallas_src>
import functools
import math

import jax
import jax.numpy as jnp
from jax.experimental import pallas as pl
from jax.experimental.pallas import tpu as pltpu


def _encoder_kernel(x_ref,
                    wq_ref, bq_ref, wk_ref, bk_ref, wv_ref, bv_ref,
                    wo_ref, bo_ref,
                    g1_ref, be1_ref, g2_ref, be2_ref,
                    w1_ref, b1_ref, w2_ref, b2_ref,
                    o_ref,
                    k_sc, v_sc,
                    *, num_heads, eps, q_tile):
    f32 = jnp.float32
    bf16 = jnp.bfloat16

    qi = pl.program_id(1)
    S = x_ref.shape[1]
    D = x_ref.shape[2]
    H = num_heads
    hd = D // H
    tq = q_tile
    scale = 1.0 / math.sqrt(hd)

    # ---- K / V projections: once per batch element ------------------------
    @pl.when(qi == 0)
    def _():
        x_full = x_ref[0].astype(bf16)                                    # (S, D)
        k = jnp.dot(x_full, wk_ref[...], preferred_element_type=f32) + bk_ref[...]
        v = jnp.dot(x_full, wv_ref[...], preferred_element_type=f32) + bv_ref[...]
        # Store head-split, bf16: (H, S, hd) — reused by every query tile.
        k_sc[...] = jnp.swapaxes(k.reshape(S, H, hd), 0, 1).astype(bf16)
        v_sc[...] = jnp.swapaxes(v.reshape(S, H, hd), 0, 1).astype(bf16)

    # ---- Q projection for this query tile ---------------------------------
    start = pl.multiple_of(qi * tq, tq)
    x_q = x_ref[0, pl.ds(start, tq), :]                                   # (tq, D) f32 residual
    q = (jnp.dot(x_q.astype(bf16), wq_ref[...], preferred_element_type=f32)
         + bq_ref[...]) * scale                                           # fold 1/sqrt(hd) into q
    qh = jnp.swapaxes(q.astype(bf16).reshape(tq, H, hd), 0, 1)            # (H, tq, hd)

    # ---- Batched multi-head attention (all heads in one einsum) -----------
    s = jnp.einsum("hqd,hkd->hqk", qh, k_sc[...],
                   preferred_element_type=f32)                            # (H, tq, S)
    m = jnp.max(s, axis=-1, keepdims=True)
    p = jnp.exp(s - m)                                                    # fp32 softmax numerator
    l = jnp.sum(p, axis=-1, keepdims=True)
    o_h = jnp.einsum("hqk,hkd->hqd", p.astype(bf16), v_sc[...],
                     preferred_element_type=f32)                          # (H, tq, hd)
    o_h = o_h * pl.reciprocal(l, approx=True)                             # normalize post-PV (EUP)
    attn = jnp.swapaxes(o_h, 0, 1).reshape(tq, D)                         # (tq, D)
    attn = (jnp.dot(attn.astype(bf16), wo_ref[...], preferred_element_type=f32)
            + bo_ref[...])

    # TODO(synk): nn.Dropout is identity at inference; no RNG dropout emitted.

    # ---- residual + LayerNorm (fp32, one-pass variance + rsqrt) -----------
    def layer_norm(t, g_ref, b_ref):
        mu = jnp.mean(t, axis=-1, keepdims=True)
        var = jnp.maximum(jnp.mean(t * t, axis=-1, keepdims=True) - mu * mu, 0.0)
        inv = jax.lax.rsqrt(var + eps)
        return (t - mu) * inv * g_ref[...] + b_ref[...]

    x1 = layer_norm(x_q + attn, g1_ref, be1_ref)                          # (tq, D)

    # ---- Position-wise FFN -------------------------------------------------
    h1 = (jnp.dot(x1.astype(bf16), w1_ref[...], preferred_element_type=f32)
          + b1_ref[...])
    h1 = jnp.maximum(h1, 0.0)                                             # ReLU
    f = (jnp.dot(h1.astype(bf16), w2_ref[...], preferred_element_type=f32)
         + b2_ref[...])

    out = layer_norm(x1 + f, g2_ref, be2_ref)                             # (tq, D)
    o_ref[0] = out.astype(o_ref.dtype)


def transformer_encoder_block(x, params, *, num_heads=8, eps=1e-5, q_tile=None):
    B, S, D = x.shape
    F = params["w1"].shape[1]
    assert D % num_heads == 0

    if q_tile is None:
        q_tile = S if S <= 256 else 256
    assert S % q_tile == 0
    nq = S // q_tile
    hd = D // num_heads
    bf16 = jnp.bfloat16

    # Cast weights to bf16 once outside the kernel (halves DMA + VMEM);
    # biases / LayerNorm params stay fp32 and are applied on fp32 accumulators.
    wq, wk, wv, wo = (params[n].astype(bf16) for n in ("wq", "wk", "wv", "wo"))
    w1, w2 = params["w1"].astype(bf16), params["w2"].astype(bf16)

    full2d = lambda shape: pl.BlockSpec(shape, lambda b, qi: (0, 0))

    kernel = functools.partial(_encoder_kernel, num_heads=num_heads, eps=eps,
                               q_tile=q_tile)

    # Explicit scoped-VMEM budget (weights double-buffered by the pipeline,
    # bf16 K/V scratch, I/O blocks, live intermediates) with headroom, capped
    # at 64 MiB so it stays valid on v7x.
    bytes_weights = 2 * (4 * D * D + 2 * D * F)            # bf16 weights
    bytes_params = 4 * (8 * D + F)                         # fp32 biases / LN
    bytes_io = 4 * (S * D + q_tile * D) * 2                # x + out blocks (2-buf)
    bytes_scratch = 2 * 2 * S * D                          # bf16 K/V scratch
    bytes_act = 4 * (num_heads * q_tile * S + q_tile * F + 6 * q_tile * D)
    vmem_limit = int(min(max(2 * (2 * bytes_weights + bytes_params + bytes_io
                                  + bytes_scratch + bytes_act),
                             8 << 20), 64 << 20))

    return pl.pallas_call(
        kernel,
        out_shape=jax.ShapeDtypeStruct((B, S, D), x.dtype),
        grid_spec=pltpu.PrefetchScalarGridSpec(
            num_scalar_prefetch=0,
            grid=(B, nq),
            in_specs=[
                pl.BlockSpec((1, S, D), lambda b, qi: (b, 0, 0)),   # x (full seq per batch)
                full2d((D, D)), full2d((1, D)),                     # wq, bq
                full2d((D, D)), full2d((1, D)),                     # wk, bk
                full2d((D, D)), full2d((1, D)),                     # wv, bv
                full2d((D, D)), full2d((1, D)),                     # wo, bo
                full2d((1, D)), full2d((1, D)),                     # gamma1, beta1
                full2d((1, D)), full2d((1, D)),                     # gamma2, beta2
                full2d((D, F)), full2d((1, F)),                     # w1, b1
                full2d((F, D)), full2d((1, D)),                     # w2, b2
            ],
            out_specs=pl.BlockSpec((1, q_tile, D), lambda b, qi: (b, qi, 0)),
            scratch_shapes=[
                pltpu.VMEM((num_heads, S, hd), bf16),   # K (head-split)
                pltpu.VMEM((num_heads, S, hd), bf16),   # V (head-split)
            ],
        ),
        compiler_params=pltpu.CompilerParams(
            dimension_semantics=("parallel", "arbitrary"),
            vmem_limit_bytes=vmem_limit),
    )(x,
      wq, params["bq"], wk, params["bk"], wv, params["bv"], wo, params["bo"],
      params["gamma1"], params["beta1"], params["gamma2"], params["beta2"],
      w1, params["b1"], w2, params["b2"])


def _reference(x, params, *, num_heads=8, eps=1e-5):
    """Pure-JAX fp32 reference for correctness checking."""
    B, S, D = x.shape
    hd = D // num_heads
    scale = 1.0 / math.sqrt(hd)

    q = x @ params["wq"] + params["bq"]
    k = x @ params["wk"] + params["bk"]
    v = x @ params["wv"] + params["bv"]

    def split(t):  # (B,S,D) -> (B,H,S,hd)
        return t.reshape(B, S, num_heads, hd).transpose(0, 2, 1, 3)

    qh, kh, vh = split(q), split(k), split(v)
    s = jnp.einsum("bhqd,bhkd->bhqk", qh, kh) * scale
    p = jax.nn.softmax(s, axis=-1)
    attn = jnp.einsum("bhqk,bhkd->bhqd", p, vh)
    attn = attn.transpose(0, 2, 1, 3).reshape(B, S, D)
    attn = attn @ params["wo"] + params["bo"]

    def ln(t, g, b):
        mu = jnp.mean(t, axis=-1, keepdims=True)
        var = jnp.mean((t - mu) ** 2, axis=-1, keepdims=True)
        return (t - mu) / jnp.sqrt(var + eps) * g + b

    x1 = ln(x + attn, params["gamma1"], params["beta1"])
    f = jnp.maximum(x1 @ params["w1"] + params["b1"], 0.0) @ params["w2"] + params["b2"]
    return ln(x1 + f, params["gamma2"], params["beta2"])


def _init_params(key, dim, ffn_hidden_dim):
    ks = jax.random.split(key, 8)
    s_d = 1.0 / math.sqrt(dim)
    s_f = 1.0 / math.sqrt(ffn_hidden_dim)
    return {
        "wq": jax.random.normal(ks[0], (dim, dim), jnp.float32) * s_d,
        "wk": jax.random.normal(ks[1], (dim, dim), jnp.float32) * s_d,
        "wv": jax.random.normal(ks[2], (dim, dim), jnp.float32) * s_d,
        "wo": jax.random.normal(ks[3], (dim, dim), jnp.float32) * s_d,
        "bq": jax.random.normal(ks[4], (1, dim), jnp.float32) * 0.01,
        "bk": jax.random.normal(ks[5], (1, dim), jnp.float32) * 0.01,
        "bv": jax.random.normal(ks[6], (1, dim), jnp.float32) * 0.01,
        "bo": jnp.zeros((1, dim), jnp.float32),
        "gamma1": jnp.ones((1, dim), jnp.float32),
        "beta1": jnp.zeros((1, dim), jnp.float32),
        "gamma2": jnp.ones((1, dim), jnp.float32),
        "beta2": jnp.zeros((1, dim), jnp.float32),
        "w1": jax.random.normal(ks[7], (dim, ffn_hidden_dim), jnp.float32) * s_d,
        "b1": jnp.zeros((1, ffn_hidden_dim), jnp.float32),
        "w2": jax.random.normal(jax.random.fold_in(key, 99),
                                (ffn_hidden_dim, dim), jnp.float32) * s_f,
        "b2": jnp.zeros((1, dim), jnp.float32),
    }


if __name__ == "__main__":
    B, S, D, F, H = 2, 8, 32, 64, 8

    key = jax.random.PRNGKey(0)
    k_x, k_p = jax.random.split(key)
    x = jax.random.normal(k_x, (B, S, D), jnp.float32)
    params = _init_params(k_p, D, F)

    out = transformer_encoder_block(x, params, num_heads=H)
    out = jax.block_until_ready(out)

    ref = _reference(x, params, num_heads=H)
    assert out.shape == (B, S, D)
    # bf16 matmuls with fp32 accumulation: slightly looser tolerance than pure fp32.
    assert jnp.allclose(out, ref, atol=3e-2, rtol=3e-2), "mismatch vs reference"

    print("KERNEL_OK")
</pallas_src>

<mosaic_0001>
module attributes {stable_mosaic.version = 11 : i64} {
  func.func @_encoder_kernel(%arg0: i32, %arg1: i32, %arg2: memref<1x8x32xf32, #tpu.memory_space<vmem>>, %arg3: memref<32x32xbf16, #tpu.memory_space<vmem>>, %arg4: memref<1x32xf32, #tpu.memory_space<vmem>>, %arg5: memref<32x32xbf16, #tpu.memory_space<vmem>>, %arg6: memref<1x32xf32, #tpu.memory_space<vmem>>, %arg7: memref<32x32xbf16, #tpu.memory_space<vmem>>, %arg8: memref<1x32xf32, #tpu.memory_space<vmem>>, %arg9: memref<32x32xbf16, #tpu.memory_space<vmem>>, %arg10: memref<1x32xf32, #tpu.memory_space<vmem>>, %arg11: memref<1x32xf32, #tpu.memory_space<vmem>>, %arg12: memref<1x32xf32, #tpu.memory_space<vmem>>, %arg13: memref<1x32xf32, #tpu.memory_space<vmem>>, %arg14: memref<1x32xf32, #tpu.memory_space<vmem>>, %arg15: memref<32x64xbf16, #tpu.memory_space<vmem>>, %arg16: memref<1x64xf32, #tpu.memory_space<vmem>>, %arg17: memref<64x32xbf16, #tpu.memory_space<vmem>>, %arg18: memref<1x32xf32, #tpu.memory_space<vmem>>, %arg19: memref<1x8x32xf32, #tpu.memory_space<vmem>>, %arg20: memref<8x8x4xbf16, #tpu.memory_space<vmem>>, %arg21: memref<8x8x4xbf16, #tpu.memory_space<vmem>>) attributes {dimension_semantics = [#tpu.dimension_semantics<parallel>, #tpu.dimension_semantics<arbitrary>], iteration_bounds = array<i64: 2, 1>, scalar_prefetch = 0 : i64, scratch_operands = 2 : i64, tpu.core_type = #tpu.core_type<tc>, window_params = [{transform_indices = @transform_0, window_bounds = array<i64: 1, 8, 32>}, {pipeline_mode = #tpu.pipeline_mode<synchronous>, transform_indices = @transform_1, window_bounds = array<i64: 32, 32>}, {pipeline_mode = #tpu.pipeline_mode<synchronous>, transform_indices = @transform_2, window_bounds = array<i64: 1, 32>}, {pipeline_mode = #tpu.pipeline_mode<synchronous>, transform_indices = @transform_3, window_bounds = array<i64: 32, 32>}, {pipeline_mode = #tpu.pipeline_mode<synchronous>, transform_indices = @transform_4, window_bounds = array<i64: 1, 32>}, {pipeline_mode = #tpu.pipeline_mode<synchronous>, transform_indices = @transform_5, window_bounds = array<i64: 32, 32>}, {pipeline_mode = #tpu.pipeline_mode<synchronous>, transform_indices = @transform_6, window_bounds = array<i64: 1, 32>}, {pipeline_mode = #tpu.pipeline_mode<synchronous>, transform_indices = @transform_7, window_bounds = array<i64: 32, 32>}, {pipeline_mode = #tpu.pipeline_mode<synchronous>, transform_indices = @transform_8, window_bounds = array<i64: 1, 32>}, {pipeline_mode = #tpu.pipeline_mode<synchronous>, transform_indices = @transform_9, window_bounds = array<i64: 1, 32>}, {pipeline_mode = #tpu.pipeline_mode<synchronous>, transform_indices = @transform_10, window_bounds = array<i64: 1, 32>}, {pipeline_mode = #tpu.pipeline_mode<synchronous>, transform_indices = @transform_11, window_bounds = array<i64: 1, 32>}, {pipeline_mode = #tpu.pipeline_mode<synchronous>, transform_indices = @transform_12, window_bounds = array<i64: 1, 32>}, {pipeline_mode = #tpu.pipeline_mode<synchronous>, transform_indices = @transform_13, window_bounds = array<i64: 32, 64>}, {pipeline_mode = #tpu.pipeline_mode<synchronous>, transform_indices = @transform_14, window_bounds = array<i64: 1, 64>}, {pipeline_mode = #tpu.pipeline_mode<synchronous>, transform_indices = @transform_15, window_bounds = array<i64: 64, 32>}, {pipeline_mode = #tpu.pipeline_mode<synchronous>, transform_indices = @transform_16, window_bounds = array<i64: 1, 32>}, {transform_indices = @transform_17, window_bounds = array<i64: 1, 8, 32>}]} {
    %c0_i32 = arith.constant 0 : i32
    %0 = arith.cmpi eq, %arg1, %c0_i32 : i32
    %1 = arith.extui %0 : i1 to i32
    %c0_i32_0 = arith.constant 0 : i32
    %2 = arith.cmpi ne, %1, %c0_i32_0 : i32
    scf.if %2 {
      %c0_56 = arith.constant 0 : index
      %c0_57 = arith.constant 0 : index
      %c0_58 = arith.constant 0 : index
      %113 = vector.load %arg2[%c0_56, %c0_57, %c0_58] : memref<1x8x32xf32, #tpu.memory_space<vmem>>, vector<1x8x32xf32>
      %114 = vector.shape_cast %113 : vector<1x8x32xf32> to vector<8x32xf32>
      %115 = arith.truncf %114 : vector<8x32xf32> to vector<8x32xbf16>
      %c0_59 = arith.constant 0 : index
      %c0_60 = arith.constant 0 : index
      %116 = vector.load %arg5[%c0_59, %c0_60] : memref<32x32xbf16, #tpu.memory_space<vmem>>, vector<32x32xbf16>
      %cst_61 = arith.constant dense<0.000000e+00> : vector<8x32xf32>
      %117 = tpu.matmul %115, %116, %cst_61 {dimension_numbers = #tpu.dot_dimension_numbers<[1], [0], [0], [1], [0, 0, 1, 1], [], []>} : vector<8x32xbf16>, vector<32x32xbf16>, vector<8x32xf32> -> vector<8x32xf32>
      %c0_62 = arith.constant 0 : index
      %c0_63 = arith.constant 0 : index
      %118 = vector.load %arg6[%c0_62, %c0_63] : memref<1x32xf32, #tpu.memory_space<vmem>>, vector<1x32xf32>
      %119 = vector.broadcast %118 : vector<1x32xf32> to vector<8x32xf32>
      %120 = arith.addf %117, %119 : vector<8x32xf32>
      %c0_64 = arith.constant 0 : index
      %c0_65 = arith.constant 0 : index
      %121 = vector.load %arg7[%c0_64, %c0_65] : memref<32x32xbf16, #tpu.memory_space<vmem>>, vector<32x32xbf16>
      %cst_66 = arith.constant dense<0.000000e+00> : vector<8x32xf32>
      %122 = tpu.matmul %115, %121, %cst_66 {dimension_numbers = #tpu.dot_dimension_numbers<[1], [0], [0], [1], [0, 0, 1, 1], [], []>} : vector<8x32xbf16>, vector<32x32xbf16>, vector<8x32xf32> -> vector<8x32xf32>
      %c0_67 = arith.constant 0 : index
      %c0_68 = arith.constant 0 : index
      %123 = vector.load %arg8[%c0_67, %c0_68] : memref<1x32xf32, #tpu.memory_space<vmem>>, vector<1x32xf32>
      %124 = vector.broadcast %123 : vector<1x32xf32> to vector<8x32xf32>
      %125 = arith.addf %122, %124 : vector<8x32xf32>
      %126 = vector.shape_cast %120 : vector<8x32xf32> to vector<8x8x4xf32>
      %127 = tpu.transpose %126, [1, 0, 2] : vector<8x8x4xf32> -> vector<8x8x4xf32>
      %128 = arith.truncf %127 : vector<8x8x4xf32> to vector<8x8x4xbf16>
      %c0_69 = arith.constant 0 : index
      %c0_70 = arith.constant 0 : index
      %c0_71 = arith.constant 0 : index
      %129 = vector.load %arg20[%c0_69, %c0_70, %c0_71] : memref<8x8x4xbf16, #tpu.memory_space<vmem>>, vector<8x8x4xbf16>
      tpu.vector_store %arg20[%c0_69, %c0_70, %c0_71], %128 {strides = array<i32>} : memref<8x8x4xbf16, #tpu.memory_space<vmem>>, vector<8x8x4xbf16>,
      %130 = vector.shape_cast %125 : vector<8x32xf32> to vector<8x8x4xf32>
      %131 = tpu.transpose %130, [1, 0, 2] : vector<8x8x4xf32> -> vector<8x8x4xf32>
      %132 = arith.truncf %131 : vector<8x8x4xf32> to vector<8x8x4xbf16>
      %c0_72 = arith.constant 0 : index
      %c0_73 = arith.constant 0 : index
      %c0_74 = arith.constant 0 : index
      %133 = vector.load %arg21[%c0_72, %c0_73, %c0_74] : memref<8x8x4xbf16, #tpu.memory_space<vmem>>, vector<8x8x4xbf16>
      tpu.vector_store %arg21[%c0_72, %c0_73, %c0_74], %132 {strides = array<i32>} : memref<8x8x4xbf16, #tpu.memory_space<vmem>>, vector<8x8x4xbf16>,
    } else {
    }
    %c8_i32 = arith.constant 8 : i32
    %3 = arith.muli %arg1, %c8_i32 : i32
    %4 = tpu.assume_multiple %3, 8 : i32
    %c0 = arith.constant 0 : index
    %5 = arith.index_cast %4 : i32 to index
    %c0_1 = arith.constant 0 : index
    %6 = vector.load %arg2[%c0, %5, %c0_1] : memref<1x8x32xf32, #tpu.memory_space<vmem>>, vector<1x8x32xf32>
    %7 = vector.shape_cast %6 : vector<1x8x32xf32> to vector<8x32xf32>
    %8 = arith.truncf %7 : vector<8x32xf32> to vector<8x32xbf16>
    %c0_2 = arith.constant 0 : index
    %c0_3 = arith.constant 0 : index
    %9 = vector.load %arg3[%c0_2, %c0_3] : memref<32x32xbf16, #tpu.memory_space<vmem>>, vector<32x32xbf16>
    %cst = arith.constant dense<0.000000e+00> : vector<8x32xf32>
    %10 = tpu.matmul %8, %9, %cst {dimension_numbers = #tpu.dot_dimension_numbers<[1], [0], [0], [1], [0, 0, 1, 1], [], []>} : vector<8x32xbf16>, vector<32x32xbf16>, vector<8x32xf32> -> vector<8x32xf32>
    %c0_4 = arith.constant 0 : index
    %c0_5 = arith.constant 0 : index
    %11 = vector.load %arg4[%c0_4, %c0_5] : memref<1x32xf32, #tpu.memory_space<vmem>>, vector<1x32xf32>
    %12 = vector.broadcast %11 : vector<1x32xf32> to vector<8x32xf32>
    %13 = arith.addf %10, %12 : vector<8x32xf32>
    %cst_6 = arith.constant 5.000000e-01 : f32
    %14 = vector.broadcast %cst_6 : f32 to vector<8x32xf32>
    %15 = arith.mulf %13, %14 : vector<8x32xf32>
    %16 = arith.truncf %15 : vector<8x32xf32> to vector<8x32xbf16>
    %17 = vector.shape_cast %16 : vector<8x32xbf16> to vector<8x8x4xbf16>
    %18 = tpu.transpose %17, [1, 0, 2] : vector<8x8x4xbf16> -> vector<8x8x4xbf16>
    %c0_7 = arith.constant 0 : index
    %c0_8 = arith.constant 0 : index
    %c0_9 = arith.constant 0 : index
    %19 = vector.load %arg20[%c0_7, %c0_8, %c0_9] : memref<8x8x4xbf16, #tpu.memory_space<vmem>>, vector<8x8x4xbf16>
    "tpu.trace_start"() <{level = 10 : i32, message = "hqd,hkd->hqk"}> : () -> ()
    %cst_10 = arith.constant dense<0.000000e+00> : vector<8x8x8xf32>
    %20 = tpu.matmul %18, %19, %cst_10 {dimension_numbers = #tpu.dot_dimension_numbers<[2], [2], [1], [1], [0, 0, 0, 1, 1, 1], [0], [0]>} : vector<8x8x4xbf16>, vector<8x8x4xbf16>, vector<8x8x8xf32> -> vector<8x8x8xf32>
    "tpu.trace_stop"() : () -> ()
    %cst_11 = arith.constant dense<0xFF800000> : vector<8x8xf32>
    %21 = vector.multi_reduction <maximumf>, %20, %cst_11 [2] : vector<8x8x8xf32> to vector<8x8xf32>
    %22 = vector.shape_cast %21 : vector<8x8xf32> to vector<8x8x1xf32>
    %23 = vector.broadcast %22 : vector<8x8x1xf32> to vector<8x8x8xf32>
    %24 = arith.subf %20, %23 : vector<8x8x8xf32>
    %25 = math.exp %24 : vector<8x8x8xf32>
    %cst_12 = arith.constant dense<0.000000e+00> : vector<8x8xf32>
    %26 = vector.multi_reduction <add>, %25, %cst_12 [2] : vector<8x8x8xf32> to vector<8x8xf32>
    %27 = vector.shape_cast %26 : vector<8x8xf32> to vector<8x8x1xf32>
    %28 = arith.truncf %25 : vector<8x8x8xf32> to vector<8x8x8xbf16>
    %c0_13 = arith.constant 0 : index
    %c0_14 = arith.constant 0 : index
    %c0_15 = arith.constant 0 : index
    %29 = vector.load %arg21[%c0_13, %c0_14, %c0_15] : memref<8x8x4xbf16, #tpu.memory_space<vmem>>, vector<8x8x4xbf16>
    "tpu.trace_start"() <{level = 10 : i32, message = "hqk,hkd->hqd"}> : () -> ()
    %cst_16 = arith.constant dense<0.000000e+00> : vector<8x8x4xf32>
    %30 = tpu.matmul %28, %29, %cst_16 {dimension_numbers = #tpu.dot_dimension_numbers<[2], [1], [1], [2], [0, 0, 0, 1, 1, 2], [0], [0]>} : vector<8x8x8xbf16>, vector<8x8x4xbf16>, vector<8x8x4xf32> -> vector<8x8x4xf32>
    "tpu.trace_stop"() : () -> ()
    %31 = tpu.reciprocal %27 {approx = true} : vector<8x8x1xf32> -> vector<8x8x1xf32>
    %32 = vector.broadcast %31 : vector<8x8x1xf32> to vector<8x8x4xf32>
    %33 = arith.mulf %30, %32 : vector<8x8x4xf32>
    %34 = tpu.transpose %33, [1, 0, 2] : vector<8x8x4xf32> -> vector<8x8x4xf32>
    %35 = vector.shape_cast %34 : vector<8x8x4xf32> to vector<8x32xf32>
    %36 = arith.truncf %35 : vector<8x32xf32> to vector<8x32xbf16>
    %c0_17 = arith.constant 0 : index
    %c0_18 = arith.constant 0 : index
    %37 = vector.load %arg9[%c0_17, %c0_18] : memref<32x32xbf16, #tpu.memory_space<vmem>>, vector<32x32xbf16>
    %cst_19 = arith.constant dense<0.000000e+00> : vector<8x32xf32>
    %38 = tpu.matmul %36, %37, %cst_19 {dimension_numbers = #tpu.dot_dimension_numbers<[1], [0], [0], [1], [0, 0, 1, 1], [], []>} : vector<8x32xbf16>, vector<32x32xbf16>, vector<8x32xf32> -> vector<8x32xf32>
    %c0_20 = arith.constant 0 : index
    %c0_21 = arith.constant 0 : index
    %39 = vector.load %arg10[%c0_20, %c0_21] : memref<1x32xf32, #tpu.memory_space<vmem>>, vector<1x32xf32>
    %40 = vector.broadcast %39 : vector<1x32xf32> to vector<8x32xf32>
    %41 = arith.addf %38, %40 : vector<8x32xf32>
    %42 = arith.addf %7, %41 : vector<8x32xf32>
    %cst_22 = arith.constant dense<0.000000e+00> : vector<8xf32>
    %43 = vector.multi_reduction <add>, %42, %cst_22 [1] : vector<8x32xf32> to vector<8xf32>
    %44 = vector.shape_cast %43 : vector<8xf32> to vector<8x1xf32>
    %cst_23 = arith.constant 3.200000e+01 : f32
    %45 = vector.broadcast %cst_23 : f32 to vector<8x1xf32>
    %46 = arith.divf %44, %45 : vector<8x1xf32>
    %47 = arith.mulf %42, %42 : vector<8x32xf32>
    %cst_24 = arith.constant dense<0.000000e+00> : vector<8xf32>
    %48 = vector.multi_reduction <add>, %47, %cst_24 [1] : vector<8x32xf32> to vector<8xf32>
    %49 = vector.shape_cast %48 : vector<8xf32> to vector<8x1xf32>
    %cst_25 = arith.constant 3.200000e+01 : f32
    %50 = vector.broadcast %cst_25 : f32 to vector<8x1xf32>
    %51 = arith.divf %49, %50 : vector<8x1xf32>
    %52 = arith.mulf %46, %46 : vector<8x1xf32>
    %53 = arith.subf %51, %52 : vector<8x1xf32>
    %cst_26 = arith.constant 0.000000e+00 : f32
    %54 = vector.broadcast %cst_26 : f32 to vector<8x1xf32>
    %55 = arith.maximumf %53, %54 : vector<8x1xf32>
    %cst_27 = arith.constant 9.99999974E-6 : f32
    %56 = vector.broadcast %cst_27 : f32 to vector<8x1xf32>
    %57 = arith.addf %55, %56 : vector<8x1xf32>
    %58 = math.rsqrt %57 : vector<8x1xf32>
    %59 = vector.broadcast %46 : vector<8x1xf32> to vector<8x32xf32>
    %60 = arith.subf %42, %59 : vector<8x32xf32>
    %61 = vector.broadcast %58 : vector<8x1xf32> to vector<8x32xf32>
    %62 = arith.mulf %60, %61 : vector<8x32xf32>
    %c0_28 = arith.constant 0 : index
    %c0_29 = arith.constant 0 : index
    %63 = vector.load %arg11[%c0_28, %c0_29] : memref<1x32xf32, #tpu.memory_space<vmem>>, vector<1x32xf32>
    %64 = vector.broadcast %63 : vector<1x32xf32> to vector<8x32xf32>
    %65 = arith.mulf %62, %64 : vector<8x32xf32>
    %c0_30 = arith.constant 0 : index
    %c0_31 = arith.constant 0 : index
    %66 = vector.load %arg12[%c0_30, %c0_31] : memref<1x32xf32, #tpu.memory_space<vmem>>, vector<1x32xf32>
    %67 = vector.broadcast %66 : vector<1x32xf32> to vector<8x32xf32>
    %68 = arith.addf %65, %67 : vector<8x32xf32>
    %69 = arith.truncf %68 : vector<8x32xf32> to vector<8x32xbf16>
    %c0_32 = arith.constant 0 : index
    %c0_33 = arith.constant 0 : index
    %70 = vector.load %arg15[%c0_32, %c0_33] : memref<32x64xbf16, #tpu.memory_space<vmem>>, vector<32x64xbf16>
    %cst_34 = arith.constant dense<0.000000e+00> : vector<8x64xf32>
    %71 = tpu.matmul %69, %70, %cst_34 {dimension_numbers = #tpu.dot_dimension_numbers<[1], [0], [0], [1], [0, 0, 1, 1], [], []>} : vector<8x32xbf16>, vector<32x64xbf16>, vector<8x64xf32> -> vector<8x64xf32>
    %c0_35 = arith.constant 0 : index
    %c0_36 = arith.constant 0 : index
    %72 = vector.load %arg16[%c0_35, %c0_36] : memref<1x64xf32, #tpu.memory_space<vmem>>, vector<1x64xf32>
    %73 = vector.broadcast %72 : vector<1x64xf32> to vector<8x64xf32>
    %74 = arith.addf %71, %73 : vector<8x64xf32>
    %cst_37 = arith.constant 0.000000e+00 : f32
    %75 = vector.broadcast %cst_37 : f32 to vector<8x64xf32>
    %76 = arith.maximumf %74, %75 : vector<8x64xf32>
    %77 = arith.truncf %76 : vector<8x64xf32> to vector<8x64xbf16>
    %c0_38 = arith.constant 0 : index
    %c0_39 = arith.constant 0 : index
    %78 = vector.load %arg17[%c0_38, %c0_39] : memref<64x32xbf16, #tpu.memory_space<vmem>>, vector<64x32xbf16>
    %cst_40 = arith.constant dense<0.000000e+00> : vector<8x32xf32>
    %79 = tpu.matmul %77, %78, %cst_40 {dimension_numbers = #tpu.dot_dimension_numbers<[1], [0], [0], [1], [0, 0, 1, 1], [], []>} : vector<8x64xbf16>, vector<64x32xbf16>, vector<8x32xf32> -> vector<8x32xf32>
    %c0_41 = arith.constant 0 : index
    %c0_42 = arith.constant 0 : index
    %80 = vector.load %arg18[%c0_41, %c0_42] : memref<1x32xf32, #tpu.memory_space<vmem>>, vector<1x32xf32>
    %81 = vector.broadcast %80 : vector<1x32xf32> to vector<8x32xf32>
    %82 = arith.addf %79, %81 : vector<8x32xf32>
    %83 = arith.addf %68, %82 : vector<8x32xf32>
    %cst_43 = arith.constant dense<0.000000e+00> : vector<8xf32>
    %84 = vector.multi_reduction <add>, %83, %cst_43 [1] : vector<8x32xf32> to vector<8xf32>
    %85 = vector.shape_cast %84 : vector<8xf32> to vector<8x1xf32>
    %cst_44 = arith.constant 3.200000e+01 : f32
    %86 = vector.broadcast %cst_44 : f32 to vector<8x1xf32>
    %87 = arith.divf %85, %86 : vector<8x1xf32>
    %88 = arith.mulf %83, %83 : vector<8x32xf32>
    %cst_45 = arith.constant dense<0.000000e+00> : vector<8xf32>
    %89 = vector.multi_reduction <add>, %88, %cst_45 [1] : vector<8x32xf32> to vector<8xf32>
    %90 = vector.shape_cast %89 : vector<8xf32> to vector<8x1xf32>
    %cst_46 = arith.constant 3.200000e+01 : f32
    %91 = vector.broadcast %cst_46 : f32 to vector<8x1xf32>
    %92 = arith.divf %90, %91 : vector<8x1xf32>
    %93 = arith.mulf %87, %87 : vector<8x1xf32>
    %94 = arith.subf %92, %93 : vector<8x1xf32>
    %cst_47 = arith.constant 0.000000e+00 : f32
    %95 = vector.broadcast %cst_47 : f32 to vector<8x1xf32>
    %96 = arith.maximumf %94, %95 : vector<8x1xf32>
    %cst_48 = arith.constant 9.99999974E-6 : f32
    %97 = vector.broadcast %cst_48 : f32 to vector<8x1xf32>
    %98 = arith.addf %96, %97 : vector<8x1xf32>
    %99 = math.rsqrt %98 : vector<8x1xf32>
    %100 = vector.broadcast %87 : vector<8x1xf32> to vector<8x32xf32>
    %101 = arith.subf %83, %100 : vector<8x32xf32>
    %102 = vector.broadcast %99 : vector<8x1xf32> to vector<8x32xf32>
    %103 = arith.mulf %101, %102 : vector<8x32xf32>
    %c0_49 = arith.constant 0 : index
    %c0_50 = arith.constant 0 : index
    %104 = vector.load %arg13[%c0_49, %c0_50] : memref<1x32xf32, #tpu.memory_space<vmem>>, vector<1x32xf32>
    %105 = vector.broadcast %104 : vector<1x32xf32> to vector<8x32xf32>
    %106 = arith.mulf %103, %105 : vector<8x32xf32>
    %c0_51 = arith.constant 0 : index
    %c0_52 = arith.constant 0 : index
    %107 = vector.load %arg14[%c0_51, %c0_52] : memref<1x32xf32, #tpu.memory_space<vmem>>, vector<1x32xf32>
    %108 = vector.broadcast %107 : vector<1x32xf32> to vector<8x32xf32>
    %109 = arith.addf %106, %108 : vector<8x32xf32>
    %c0_53 = arith.constant 0 : index
    %c0_54 = arith.constant 0 : index
    %c0_55 = arith.constant 0 : index
    %110 = vector.load %arg19[%c0_53, %c0_54, %c0_55] : memref<1x8x32xf32, #tpu.memory_space<vmem>>, vector<1x8x32xf32>
    %111 = vector.shape_cast %110 : vector<1x8x32xf32> to vector<8x32xf32>
    %112 = vector.shape_cast %109 : vector<8x32xf32> to vector<1x8x32xf32>
    tpu.vector_store %arg19[%c0_53, %c0_54, %c0_55], %112 {strides = array<i32>} : memref<1x8x32xf32, #tpu.memory_space<vmem>>, vector<1x8x32xf32>,
    return
  }
  func.func @transform_0(%arg0: i32, %arg1: i32) -> (i32, i32, i32) {
    %c0_i32 = arith.constant 0 : i32
    %c0_i32_0 = arith.constant 0 : i32
    %c0_i32_1 = arith.constant 0 : i32
    return %arg0, %c0_i32, %c0_i32_0 : i32, i32, i32
  }
  func.func @transform_1(%arg0: i32, %arg1: i32) -> (i32, i32) {
    %c0_i32 = arith.constant 0 : i32
    %c0_i32_0 = arith.constant 0 : i32
    %c0_i32_1 = arith.constant 0 : i32
    return %c0_i32, %c0_i32_0 : i32, i32
  }
  func.func @transform_2(%arg0: i32, %arg1: i32) -> (i32, i32) {
    %c0_i32 = arith.constant 0 : i32
    %c0_i32_0 = arith.constant 0 : i32
    %c0_i32_1 = arith.constant 0 : i32
    return %c0_i32, %c0_i32_0 : i32, i32
  }
  func.func @transform_3(%arg0: i32, %arg1: i32) -> (i32, i32) {
    %c0_i32 = arith.constant 0 : i32
    %c0_i32_0 = arith.constant 0 : i32
    %c0_i32_1 = arith.constant 0 : i32
    return %c0_i32, %c0_i32_0 : i32, i32
  }
  func.func @transform_4(%arg0: i32, %arg1: i32) -> (i32, i32) {
    %c0_i32 = arith.constant 0 : i32
    %c0_i32_0 = arith.constant 0 : i32
    %c0_i32_1 = arith.constant 0 : i32
    return %c0_i32, %c0_i32_0 : i32, i32
  }
  func.func @transform_5(%arg0: i32, %arg1: i32) -> (i32, i32) {
    %c0_i32 = arith.constant 0 : i32
    %c0_i32_0 = arith.constant 0 : i32
    %c0_i32_1 = arith.constant 0 : i32
    return %c0_i32, %c0_i32_0 : i32, i32
  }
  func.func @transform_6(%arg0: i32, %arg1: i32) -> (i32, i32) {
    %c0_i32 = arith.constant 0 : i32
    %c0_i32_0 = arith.constant 0 : i32
    %c0_i32_1 = arith.constant 0 : i32
    return %c0_i32, %c0_i32_0 : i32, i32
  }
  func.func @transform_7(%arg0: i32, %arg1: i32) -> (i32, i32) {
    %c0_i32 = arith.constant 0 : i32
    %c0_i32_0 = arith.constant 0 : i32
    %c0_i32_1 = arith.constant 0 : i32
    return %c0_i32, %c0_i32_0 : i32, i32
  }
  func.func @transform_8(%arg0: i32, %arg1: i32) -> (i32, i32) {
    %c0_i32 = arith.constant 0 : i32
    %c0_i32_0 = arith.constant 0 : i32
    %c0_i32_1 = arith.constant 0 : i32
    return %c0_i32, %c0_i32_0 : i32, i32
  }
  func.func @transform_9(%arg0: i32, %arg1: i32) -> (i32, i32) {
    %c0_i32 = arith.constant 0 : i32
    %c0_i32_0 = arith.constant 0 : i32
    %c0_i32_1 = arith.constant 0 : i32
    return %c0_i32, %c0_i32_0 : i32, i32
  }
  func.func @transform_10(%arg0: i32, %arg1: i32) -> (i32, i32) {
    %c0_i32 = arith.constant 0 : i32
    %c0_i32_0 = arith.constant 0 : i32
    %c0_i32_1 = arith.constant 0 : i32
    return %c0_i32, %c0_i32_0 : i32, i32
  }
  func.func @transform_11(%arg0: i32, %arg1: i32) -> (i32, i32) {
    %c0_i32 = arith.constant 0 : i32
    %c0_i32_0 = arith.constant 0 : i32
    %c0_i32_1 = arith.constant 0 : i32
    return %c0_i32, %c0_i32_0 : i32, i32
  }
  func.func @transform_12(%arg0: i32, %arg1: i32) -> (i32, i32) {
    %c0_i32 = arith.constant 0 : i32
    %c0_i32_0 = arith.constant 0 : i32
    %c0_i32_1 = arith.constant 0 : i32
    return %c0_i32, %c0_i32_0 : i32, i32
  }
  func.func @transform_13(%arg0: i32, %arg1: i32) -> (i32, i32) {
    %c0_i32 = arith.constant 0 : i32
    %c0_i32_0 = arith.constant 0 : i32
    %c0_i32_1 = arith.constant 0 : i32
    return %c0_i32, %c0_i32_0 : i32, i32
  }
  func.func @transform_14(%arg0: i32, %arg1: i32) -> (i32, i32) {
    %c0_i32 = arith.constant 0 : i32
    %c0_i32_0 = arith.constant 0 : i32
    %c0_i32_1 = arith.constant 0 : i32
    return %c0_i32, %c0_i32_0 : i32, i32
  }
  func.func @transform_15(%arg0: i32, %arg1: i32) -> (i32, i32) {
    %c0_i32 = arith.constant 0 : i32
    %c0_i32_0 = arith.constant 0 : i32
    %c0_i32_1 = arith.constant 0 : i32
    return %c0_i32, %c0_i32_0 : i32, i32
  }
  func.func @transform_16(%arg0: i32, %arg1: i32) -> (i32, i32) {
    %c0_i32 = arith.constant 0 : i32
    %c0_i32_0 = arith.constant 0 : i32
    %c0_i32_1 = arith.constant 0 : i32
    return %c0_i32, %c0_i32_0 : i32, i32
  }
  func.func @transform_17(%arg0: i32, %arg1: i32) -> (i32, i32, i32) {
    %c0_i32 = arith.constant 0 : i32
    %c0_i32_0 = arith.constant 0 : i32
    return %arg0, %arg1, %c0_i32 : i32, i32, i32
  }
}

</mosaic_0001>

<llo_original>
// kernel: tpu_custom_call.1
$region0: #{tpu_custom_call.1}
  #allocation0 [shape = 'u32[]', space=smem, size = 0x4, offset = 0x4, fixed_abs, tag = 'smem constant byte address 0x4 - core index']
  #allocation1 [shape = 'u32[144,128]{1,0:T(1,128)}', space=vmem, size = 0x12000, scoped, tag = 'internal scratch']
  #allocation2 [shape = 'bf16[8,8,4]{2,1,0:T(8,128)(2,1)}', space=vmem, size = 0x4000, scoped, tag = 'scratch operand']
  #allocation3 [shape = 'bf16[8,8,4]{2,1,0:T(8,128)(2,1)}', space=vmem, size = 0x4000, scoped, tag = 'scratch operand']
  %s0 = inlined_call_operand.vmem [shape: f32[2,8,32], index: 0, kind: input, shape index: {}]
  %s1 = inlined_call_operand.vmem [shape: bf16[32,32], index: 1, kind: input, shape index: {}]
  %s2 = inlined_call_operand.vmem [shape: f32[1,32], index: 2, kind: input, shape index: {}]
  %s3 = inlined_call_operand.vmem [shape: bf16[32,32], index: 3, kind: input, shape index: {}]
  %s4 = inlined_call_operand.vmem [shape: f32[1,32], index: 4, kind: input, shape index: {}]
  %s5 = inlined_call_operand.hbm [shape: bf16[32,32], index: 5, kind: input, shape index: {}]
  %s6 = inlined_call_operand.hbm [shape: f32[1,32], index: 6, kind: input, shape index: {}]
  %s7 = inlined_call_operand.hbm [shape: bf16[32,32], index: 7, kind: input, shape index: {}]
  %s8 = inlined_call_operand.hbm [shape: f32[1,32], index: 8, kind: input, shape index: {}]
  %s9 = inlined_call_operand.hbm [shape: f32[1,32], index: 9, kind: input, shape index: {}]
  %s10 = inlined_call_operand.vmem [shape: f32[1,32], index: 10, kind: input, shape index: {}]
  %s11 = inlined_call_operand.vmem [shape: f32[1,32], index: 11, kind: input, shape index: {}]
  %s12 = inlined_call_operand.vmem [shape: f32[1,32], index: 12, kind: input, shape index: {}]
  %s13 = inlined_call_operand.vmem [shape: bf16[32,64], index: 13, kind: input, shape index: {}]
  %s14 = inlined_call_operand.vmem [shape: f32[1,64], index: 14, kind: input, shape index: {}]
  %s15 = inlined_call_operand.vmem [shape: bf16[64,32], index: 15, kind: input, shape index: {}]
  %s16 = inlined_call_operand.vmem [shape: f32[1,32], index: 16, kind: input, shape index: {}]
  %s17 = inlined_call_operand.hbm [shape: f32[2,8,32], index: 17, kind: output, shape index: {}]
  %s18 = sld [smem:[#allocation0]]
  $region125: #{tpu_custom_call.1} parent=0
    _
  %s20 = ssub.s32 1, %s18
  %s21 = scalar_select 0, %s20, %s18
  $region1: #{tpu_custom_call.1} parent=0
    #allocation4 [shape = 'u8[8192]{0}', space=vmem, size = 0x2000, scoped, tag = 'input window, operand 5, single buffered']
    #allocation5 [shape = 's32[2]{0}', space=sflag, size = 0x8, scoped, tag = 'scoped memory for tpu_custom_call.1']
    #allocation6 [shape = 's32[2]{0}', space=sflag, size = 0x8, scoped, tag = 'scoped memory for tpu_custom_call.1']
    #allocation7 [shape = 'u8[512]{0}', space=vmem, size = 0x400, scoped, tag = 'input window, operand 6, single buffered']
    #allocation8 [shape = 's32[1]{0}', space=sflag, size = 0x4, scoped, tag = 'scoped memory for tpu_custom_call.1']
    #allocation9 [shape = 'u8[8192]{0}', space=vmem, size = 0x2000, scoped, tag = 'input window, operand 7, single buffered']
    #allocation10 [shape = 'u8[512]{0}', space=vmem, size = 0x400, scoped, tag = 'input window, operand 8, single buffered']
    #allocation11 [shape = 's32[1]{0}', space=sflag, size = 0x4, scoped, tag = 'scoped memory for tpu_custom_call.1']
    #allocation12 [shape = 'u8[512]{0}', space=vmem, size = 0x400, scoped, tag = 'input window, operand 9, single buffered']
    #allocation13 [shape = 'u8[8192]{0}', space=vmem, size = 0x2000, scoped, tag = 'output window, operand 0']
    %22 = vsyncpa [#allocation5], 0
    %23 = vsyncpa [#allocation8], 0
    %24 = vsyncpa [#allocation11], 0
    %25 = vsyncpa [#allocation6], 0
    %s26 = scalar_lea.sflag [#allocation6], 1
    %27 = vsyncpa %s26, 0
    loop: start=0, step=1, limit=4
    $region2: #{tpu_custom_call.1} parent=1 // loop_pre_header
      _
    $region3: #{tpu_custom_call.1} parent=1 // loop_header
      %s29 = sphi 0, %s33
      %p30 = scmp.ge.s32.totalorder %s29, 4
      %s36 = sphi 0, %s48
      %s37 = sphi 0, %s44
      %s38 = sphi 0, %s36
      %s39 = sphi 0, %s37
      %s40 = sphi 0, %s38
      %s41 = sphi 0, %s39
      %s51 = sphi 0, %s53
      %s54 = sphi 0, %s51
      %s55 = sphi 0, %s54
      %s71 = sphi 0, %s55
      %s75 = sphi 0, %s75
      %s77 = sphi 0, %s75
      %s78 = sphi 0, %s77
      %s92 = sphi 0, %s78
      %s96 = sphi 0, %s96
      %s98 = sphi 0, %s96
      %s99 = sphi 0, %s98
      %s113 = sphi 0, %s99
      %s117 = sphi 0, %s117
      %s119 = sphi 0, %s117
      %s120 = sphi 0, %s119
      %s134 = sphi 0, %s120
      %s138 = sphi 0, %s138
      %s140 = sphi 0, %s138
      %s141 = sphi 0, %s140
      %s155 = sphi 0, %s141
      %s159 = sphi 0, %s159
      %s161 = sphi 0, %s159
      %s162 = sphi 0, %s161
      %s176 = sphi 0, %s162
      %s180 = sphi 0, %s180
      %s182 = sphi 0, %s180
      %s183 = sphi 0, %s182
      %s197 = sphi 0, %s183
      %s201 = sphi 0, %s201
      %s203 = sphi 0, %s201
      %s204 = sphi 0, %s203
      %s218 = sphi 0, %s204
      %s222 = sphi 0, %s222
      %s224 = sphi 0, %s222
      %s225 = sphi 0, %s224
      %s239 = sphi 0, %s225
      %s243 = sphi 0, %s243
      %s245 = sphi 0, %s243
      %s246 = sphi 0, %s245
      %s260 = sphi 0, %s246
      %s264 = sphi 0, %s264
      %s266 = sphi 0, %s264
      %s267 = sphi 0, %s266
      %s281 = sphi 0, %s267
      %s285 = sphi 0, %s285
      %s287 = sphi 0, %s285
      %s288 = sphi 0, %s287
      %s302 = sphi 0, %s288
      %s306 = sphi 0, %s306
      %s308 = sphi 0, %s306
      %s309 = sphi 0, %s308
      %s323 = sphi 0, %s309
      %s327 = sphi 0, %s327
      %s329 = sphi 0, %s327
      %s330 = sphi 0, %s329
      %s344 = sphi 0, %s330
      %s348 = sphi 0, %s348
      %s350 = sphi 0, %s348
      %s351 = sphi 0, %s350
      %s365 = sphi 0, %s351
      %s369 = sphi 0, %s369
      %s371 = sphi 0, %s369
      %s372 = sphi 0, %s371
      %s386 = sphi 0, %s372
      %s390 = sphi 0, %s390
      %s392 = sphi 0, %s390
      %s393 = sphi 0, %s392
      %s407 = sphi 0, %s393
      %s415 = sphi 0, %s417
      %s418 = sphi 0, %s415
      %s419 = sphi 0, %s418
      %s435 = sphi 0, %s419
    $region4: #{tpu_custom_call.1} parent=1 // loop_header_branch
      %32 = sbr.rel (%p30) target = $region8
    $region5: #{tpu_custom_call.1} parent=1 // loop_body
      %s34 = ssub.s32 %s29, 1
      %s35 = ssub.s32 %s29, 2
      %s42 = sadd.s32 1, %s37
      %p43 = scmp.ge.s32.totalorder %s42, 1
      %s44 = scalar_select %p43, 0, %s42
      %s45 = sadd.s32 1, %s36
      %s46 = scalar_select %p43, %s45, %s36
      %p47 = scmp.ge.s32.totalorder %s46, 2
      %s48 = scalar_select %p47, 0, %s46
      %s49 = ssub.s32 %s36, %s48
      %p50 = scmp.eq.s32.totalorder %s49, 0
      %s52 = sadd.s32 %s51, 1
      %s53 = scalar_select %p50, %s51, %s52
      %p56 = pneg %p50
      %p57 = scmp.eq.s32.totalorder %s29, 1
      %p58 = por %p56, %p57
      %p59 = scmp.ne.s32.totalorder %s51, %s54
      %p60 = scmp.eq.s32.totalorder %s29, 0
      %p61 = por %p59, %p60
      %p62 = scmp.ne.s32.totalorder %s51, %s54
      %p63 = scmp.eq.s32.totalorder %s34, 1
      %p64 = por %p62, %p63
      %p65 = scmp.ne.s32.totalorder %s54, %s55
      %p66 = scmp.eq.s32.totalorder %s34, 0
      %p67 = por %p65, %p66
      %p68 = scmp.ne.s32.totalorder %s54, %s55
      %p69 = scmp.eq.s32.totalorder %s35, 1
      %p70 = por %p68, %p69
      %p72 = scmp.ne.s32.totalorder %s55, %s71
      %p73 = scmp.eq.s32.totalorder %s35, 0
      %p74 = por %p72, %p73
      %s76 = sadd.s32 %s75, 1
      %p79 = scmp.eq.s32.totalorder %s29, 1
      %p80 = scmp.ne.s32.totalorder %s75, %s77
      %p81 = scmp.eq.s32.totalorder %s29, 0
      %p82 = por %p80, %p81
      %p83 = scmp.ne.s32.totalorder %s75, %s77
      %p84 = scmp.eq.s32.totalorder %s34, 1
      %p85 = por %p83, %p84
      %p86 = scmp.ne.s32.totalorder %s77, %s78
      %p87 = scmp.eq.s32.totalorder %s34, 0
      %p88 = por %p86, %p87
      %p89 = scmp.ne.s32.totalorder %s77, %s78
      %p90 = scmp.eq.s32.totalorder %s35, 1
      %p91 = por %p89, %p90
      %p93 = scmp.ne.s32.totalorder %s78, %s92
      %p94 = scmp.eq.s32.totalorder %s35, 0
      %p95 = por %p93, %p94
      %s97 = sadd.s32 %s96, 1
      %p100 = scmp.eq.s32.totalorder %s29, 1
      %p101 = scmp.ne.s32.totalorder %s96, %s98
      %p102 = scmp.eq.s32.totalorder %s29, 0
      %p103 = por %p101, %p102
      %p104 = scmp.ne.s32.totalorder %s96, %s98
      %p105 = scmp.eq.s32.totalorder %s34, 1
      %p106 = por %p104, %p105
      %p107 = scmp.ne.s32.totalorder %s98, %s99
      %p108 = scmp.eq.s32.totalorder %s34, 0
      %p109 = por %p107, %p108
      %p110 = scmp.ne.s32.totalorder %s98, %s99
      %p111 = scmp.eq.s32.totalorder %s35, 1
      %p112 = por %p110, %p111
      %p114 = scmp.ne.s32.totalorder %s99, %s113
      %p115 = scmp.eq.s32.totalorder %s35, 0
      %p116 = por %p114, %p115
      %s118 = sadd.s32 %s117, 1
      %p121 = scmp.eq.s32.totalorder %s29, 1
      %p122 = scmp.ne.s32.totalorder %s117, %s119
      %p123 = scmp.eq.s32.totalorder %s29, 0
      %p124 = por %p122, %p123
      %p125 = scmp.ne.s32.totalorder %s117, %s119
      %p126 = scmp.eq.s32.totalorder %s34, 1
      %p127 = por %p125, %p126
      %p128 = scmp.ne.s32.totalorder %s119, %s120
      %p129 = scmp.eq.s32.totalorder %s34, 0
      %p130 = por %p128, %p129
      %p131 = scmp.ne.s32.totalorder %s119, %s120
      %p132 = scmp.eq.s32.totalorder %s35, 1
      %p133 = por %p131, %p132
      %p135 = scmp.ne.s32.totalorder %s120, %s134
      %p136 = scmp.eq.s32.totalorder %s35, 0
      %p137 = por %p135, %p136
      %s139 = sadd.s32 %s138, 1
      %p142 = scmp.eq.s32.totalorder %s29, 1
      %p143 = scmp.ne.s32.totalorder %s138, %s140
      %p144 = scmp.eq.s32.totalorder %s29, 0
      %p145 = por %p143, %p144
      %p146 = scmp.ne.s32.totalorder %s138, %s140
      %p147 = scmp.eq.s32.totalorder %s34, 1
      %p148 = por %p146, %p147
      %p149 = scmp.ne.s32.totalorder %s140, %s141
      %p150 = scmp.eq.s32.totalorder %s34, 0
      %p151 = por %p149, %p150
      %p152 = scmp.ne.s32.totalorder %s140, %s141
      %p153 = scmp.eq.s32.totalorder %s35, 1
      %p154 = por %p152, %p153
      %p156 = scmp.ne.s32.totalorder %s141, %s155
      %p157 = scmp.eq.s32.totalorder %s35, 0
      %p158 = por %p156, %p157
      %s160 = sadd.s32 %s159, 1
      %p163 = scmp.eq.s32.totalorder %s29, 1
      %p164 = scmp.ne.s32.totalorder %s159, %s161
      %p165 = scmp.eq.s32.totalorder %s29, 0
      %p166 = por %p164, %p165
      %p167 = scmp.ne.s32.totalorder %s159, %s161
      %p168 = scmp.eq.s32.totalorder %s34, 1
      %p169 = por %p167, %p168
      %p170 = scmp.ne.s32.totalorder %s161, %s162
      %p171 = scmp.eq.s32.totalorder %s34, 0
      %p172 = por %p170, %p171
      %p173 = scmp.ne.s32.totalorder %s161, %s162
      %p174 = scmp.eq.s32.totalorder %s35, 1
      %p175 = por %p173, %p174
      %p177 = scmp.ne.s32.totalorder %s162, %s176
      %p178 = scmp.eq.s32.totalorder %s35, 0
      %p179 = por %p177, %p178
      %s181 = sadd.s32 %s180, 1
      %p184 = scmp.eq.s32.totalorder %s29, 1
      %p185 = scmp.ne.s32.totalorder %s180, %s182
      %p186 = scmp.eq.s32.totalorder %s29, 0
      %p187 = por %p185, %p186
      %p188 = scmp.ne.s32.totalorder %s180, %s182
      %p189 = scmp.eq.s32.totalorder %s34, 1
      %p190 = por %p188, %p189
      %p191 = scmp.ne.s32.totalorder %s182, %s183
      %p192 = scmp.eq.s32.totalorder %s34, 0
      %p193 = por %p191, %p192
      %p194 = scmp.ne.s32.totalorder %s182, %s183
      %p195 = scmp.eq.s32.totalorder %s35, 1
      %p196 = por %p194, %p195
      %p198 = scmp.ne.s32.totalorder %s183, %s197
      %p199 = scmp.eq.s32.totalorder %s35, 0
      %p200 = por %p198, %p199
      %s202 = sadd.s32 %s201, 1
      %p205 = scmp.eq.s32.totalorder %s29, 1
      %p206 = scmp.ne.s32.totalorder %s201, %s203
      %p207 = scmp.eq.s32.totalorder %s29, 0
      %p208 = por %p206, %p207
      %p209 = scmp.ne.s32.totalorder %s201, %s203
      %p210 = scmp.eq.s32.totalorder %s34, 1
      %p211 = por %p209, %p210
      %p212 = scmp.ne.s32.totalorder %s203, %s204
      %p213 = scmp.eq.s32.totalorder %s34, 0
      %p214 = por %p212, %p213
      %p215 = scmp.ne.s32.totalorder %s203, %s204
      %p216 = scmp.eq.s32.totalorder %s35, 1
      %p217 = por %p215, %p216
      %p219 = scmp.ne.s32.totalorder %s204, %s218
      %p220 = scmp.eq.s32.totalorder %s35, 0
      %p221 = por %p219, %p220
      %s223 = sadd.s32 %s222, 1
      %p226 = scmp.eq.s32.totalorder %s29, 1
      %p227 = scmp.ne.s32.totalorder %s222, %s224
      %p228 = scmp.eq.s32.totalorder %s29, 0
      %p229 = por %p227, %p228
      %p230 = scmp.ne.s32.totalorder %s222, %s224
      %p231 = scmp.eq.s32.totalorder %s34, 1
      %p232 = por %p230, %p231
      %p233 = scmp.ne.s32.totalorder %s224, %s225
      %p234 = scmp.eq.s32.totalorder %s34, 0
      %p235 = por %p233, %p234
      %p236 = scmp.ne.s32.totalorder %s224, %s225
      %p237 = scmp.eq.s32.totalorder %s35, 1
      %p238 = por %p236, %p237
      %p240 = scmp.ne.s32.totalorder %s225, %s239
      %p241 = scmp.eq.s32.totalorder %s35, 0
      %p242 = por %p240, %p241
      %s244 = sadd.s32 %s243, 1
      %p247 = scmp.eq.s32.totalorder %s29, 1
      %p248 = scmp.ne.s32.totalorder %s243, %s245
      %p249 = scmp.eq.s32.totalorder %s29, 0
      %p250 = por %p248, %p249
      %p251 = scmp.ne.s32.totalorder %s243, %s245
      %p252 = scmp.eq.s32.totalorder %s34, 1
      %p253 = por %p251, %p252
      %p254 = scmp.ne.s32.totalorder %s245, %s246
      %p255 = scmp.eq.s32.totalorder %s34, 0
      %p256 = por %p254, %p255
      %p257 = scmp.ne.s32.totalorder %s245, %s246
      %p258 = scmp.eq.s32.totalorder %s35, 1
      %p259 = por %p257, %p258
      %p261 = scmp.ne.s32.totalorder %s246, %s260
      %p262 = scmp.eq.s32.totalorder %s35, 0
      %p263 = por %p261, %p262
      %s265 = sadd.s32 %s264, 1
      %p268 = scmp.eq.s32.totalorder %s29, 1
      %p269 = scmp.ne.s32.totalorder %s264, %s266
      %p270 = scmp.eq.s32.totalorder %s29, 0
      %p271 = por %p269, %p270
      %p272 = scmp.ne.s32.totalorder %s264, %s266
      %p273 = scmp.eq.s32.totalorder %s34, 1
      %p274 = por %p272, %p273
      %p275 = scmp.ne.s32.totalorder %s266, %s267
      %p276 = scmp.eq.s32.totalorder %s34, 0
      %p277 = por %p275, %p276
      %p278 = scmp.ne.s32.totalorder %s266, %s267
      %p279 = scmp.eq.s32.totalorder %s35, 1
      %p280 = por %p278, %p279
      %p282 = scmp.ne.s32.totalorder %s267, %s281
      %p283 = scmp.eq.s32.totalorder %s35, 0
      %p284 = por %p282, %p283
      %s286 = sadd.s32 %s285, 1
      %p289 = scmp.eq.s32.totalorder %s29, 1
      %p290 = scmp.ne.s32.totalorder %s285, %s287
      %p291 = scmp.eq.s32.totalorder %s29, 0
      %p292 = por %p290, %p291
      %p293 = scmp.ne.s32.totalorder %s285, %s287
      %p294 = scmp.eq.s32.totalorder %s34, 1
      %p295 = por %p293, %p294
      %p296 = scmp.ne.s32.totalorder %s287, %s288
      %p297 = scmp.eq.s32.totalorder %s34, 0
      %p298 = por %p296, %p297
      %p299 = scmp.ne.s32.totalorder %s287, %s288
      %p300 = scmp.eq.s32.totalorder %s35, 1
      %p301 = por %p299, %p300
      %p303 = scmp.ne.s32.totalorder %s288, %s302
      %p304 = scmp.eq.s32.totalorder %s35, 0
      %p305 = por %p303, %p304
      %s307 = sadd.s32 %s306, 1
      %p310 = scmp.eq.s32.totalorder %s29, 1
      %p311 = scmp.ne.s32.totalorder %s306, %s308
      %p312 = scmp.eq.s32.totalorder %s29, 0
      %p313 = por %p311, %p312
      %p314 = scmp.ne.s32.totalorder %s306, %s308
      %p315 = scmp.eq.s32.totalorder %s34, 1
      %p316 = por %p314, %p315
      %p317 = scmp.ne.s32.totalorder %s308, %s309
      %p318 = scmp.eq.s32.totalorder %s34, 0
      %p319 = por %p317, %p318
      %p320 = scmp.ne.s32.totalorder %s308, %s309
      %p321 = scmp.eq.s32.totalorder %s35, 1
      %p322 = por %p320, %p321
      %p324 = scmp.ne.s32.totalorder %s309, %s323
      %p325 = scmp.eq.s32.totalorder %s35, 0
      %p326 = por %p324, %p325
      %s328 = sadd.s32 %s327, 1
      %p331 = scmp.eq.s32.totalorder %s29, 1
      %p332 = scmp.ne.s32.totalorder %s327, %s329
      %p333 = scmp.eq.s32.totalorder %s29, 0
      %p334 = por %p332, %p333
      %p335 = scmp.ne.s32.totalorder %s327, %s329
      %p336 = scmp.eq.s32.totalorder %s34, 1
      %p337 = por %p335, %p336
      %p338 = scmp.ne.s32.totalorder %s329, %s330
      %p339 = scmp.eq.s32.totalorder %s34, 0
      %p340 = por %p338, %p339
      %p341 = scmp.ne.s32.totalorder %s329, %s330
      %p342 = scmp.eq.s32.totalorder %s35, 1
      %p343 = por %p341, %p342
      %p345 = scmp.ne.s32.totalorder %s330, %s344
      %p346 = scmp.eq.s32.totalorder %s35, 0
      %p347 = por %p345, %p346
      %s349 = sadd.s32 %s348, 1
      %p352 = scmp.eq.s32.totalorder %s29, 1
      %p353 = scmp.ne.s32.totalorder %s348, %s350
      %p354 = scmp.eq.s32.totalorder %s29, 0
      %p355 = por %p353, %p354
      %p356 = scmp.ne.s32.totalorder %s348, %s350
      %p357 = scmp.eq.s32.totalorder %s34, 1
      %p358 = por %p356, %p357
      %p359 = scmp.ne.s32.totalorder %s350, %s351
      %p360 = scmp.eq.s32.totalorder %s34, 0
      %p361 = por %p359, %p360
      %p362 = scmp.ne.s32.totalorder %s350, %s351
      %p363 = scmp.eq.s32.totalorder %s35, 1
      %p364 = por %p362, %p363
      %p366 = scmp.ne.s32.totalorder %s351, %s365
      %p367 = scmp.eq.s32.totalorder %s35, 0
      %p368 = por %p366, %p367
      %s370 = sadd.s32 %s369, 1
      %p373 = scmp.eq.s32.totalorder %s29, 1
      %p374 = scmp.ne.s32.totalorder %s369, %s371
      %p375 = scmp.eq.s32.totalorder %s29, 0
      %p376 = por %p374, %p375
      %p377 = scmp.ne.s32.totalorder %s369, %s371
      %p378 = scmp.eq.s32.totalorder %s34, 1
      %p379 = por %p377, %p378
      %p380 = scmp.ne.s32.totalorder %s371, %s372
      %p381 = scmp.eq.s32.totalorder %s34, 0
      %p382 = por %p380, %p381
      %p383 = scmp.ne.s32.totalorder %s371, %s372
      %p384 = scmp.eq.s32.totalorder %s35, 1
      %p385 = por %p383, %p384
      %p387 = scmp.ne.s32.totalorder %s372, %s386
      %p388 = scmp.eq.s32.totalorder %s35, 0
      %p389 = por %p387, %p388
      %s391 = sadd.s32 %s390, 1
      %p394 = scmp.eq.s32.totalorder %s29, 1
      %p395 = scmp.ne.s32.totalorder %s390, %s392
      %p396 = scmp.eq.s32.totalorder %s29, 0
      %p397 = por %p395, %p396
      %p398 = scmp.ne.s32.totalorder %s390, %s392
      %p399 = scmp.eq.s32.totalorder %s34, 1
      %p400 = por %p398, %p399
      %p401 = scmp.ne.s32.totalorder %s392, %s393
      %p402 = scmp.eq.s32.totalorder %s34, 0
      %p403 = por %p401, %p402
      %p404 = scmp.ne.s32.totalorder %s392, %s393
      %p405 = scmp.eq.s32.totalorder %s35, 1
      %p406 = por %p404, %p405
      %p408 = scmp.ne.s32.totalorder %s393, %s407
      %p409 = scmp.eq.s32.totalorder %s35, 0
      %p410 = por %p408, %p409
      %s411 = ssub.s32 %s36, %s48
      %s412 = ssub.s32 %s37, %s44
      %s413 = sor.u32 %s411, %s412
      %p414 = scmp.eq.s32.totalorder %s413, 0
      %s416 = sadd.s32 %s415, 1
      %s417 = scalar_select %p414, %s415, %s416
      %p420 = pneg %p414
      %p421 = scmp.eq.s32.totalorder %s29, 1
      %p422 = por %p420, %p421
      %p423 = scmp.ne.s32.totalorder %s415, %s418
      %p424 = scmp.eq.s32.totalorder %s29, 0
      %p425 = por %p423, %p424
      %p426 = scmp.ne.s32.totalorder %s415, %s418
      %p427 = scmp.eq.s32.totalorder %s34, 1
      %p428 = por %p426, %p427
      %p429 = scmp.ne.s32.totalorder %s418, %s419
      %p430 = scmp.eq.s32.totalorder %s34, 0
      %p431 = por %p429, %p430
      %p432 = scmp.ne.s32.totalorder %s418, %s419
      %p433 = scmp.eq.s32.totalorder %s35, 1
      %p434 = por %p432, %p433
      %p436 = scmp.ne.s32.totalorder %s419, %s435
      %p437 = scmp.eq.s32.totalorder %s35, 0
      %p438 = por %p436, %p437
      %p439 = scmp.le.s32.totalorder 1, %s29
      %p440 = scmp.lt.s32.totalorder %s29, 3
      %p441 = pnand %p439, %p440
      %p442 = pneg %p441
      // Predicated region
      $region9: #{tpu_custom_call.1} parent=5 // pred_check
        _
      $region10: #{tpu_custom_call.1} parent=5 // pred_check_branch
        %444 = sbr.rel (%p441) target = $region12
      $region11: #{tpu_custom_call.1} parent=5 // pred_region
        %s445 = ssub.s32 %s29, 1
        // Predicated region
        $region13: #{tpu_custom_call.1} parent=11 // pred_check
          %p446 = pneg %p88
        $region14: #{tpu_custom_call.1} parent=11 // pred_check_branch
          %448 = sbr.rel (%p446) target = $region16
        $region15: #{tpu_custom_call.1} parent=11 // pred_region
          _
        $region16: #{tpu_custom_call.1} parent=11 // pred_fallthru
          _
        // Predicated region
        $region17: #{tpu_custom_call.1} parent=11 // pred_check
          %p449 = pneg %p109
        $region18: #{tpu_custom_call.1} parent=11 // pred_check_branch
          %451 = sbr.rel (%p449) target = $region20
        $region19: #{tpu_custom_call.1} parent=11 // pred_region
          _
        $region20: #{tpu_custom_call.1} parent=11 // pred_fallthru
          _
        // Predicated region
        $region21: #{tpu_custom_call.1} parent=11 // pred_check
          %p452 = pneg %p130
        $region22: #{tpu_custom_call.1} parent=11 // pred_check_branch
          %454 = sbr.rel (%p452) target = $region24
        $region23: #{tpu_custom_call.1} parent=11 // pred_region
          _
        $region24: #{tpu_custom_call.1} parent=11 // pred_fallthru
          _
        // Predicated region
        $region25: #{tpu_custom_call.1} parent=11 // pred_check
          %p455 = pneg %p151
        $region26: #{tpu_custom_call.1} parent=11 // pred_check_branch
          %457 = sbr.rel (%p455) target = $region28
        $region27: #{tpu_custom_call.1} parent=11 // pred_region
          _
        $region28: #{tpu_custom_call.1} parent=11 // pred_fallthru
          _
        // Predicated region
        $region29: #{tpu_custom_call.1} parent=11 // pred_check
          %p458 = pneg %p172
        $region30: #{tpu_custom_call.1} parent=11 // pred_check_branch
          %460 = sbr.rel (%p458) target = $region32
        $region31: #{tpu_custom_call.1} parent=11 // pred_region
          %s462 = ssub.s32 256, 256
          %463 = vsyncadd [#allocation5], %s462
          %s464 = sshll.u32 [#allocation4], 4
          %s465 = int_to_ptr.vmem [resolvable:$true] %s464
          %470 = dma.hbm_to_vmem [thread:$0]  %s5, 256, %s465, [#allocation5], 64, 64, 4
        $region32: #{tpu_custom_call.1} parent=11 // pred_fallthru
          _
        // Predicated region
        $region33: #{tpu_custom_call.1} parent=11 // pred_check
          %p471 = pneg %p193
        $region34: #{tpu_custom_call.1} parent=11 // pred_check_branch
          %473 = sbr.rel (%p471) target = $region36
        $region35: #{tpu_custom_call.1} parent=11 // pred_region
          %s475 = ssub.s32 16, 16
          %476 = vsyncadd [#allocation8], %s475
          %s478 = sshll.u32 [#allocation7], 4
          %s479 = int_to_ptr.vmem [resolvable:$true] %s478
          %481 = dma.hbm_to_vmem [thread:$0]  %s6, 16, %s479, [#allocation8]
        $region36: #{tpu_custom_call.1} parent=11 // pred_fallthru
          _
        // Predicated region
        $region37: #{tpu_custom_call.1} parent=11 // pred_check
          %p482 = pneg %p214
        $region38: #{tpu_custom_call.1} parent=11 // pred_check_branch
          %484 = sbr.rel (%p482) target = $region40
        $region39: #{tpu_custom_call.1} parent=11 // pred_region
          %s486 = ssub.s32 256, 256
          %487 = vsyncadd [#allocation8], %s486
          %s488 = sshll.u32 [#allocation9], 4
          %s489 = int_to_ptr.vmem [resolvable:$true] %s488
          %494 = dma.hbm_to_vmem [thread:$0]  %s7, 256, %s489, [#allocation8], 64, 64, 4
        $region40: #{tpu_custom_call.1} parent=11 // pred_fallthru
          _
        // Predicated region
        $region41: #{tpu_custom_call.1} parent=11 // pred_check
          %p495 = pneg %p235
        $region42: #{tpu_custom_call.1} parent=11 // pred_check_branch
          %497 = sbr.rel (%p495) target = $region44
        $region43: #{tpu_custom_call.1} parent=11 // pred_region
          %s499 = ssub.s32 16, 16
          %500 = vsyncadd [#allocation11], %s499
          %s502 = sshll.u32 [#allocation10], 4
          %s503 = int_to_ptr.vmem [resolvable:$true] %s502
          %505 = dma.hbm_to_vmem [thread:$0]  %s8, 16, %s503, [#allocation11]
        $region44: #{tpu_custom_call.1} parent=11 // pred_fallthru
          _
        // Predicated region
        $region45: #{tpu_custom_call.1} parent=11 // pred_check
          %p506 = pneg %p256
        $region46: #{tpu_custom_call.1} parent=11 // pred_check_branch
          %508 = sbr.rel (%p506) target = $region48
        $region47: #{tpu_custom_call.1} parent=11 // pred_region
          %s510 = ssub.s32 16, 16
          %511 = vsyncadd [#allocation11], %s510
          %s513 = sshll.u32 [#allocation12], 4
          %s514 = int_to_ptr.vmem [resolvable:$true] %s513
          %516 = dma.hbm_to_vmem [thread:$0]  %s9, 16, %s514, [#allocation11]
        $region48: #{tpu_custom_call.1} parent=11 // pred_fallthru
          _
        // Predicated region
        $region49: #{tpu_custom_call.1} parent=11 // pred_check
          %p517 = pneg %p277
        $region50: #{tpu_custom_call.1} parent=11 // pred_check_branch
          %519 = sbr.rel (%p517) target = $region52
        $region51: #{tpu_custom_call.1} parent=11 // pred_region
          _
        $region52: #{tpu_custom_call.1} parent=11 // pred_fallthru
          _
        // Predicated region
        $region53: #{tpu_custom_call.1} parent=11 // pred_check
          %p520 = pneg %p298
        $region54: #{tpu_custom_call.1} parent=11 // pred_check_branch
          %522 = sbr.rel (%p520) target = $region56
        $region55: #{tpu_custom_call.1} parent=11 // pred_region
          _
        $region56: #{tpu_custom_call.1} parent=11 // pred_fallthru
          _
        // Predicated region
        $region57: #{tpu_custom_call.1} parent=11 // pred_check
          %p523 = pneg %p319
        $region58: #{tpu_custom_call.1} parent=11 // pred_check_branch
          %525 = sbr.rel (%p523) target = $region60
        $region59: #{tpu_custom_call.1} parent=11 // pred_region
          _
        $region60: #{tpu_custom_call.1} parent=11 // pred_fallthru
          _
        // Predicated region
        $region61: #{tpu_custom_call.1} parent=11 // pred_check
          %p526 = pneg %p340
        $region62: #{tpu_custom_call.1} parent=11 // pred_check_branch
          %528 = sbr.rel (%p526) target = $region64
        $region63: #{tpu_custom_call.1} parent=11 // pred_region
          _
        $region64: #{tpu_custom_call.1} parent=11 // pred_fallthru
          _
        // Predicated region
        $region65: #{tpu_custom_call.1} parent=11 // pred_check
          %p529 = pneg %p361
        $region66: #{tpu_custom_call.1} parent=11 // pred_check_branch
          %531 = sbr.rel (%p529) target = $region68
        $region67: #{tpu_custom_call.1} parent=11 // pred_region
          _
        $region68: #{tpu_custom_call.1} parent=11 // pred_fallthru
          _
        // Predicated region
        $region69: #{tpu_custom_call.1} parent=11 // pred_check
          %p532 = pneg %p382
        $region70: #{tpu_custom_call.1} parent=11 // pred_check_branch
          %534 = sbr.rel (%p532) target = $region72
        $region71: #{tpu_custom_call.1} parent=11 // pred_region
          _
        $region72: #{tpu_custom_call.1} parent=11 // pred_fallthru
          _
        // Predicated region
        $region73: #{tpu_custom_call.1} parent=11 // pred_check
          %p535 = pneg %p403
        $region74: #{tpu_custom_call.1} parent=11 // pred_check_branch
          %537 = sbr.rel (%p535) target = $region76
        $region75: #{tpu_custom_call.1} parent=11 // pred_region
          _
        $region76: #{tpu_custom_call.1} parent=11 // pred_fallthru
          _
      $region12: #{tpu_custom_call.1} parent=5 // pred_fallthru
        _
      %p538 = scmp.lt.s32.totalorder %s29, 2
      // Predicated region
      $region77: #{tpu_custom_call.1} parent=5 // pred_check
        %p539 = pneg %p538
      $region78: #{tpu_custom_call.1} parent=5 // pred_check_branch
        %541 = sbr.rel (%p539) target = $region80
      $region79: #{tpu_custom_call.1} parent=5 // pred_region
        // Predicated region
        $region81: #{tpu_custom_call.1} parent=79 // pred_check
          %p542 = pneg %p61
        $region82: #{tpu_custom_call.1} parent=79 // pred_check_branch
          %544 = sbr.rel (%p542) target = $region84
        $region83: #{tpu_custom_call.1} parent=79 // pred_region
          %p545 = scmp.lt.s32.totalorder %s36, 1
          %s546 = scalar_select %p545, %s36, 1
          %s547 = smul.addr %s546, 8
          %s548 = scalar_lea.vmem %s0, %s547
        $region84: #{tpu_custom_call.1} parent=79 // pred_fallthru
          _
      $region80: #{tpu_custom_call.1} parent=5 // pred_fallthru
        _
      %p549 = scmp.le.s32.totalorder 1, %s29
      %p550 = scmp.lt.s32.totalorder %s29, 3
      %p551 = pnand %p549, %p550
      %p552 = pneg %p551
      // Predicated region
      $region85: #{tpu_custom_call.1} parent=5 // pred_check
        _
      $region86: #{tpu_custom_call.1} parent=5 // pred_check_branch
        %554 = sbr.rel (%p551) target = $region88
      $region87: #{tpu_custom_call.1} parent=5 // pred_region
        %s555 = ssub.s32 %s29, 1
        // Predicated region
        $region89: #{tpu_custom_call.1} parent=87 // pred_check
          %p556 = pneg %p172
        $region90: #{tpu_custom_call.1} parent=87 // pred_check_branch
          %558 = sbr.rel (%p556) target = $region92
        $region91: #{tpu_custom_call.1} parent=87 // pred_region
          %559 = dma.done [#allocation5], 256
        $region92: #{tpu_custom_call.1} parent=87 // pred_fallthru
          _
        // Predicated region
        $region93: #{tpu_custom_call.1} parent=87 // pred_check
          %p560 = pneg %p193
        $region94: #{tpu_custom_call.1} parent=87 // pred_check_branch
          %562 = sbr.rel (%p560) target = $region96
        $region95: #{tpu_custom_call.1} parent=87 // pred_region
          %563 = dma.done [#allocation8], 16
        $region96: #{tpu_custom_call.1} parent=87 // pred_fallthru
          _
        // Predicated region
        $region97: #{tpu_custom_call.1} parent=87 // pred_check
          %p564 = pneg %p214
        $region98: #{tpu_custom_call.1} parent=87 // pred_check_branch
          %566 = sbr.rel (%p564) target = $region100
        $region99: #{tpu_custom_call.1} parent=87 // pred_region
          %567 = dma.done [#allocation8], 256
        $region100: #{tpu_custom_call.1} parent=87 // pred_fallthru
          _
        // Predicated region
        $region101: #{tpu_custom_call.1} parent=87 // pred_check
          %p568 = pneg %p235
        $region102: #{tpu_custom_call.1} parent=87 // pred_check_branch
          %570 = sbr.rel (%p568) target = $region104
        $region103: #{tpu_custom_call.1} parent=87 // pred_region
          %571 = dma.done [#allocation11], 16
        $region104: #{tpu_custom_call.1} parent=87 // pred_fallthru
          _
        // Predicated region
        $region105: #{tpu_custom_call.1} parent=87 // pred_check
          %p572 = pneg %p256
        $region106: #{tpu_custom_call.1} parent=87 // pred_check_branch
          %574 = sbr.rel (%p572) target = $region108
        $region107: #{tpu_custom_call.1} parent=87 // pred_region
          %575 = dma.done [#allocation11], 16
        $region108: #{tpu_custom_call.1} parent=87 // pred_fallthru
          _
        %p576 = scmp.lt.s32.totalorder %s38, 1
        %s577 = scalar_select %p576, %s38, 1
        %s578 = smul.addr %s577, 8
        %s579 = scalar_lea.vmem %s0, %s578
        %p580 = pneg %p67
        %p581 = pneg %p64
        %p582 = pneg %p88
        %p583 = pneg %p85
        %p584 = pneg %p109
        %p585 = pneg %p106
        %p586 = pneg %p130
        %p587 = pneg %p127
        %p588 = pneg %p151
        %p589 = pneg %p148
        %p590 = pneg %p172
        %p591 = pneg %p169
        %p592 = pneg %p193
        %p593 = pneg %p190
        %p594 = pneg %p214
        %p595 = pneg %p211
        %p596 = pneg %p235
        %p597 = pneg %p232
        %p598 = pneg %p256
        %p599 = pneg %p253
        %p600 = pneg %p277
        %p601 = pneg %p274
        %p602 = pneg %p298
        %p603 = pneg %p295
        %p604 = pneg %p319
        %p605 = pneg %p316
        %p606 = pneg %p340
        %p607 = pneg %p337
        %p608 = pneg %p361
        %p609 = pneg %p358
        %p610 = pneg %p382
        %p611 = pneg %p379
        %p612 = pneg %p403
        %p613 = pneg %p400
        %p614 = pneg %p431
        %p615 = pneg %p428
        %s616 = sand.u32 %s418, 1
        %s617 = scalar_lea.sflag [#allocation6], %s616
        %s618 = sand.u32 %s418, 1
        %s619 = smul.addr %s618, 8
        %s620 = scalar_lea.vmem [#allocation13], %s619
        %p621 = scmp.lt.s32.totalorder %s38, 1
        %s622 = scalar_select %p621, %s38, 1
        %s623 = smul.addr %s622, 8
        %s624 = scalar_lea.vmem %s0, %s623
        %p626 = scmp.eq.s32.totalorder %s39, 0
        // Predicated region
        $region109: #{tpu_custom_call.1} parent=87 // pred_check
          %p627 = pneg %p626
        $region110: #{tpu_custom_call.1} parent=87 // pred_check_branch
          %629 = sbr.rel (%p627) target = $region112
        $region111: #{tpu_custom_call.1} parent=87 // pred_region
          %v630 = vld [vmem:[%s624] sm:$0xff]
          %v631 = vpack.c.bf16 %v630, %v630
          %v632 = vld [vmem:[%s3] sm:$0xf]
          %v633 = vld [vmem:[%s3 + $0x4] sm:$0xf]
          %v634 = vld [vmem:[%s3 + $0x8] sm:$0xf]
          %v635 = vld [vmem:[%s3 + $0xc] sm:$0xf]
          %v636 = vld [vmem:[%s4] sm:$0x1]
          %v638 = vlaneseq
          %v639 = vshrl.u32 %v638, 7
          %v640 = vsub.s32 0, %v639
          %v641 = vrot.slane %v636, %v640
          %v647 = vunpack.c.l.b16 %v632
          %v648 = vunpack.c.l.b16 %v633
          %v649 = vunpack.c.l.b16 %v634
          %v650 = vunpack.c.l.b16 %v635
          %v651 = vpack.c.b16 %v648, %v647
          %v652 = vpack.c.b16 %v650, %v649
          %vm655 = vcmask 261120
          %v657 = vsel %vm655, %v631, 0
          %659 = vmatprep.subr.bf16.mxu0 0
          %660 = vmatpush1.bf16.msra.mxu0 %v651
          %661 = vmatprep.subr.bf16.mxu0 0
          %662 = vmatpush1.bf16.msra.mxu0 %v652
          %663 = vmatprep.subr.bf16.mxu0 0
          %664 = vmatpush1.bf16.msra.mxu0 0
          %665 = vmatprep.subr.bf16.mxu0 0
          %666 = vmatpush1.bf16.msra.mxu0 0
          %667 = vmatprep.subr.bf16.mxu0 0
          %668 = vmatpush1.bf16.msra.mxu0 0
          %669 = vmatprep.subr.bf16.mxu0 0
          %670 = vmatpush1.bf16.msra.mxu0 0
          %671 = vmatprep.subr.bf16.mxu0 0
          %672 = vmatpush1.bf16.msra.mxu0 0
          %673 = vmatprep.subr.bf16.mxu0 0
          %674 = vmatpush1.bf16.msra.mxu0 0
          %675 = vmatprep.subr.bf16.mxu0 0
          %676 = vmatpush1.bf16.msra.mxu0 0
          %677 = vmatprep.subr.bf16.mxu0 0
          %678 = vmatpush1.bf16.msra.mxu0 0
          %679 = vmatprep.subr.bf16.mxu0 0
          %680 = vmatpush1.bf16.msra.mxu0 0
          %681 = vmatprep.subr.bf16.mxu0 0
          %682 = vmatpush1.bf16.msra.mxu0 0
          %683 = vmatprep.subr.bf16.mxu0 0
          %684 = vmatpush1.bf16.msra.mxu0 0
          %685 = vmatprep.subr.bf16.mxu0 0
          %686 = vmatpush1.bf16.msra.mxu0 0
          %687 = vmatprep.subr.bf16.mxu0 0
          %688 = vmatpush1.bf16.msra.mxu0 0
          %689 = vmatprep.subr.bf16.mxu0 0
          %690 = vmatpush1.bf16.msra.mxu0 0
          %691 = vmatprep.mubr.bf16.mxu0 0
          %692 = vmatmul.mubr.bf16.gmra.mrb[0].mxu0 %v657
          %v693 = vpop.f32.mrb[0].mxu0
          %v694 = vadd.f32 %v641, %v693
          %v695 = vpop.f32.mrb[0].mxu0
          %v696 = vpop.f32.mrb[0].mxu0
          %v697 = vpop.f32.mrb[0].mxu0
          %698 = vdwg.mxu0
          %v699 = vld [vmem:[#allocation4] sm:$0xf]
          %v700 = vld [vmem:[#allocation4 + $0x4] sm:$0xf]
          %v701 = vld [vmem:[#allocation4 + $0x8] sm:$0xf]
          %v702 = vld [vmem:[#allocation4 + $0xc] sm:$0xf]
          %v703 = vld [vmem:[#allocation7] sm:$0x1]
          %v705 = vlaneseq
          %v706 = vshrl.u32 %v705, 7
          %v707 = vsub.s32 0, %v706
          %v708 = vrot.slane %v703, %v707
          %v714 = vunpack.c.l.b16 %v699
          %v715 = vunpack.c.l.b16 %v700
          %v716 = vunpack.c.l.b16 %v701
          %v717 = vunpack.c.l.b16 %v702
          %v718 = vpack.c.b16 %v715, %v714
          %v719 = vpack.c.b16 %v717, %v716
          %722 = vmatprep.subr.bf16.mxu0 0
          %723 = vmatpush1.bf16.msra.mxu0 %v718
          %724 = vmatprep.subr.bf16.mxu0 0
          %725 = vmatpush1.bf16.msra.mxu0 %v719
          %726 = vmatprep.subr.bf16.mxu0 0
          %727 = vmatpush1.bf16.msra.mxu0 0
          %728 = vmatprep.subr.bf16.mxu0 0
          %729 = vmatpush1.bf16.msra.mxu0 0
          %730 = vmatprep.subr.bf16.mxu0 0
          %731 = vmatpush1.bf16.msra.mxu0 0
          %732 = vmatprep.subr.bf16.mxu0 0
          %733 = vmatpush1.bf16.msra.mxu0 0
          %734 = vmatprep.subr.bf16.mxu0 0
          %735 = vmatpush1.bf16.msra.mxu0 0
          %736 = vmatprep.subr.bf16.mxu0 0
          %737 = vmatpush1.bf16.msra.mxu0 0
          %738 = vmatprep.subr.bf16.mxu0 0
          %739 = vmatpush1.bf16.msra.mxu0 0
          %740 = vmatprep.subr.bf16.mxu0 0
          %741 = vmatpush1.bf16.msra.mxu0 0
          %742 = vmatprep.subr.bf16.mxu0 0
          %743 = vmatpush1.bf16.msra.mxu0 0
          %744 = vmatprep.subr.bf16.mxu0 0
          %745 = vmatpush1.bf16.msra.mxu0 0
          %746 = vmatprep.subr.bf16.mxu0 0
          %747 = vmatpush1.bf16.msra.mxu0 0
          %748 = vmatprep.subr.bf16.mxu0 0
          %749 = vmatpush1.bf16.msra.mxu0 0
          %750 = vmatprep.subr.bf16.mxu0 0
          %751 = vmatpush1.bf16.msra.mxu0 0
          %752 = vmatprep.subr.bf16.mxu0 0
          %753 = vmatpush1.bf16.msra.mxu0 0
          %754 = vmatprep.mubr.bf16.mxu0 0
          %755 = vmatmul.mubr.bf16.gmra.mrb[0].mxu0 %v657
          %v756 = vpop.f32.mrb[0].mxu0
          %v757 = vadd.f32 %v708, %v756
          %v758 = vpop.f32.mrb[0].mxu0
          %v759 = vpop.f32.mrb[0].mxu0
          %v760 = vpop.f32.mrb[0].mxu0
          %761 = vdwg.mxu0
          %763 = vrot.lane.b32.xlu0 %v694, 124
          %v764 = vpop.permute.xlu0 %763
          %766 = vrot.lane.b32.xlu0 %v694, 120
          %v767 = vpop.permute.xlu0 %766
          %769 = vrot.lane.b32.xlu0 %v694, 116
          %v770 = vpop.permute.xlu0 %769
          %772 = vrot.lane.b32.xlu0 %v694, 112
          %v773 = vpop.permute.xlu0 %772
          %775 = vrot.lane.b32.xlu0 %v694, 108
          %v776 = vpop.permute.xlu0 %775
          %778 = vrot.lane.b32.xlu0 %v694, 104
          %v779 = vpop.permute.xlu0 %778
          %781 = vrot.lane.b32.xlu0 %v694, 100
          %v782 = vpop.permute.xlu0 %781
          %v784 = vcombine.low %v694, %v767
          %v785 = vcombine.high %v694, %v767
          %v787 = vunpack.c.l.s4 1983009808
          %v788 = vunpack.c.0.s8 %v787
          %v789 = vlaneseq
          %v790 = vshrl.u32 %v789, 7
          %v791 = vsub.s32 %v788, %v790
          %v792 = vrot.slane %v784, %v791
          %v794 = vunpack.c.l.s4 1983009808
          %v795 = vunpack.c.0.s8 %v794
          %v796 = vlaneseq
          %v797 = vshrl.u32 %v796, 7
          %v798 = vsub.s32 %v795, %v797
          %v799 = vrot.slane %v785, %v798
          %v800 = vcombine.low %v764, %v770
          %v801 = vcombine.high %v764, %v770
          %v803 = vunpack.c.l.s4 1983009808
          %v804 = vunpack.c.0.s8 %v803
          %v805 = vlaneseq
          %v806 = vshrl.u32 %v805, 7
          %v807 = vsub.s32 %v804, %v806
          %v808 = vrot.slane %v800, %v807
          %v810 = vunpack.c.l.s4 1983009808
          %v811 = vunpack.c.0.s8 %v810
          %v812 = vlaneseq
          %v813 = vshrl.u32 %v812, 7
          %v814 = vsub.s32 %v811, %v813
          %v815 = vrot.slane %v801, %v814
          %v816 = vcombine.low %v773, %v779
          %v817 = vcombine.high %v773, %v779
          %v819 = vunpack.c.l.s4 1983009808
          %v820 = vunpack.c.0.s8 %v819
          %v821 = vlaneseq
          %v822 = vshrl.u32 %v821, 7
          %v823 = vsub.s32 %v820, %v822
          %v824 = vrot.slane %v816, %v823
          %v826 = vunpack.c.l.s4 1983009808
          %v827 = vunpack.c.0.s8 %v826
          %v828 = vlaneseq
          %v829 = vshrl.u32 %v828, 7
          %v830 = vsub.s32 %v827, %v829
          %v831 = vrot.slane %v817, %v830
          %v832 = vcombine.low %v776, %v782
          %v833 = vcombine.high %v776, %v782
          %v835 = vunpack.c.l.s4 1983009808
          %v836 = vunpack.c.0.s8 %v835
          %v837 = vlaneseq
          %v838 = vshrl.u32 %v837, 7
          %v839 = vsub.s32 %v836, %v838
          %v840 = vrot.slane %v832, %v839
          %v842 = vunpack.c.l.s4 1983009808
          %v843 = vunpack.c.0.s8 %v842
          %v844 = vlaneseq
          %v845 = vshrl.u32 %v844, 7
          %v846 = vsub.s32 %v843, %v845
          %v847 = vrot.slane %v833, %v846
          %v848 = vcombine.low %v792, %v808
          %v849 = vcombine.high %v792, %v808
          %v851 = vunpack.c.l.s4 1934713408
          %v852 = vunpack.c.0.s8 %v851
          %v853 = vlaneseq
          %v854 = vshrl.u32 %v853, 7
          %v855 = vsub.s32 %v852, %v854
          %v856 = vrot.slane %v848, %v855
          %v858 = vunpack.c.l.s4 1934713408
          %v859 = vunpack.c.0.s8 %v858
          %v860 = vlaneseq
          %v861 = vshrl.u32 %v860, 7
          %v862 = vsub.s32 %v859, %v861
          %v863 = vrot.slane %v849, %v862
          %v864 = vcombine.low %v799, %v815
          %v865 = vcombine.high %v799, %v815
          %v867 = vunpack.c.l.s4 1934713408
          %v868 = vunpack.c.0.s8 %v867
          %v869 = vlaneseq
          %v870 = vshrl.u32 %v869, 7
          %v871 = vsub.s32 %v868, %v870
          %v872 = vrot.slane %v864, %v871
          %v874 = vunpack.c.l.s4 1934713408
          %v875 = vunpack.c.0.s8 %v874
          %v876 = vlaneseq
          %v877 = vshrl.u32 %v876, 7
          %v878 = vsub.s32 %v875, %v877
          %v879 = vrot.slane %v865, %v878
          %v880 = vcombine.low %v824, %v840
          %v881 = vcombine.high %v824, %v840
          %v883 = vunpack.c.l.s4 1934713408
          %v884 = vunpack.c.0.s8 %v883
          %v885 = vlaneseq
          %v886 = vshrl.u32 %v885, 7
          %v887 = vsub.s32 %v884, %v886
          %v888 = vrot.slane %v880, %v887
          %v890 = vunpack.c.l.s4 1934713408
          %v891 = vunpack.c.0.s8 %v890
          %v892 = vlaneseq
          %v893 = vshrl.u32 %v892, 7
          %v894 = vsub.s32 %v891, %v893
          %v895 = vrot.slane %v881, %v894
          %v896 = vcombine.low %v831, %v847
          %v897 = vcombine.high %v831, %v847
          %v899 = vunpack.c.l.s4 1934713408
          %v900 = vunpack.c.0.s8 %v899
          %v901 = vlaneseq
          %v902 = vshrl.u32 %v901, 7
          %v903 = vsub.s32 %v900, %v902
          %v904 = vrot.slane %v896, %v903
          %v906 = vunpack.c.l.s4 1934713408
          %v907 = vunpack.c.0.s8 %v906
          %v908 = vlaneseq
          %v909 = vshrl.u32 %v908, 7
          %v910 = vsub.s32 %v907, %v909
          %v911 = vrot.slane %v897, %v910
          %v912 = vcombine.low %v856, %v888
          %v913 = vcombine.high %v856, %v888
          %v914 = vcombine.low %v863, %v895
          %v915 = vcombine.high %v863, %v895
          %v916 = vcombine.low %v872, %v904
          %v917 = vcombine.high %v872, %v904
          %v918 = vcombine.low %v879, %v911
          %v919 = vcombine.high %v879, %v911
          %v920 = vcombine.low %v912, %v914
          %v921 = vcombine.high %v912, %v914
          %v923 = vunpack.c.l.s4 1983009808
          %v924 = vunpack.c.0.s8 %v923
          %v925 = vlaneseq
          %v926 = vshrl.u32 %v925, 7
          %v927 = vsub.s32 %v924, %v926
          %v928 = vrot.slane %v920, %v927
          %v930 = vunpack.c.l.s4 1983009808
          %v931 = vunpack.c.0.s8 %v930
          %v932 = vlaneseq
          %v933 = vshrl.u32 %v932, 7
          %v934 = vsub.s32 %v931, %v933
          %v935 = vrot.slane %v921, %v934
          %v936 = vcombine.low %v913, %v915
          %v937 = vcombine.high %v913, %v915
          %v939 = vunpack.c.l.s4 1983009808
          %v940 = vunpack.c.0.s8 %v939
          %v941 = vlaneseq
          %v942 = vshrl.u32 %v941, 7
          %v943 = vsub.s32 %v940, %v942
          %v944 = vrot.slane %v936, %v943
          %v946 = vunpack.c.l.s4 1983009808
          %v947 = vunpack.c.0.s8 %v946
          %v948 = vlaneseq
          %v949 = vshrl.u32 %v948, 7
          %v950 = vsub.s32 %v947, %v949
          %v951 = vrot.slane %v937, %v950
          %v952 = vcombine.low %v916, %v918
          %v953 = vcombine.high %v916, %v918
          %v955 = vunpack.c.l.s4 1983009808
          %v956 = vunpack.c.0.s8 %v955
          %v957 = vlaneseq
          %v958 = vshrl.u32 %v957, 7
          %v959 = vsub.s32 %v956, %v958
          %v960 = vrot.slane %v952, %v959
          %v962 = vunpack.c.l.s4 1983009808
          %v963 = vunpack.c.0.s8 %v962
          %v964 = vlaneseq
          %v965 = vshrl.u32 %v964, 7
          %v966 = vsub.s32 %v963, %v965
          %v967 = vrot.slane %v953, %v966
          %v968 = vcombine.low %v917, %v919
          %v969 = vcombine.high %v917, %v919
          %v971 = vunpack.c.l.s4 1983009808
          %v972 = vunpack.c.0.s8 %v971
          %v973 = vlaneseq
          %v974 = vshrl.u32 %v973, 7
          %v975 = vsub.s32 %v972, %v974
          %v976 = vrot.slane %v968, %v975
          %v978 = vunpack.c.l.s4 1983009808
          %v979 = vunpack.c.0.s8 %v978
          %v980 = vlaneseq
          %v981 = vshrl.u32 %v980, 7
          %v982 = vsub.s32 %v979, %v981
          %v983 = vrot.slane %v969, %v982
          %v984 = vcombine.low %v928, %v944
          %v985 = vcombine.high %v928, %v944
          %v987 = vunpack.c.l.s4 1934713408
          %v988 = vunpack.c.0.s8 %v987
          %v989 = vlaneseq
          %v990 = vshrl.u32 %v989, 7
          %v991 = vsub.s32 %v988, %v990
          %v992 = vrot.slane %v984, %v991
          %v994 = vunpack.c.l.s4 1934713408
          %v995 = vunpack.c.0.s8 %v994
          %v996 = vlaneseq
          %v997 = vshrl.u32 %v996, 7
          %v998 = vsub.s32 %v995, %v997
          %v999 = vrot.slane %v985, %v998
          %v1000 = vcombine.low %v935, %v951
          %v1001 = vcombine.high %v935, %v951
          %v1003 = vunpack.c.l.s4 1934713408
          %v1004 = vunpack.c.0.s8 %v1003
          %v1005 = vlaneseq
          %v1006 = vshrl.u32 %v1005, 7
          %v1007 = vsub.s32 %v1004, %v1006
          %v1008 = vrot.slane %v1000, %v1007
          %v1010 = vunpack.c.l.s4 1934713408
          %v1011 = vunpack.c.0.s8 %v1010
          %v1012 = vlaneseq
          %v1013 = vshrl.u32 %v1012, 7
          %v1014 = vsub.s32 %v1011, %v1013
          %v1015 = vrot.slane %v1001, %v1014
          %v1016 = vcombine.low %v960, %v976
          %v1017 = vcombine.high %v960, %v976
          %v1019 = vunpack.c.l.s4 1934713408
          %v1020 = vunpack.c.0.s8 %v1019
          %v1021 = vlaneseq
          %v1022 = vshrl.u32 %v1021, 7
          %v1023 = vsub.s32 %v1020, %v1022
          %v1024 = vrot.slane %v1016, %v1023
          %v1026 = vunpack.c.l.s4 1934713408
          %v1027 = vunpack.c.0.s8 %v1026
          %v1028 = vlaneseq
          %v1029 = vshrl.u32 %v1028, 7
          %v1030 = vsub.s32 %v1027, %v1029
          %v1031 = vrot.slane %v1017, %v1030
          %v1032 = vcombine.low %v967, %v983
          %v1033 = vcombine.high %v967, %v983
          %v1035 = vunpack.c.l.s4 1934713408
          %v1036 = vunpack.c.0.s8 %v1035
          %v1037 = vlaneseq
          %v1038 = vshrl.u32 %v1037, 7
          %v1039 = vsub.s32 %v1036, %v1038
          %v1040 = vrot.slane %v1032, %v1039
          %v1042 = vunpack.c.l.s4 1934713408
          %v1043 = vunpack.c.0.s8 %v1042
          %v1044 = vlaneseq
          %v1045 = vshrl.u32 %v1044, 7
          %v1046 = vsub.s32 %v1043, %v1045
          %v1047 = vrot.slane %v1033, %v1046
          %v1048 = vcombine.low %v992, %v1024
          %v1049 = vcombine.high %v992, %v1024
          %v1050 = vcombine.low %v999, %v1031
          %v1051 = vcombine.high %v999, %v1031
          %v1052 = vcombine.low %v1008, %v1040
          %v1053 = vcombine.high %v1008, %v1040
          %v1054 = vcombine.low %v1015, %v1047
          %v1055 = vcombine.high %v1015, %v1047
          %v1056 = vpack.c.bf16 %v1048, %v1048
          %v1057 = vpack.c.bf16 %v1049, %v1049
          %v1058 = vpack.c.bf16 %v1050, %v1050
          %v1059 = vpack.c.bf16 %v1051, %v1051
          %v1060 = vpack.c.bf16 %v1052, %v1052
          %v1061 = vpack.c.bf16 %v1053, %v1053
          %v1062 = vpack.c.bf16 %v1054, %v1054
          %v1063 = vpack.c.bf16 %v1055, %v1055
          %vm1064 = vcmask 27648
          %1065 = vst.msk [vmem:[#allocation2] sm:$0xf] %vm1064, %v1056
          %1066 = vst.msk [vmem:[#allocation2 + $0x4] sm:$0xf] %vm1064, %v1057
          %1067 = vst.msk [vmem:[#allocation2 + $0x8] sm:$0xf] %vm1064, %v1058
          %1068 = vst.msk [vmem:[#allocation2 + $0xc] sm:$0xf] %vm1064, %v1059
          %1069 = vst.msk [vmem:[#allocation2 + $0x10] sm:$0xf] %vm1064, %v1060
          %1070 = vst.msk [vmem:[#allocation2 + $0x14] sm:$0xf] %vm1064, %v1061
          %1071 = vst.msk [vmem:[#allocation2 + $0x18] sm:$0xf] %vm1064, %v1062
          %1072 = vst.msk [vmem:[#allocation2 + $0x1c] sm:$0xf] %vm1064, %v1063
          %1074 = vrot.lane.b32.xlu0 %v757, 124
          %v1075 = vpop.permute.xlu0 %1074
          %1077 = vrot.lane.b32.xlu0 %v757, 120
          %v1078 = vpop.permute.xlu0 %1077
          %1080 = vrot.lane.b32.xlu0 %v757, 116
          %v1081 = vpop.permute.xlu0 %1080
          %1083 = vrot.lane.b32.xlu0 %v757, 112
          %v1084 = vpop.permute.xlu0 %1083
          %1086 = vrot.lane.b32.xlu0 %v757, 108
          %v1087 = vpop.permute.xlu0 %1086
          %1089 = vrot.lane.b32.xlu0 %v757, 104
          %v1090 = vpop.permute.xlu0 %1089
          %1092 = vrot.lane.b32.xlu0 %v757, 100
          %v1093 = vpop.permute.xlu0 %1092
          %v1095 = vcombine.low %v757, %v1078
          %v1096 = vcombine.high %v757, %v1078
          %v1098 = vunpack.c.l.s4 1983009808
          %v1099 = vunpack.c.0.s8 %v1098
          %v1100 = vlaneseq
          %v1101 = vshrl.u32 %v1100, 7
          %v1102 = vsub.s32 %v1099, %v1101
          %v1103 = vrot.slane %v1095, %v1102
          %v1105 = vunpack.c.l.s4 1983009808
          %v1106 = vunpack.c.0.s8 %v1105
          %v1107 = vlaneseq
          %v1108 = vshrl.u32 %v1107, 7
          %v1109 = vsub.s32 %v1106, %v1108
          %v1110 = vrot.slane %v1096, %v1109
          %v1111 = vcombine.low %v1075, %v1081
          %v1112 = vcombine.high %v1075, %v1081
          %v1114 = vunpack.c.l.s4 1983009808
          %v1115 = vunpack.c.0.s8 %v1114
          %v1116 = vlaneseq
          %v1117 = vshrl.u32 %v1116, 7
          %v1118 = vsub.s32 %v1115, %v1117
          %v1119 = vrot.slane %v1111, %v1118
          %v1121 = vunpack.c.l.s4 1983009808
          %v1122 = vunpack.c.0.s8 %v1121
          %v1123 = vlaneseq
          %v1124 = vshrl.u32 %v1123, 7
          %v1125 = vsub.s32 %v1122, %v1124
          %v1126 = vrot.slane %v1112, %v1125
          %v1127 = vcombine.low %v1084, %v1090
          %v1128 = vcombine.high %v1084, %v1090
          %v1130 = vunpack.c.l.s4 1983009808
          %v1131 = vunpack.c.0.s8 %v1130
          %v1132 = vlaneseq
          %v1133 = vshrl.u32 %v1132, 7
          %v1134 = vsub.s32 %v1131, %v1133
          %v1135 = vrot.slane %v1127, %v1134
          %v1137 = vunpack.c.l.s4 1983009808
          %v1138 = vunpack.c.0.s8 %v1137
          %v1139 = vlaneseq
          %v1140 = vshrl.u32 %v1139, 7
          %v1141 = vsub.s32 %v1138, %v1140
          %v1142 = vrot.slane %v1128, %v1141
          %v1143 = vcombine.low %v1087, %v1093
          %v1144 = vcombine.high %v1087, %v1093
          %v1146 = vunpack.c.l.s4 1983009808
          %v1147 = vunpack.c.0.s8 %v1146
          %v1148 = vlaneseq
          %v1149 = vshrl.u32 %v1148, 7
          %v1150 = vsub.s32 %v1147, %v1149
          %v1151 = vrot.slane %v1143, %v1150
          %v1153 = vunpack.c.l.s4 1983009808
          %v1154 = vunpack.c.0.s8 %v1153
          %v1155 = vlaneseq
          %v1156 = vshrl.u32 %v1155, 7
          %v1157 = vsub.s32 %v1154, %v1156
          %v1158 = vrot.slane %v1144, %v1157
          %v1159 = vcombine.low %v1103, %v1119
          %v1160 = vcombine.high %v1103, %v1119
          %v1162 = vunpack.c.l.s4 1934713408
          %v1163 = vunpack.c.0.s8 %v1162
          %v1164 = vlaneseq
          %v1165 = vshrl.u32 %v1164, 7
          %v1166 = vsub.s32 %v1163, %v1165
          %v1167 = vrot.slane %v1159, %v1166
          %v1169 = vunpack.c.l.s4 1934713408
          %v1170 = vunpack.c.0.s8 %v1169
          %v1171 = vlaneseq
          %v1172 = vshrl.u32 %v1171, 7
          %v1173 = vsub.s32 %v1170, %v1172
          %v1174 = vrot.slane %v1160, %v1173
          %v1175 = vcombine.low %v1110, %v1126
          %v1176 = vcombine.high %v1110, %v1126
          %v1178 = vunpack.c.l.s4 1934713408
          %v1179 = vunpack.c.0.s8 %v1178
          %v1180 = vlaneseq
          %v1181 = vshrl.u32 %v1180, 7
          %v1182 = vsub.s32 %v1179, %v1181
          %v1183 = vrot.slane %v1175, %v1182
          %v1185 = vunpack.c.l.s4 1934713408
          %v1186 = vunpack.c.0.s8 %v1185
          %v1187 = vlaneseq
          %v1188 = vshrl.u32 %v1187, 7
          %v1189 = vsub.s32 %v1186, %v1188
          %v1190 = vrot.slane %v1176, %v1189
          %v1191 = vcombine.low %v1135, %v1151
          %v1192 = vcombine.high %v1135, %v1151
          %v1194 = vunpack.c.l.s4 1934713408
          %v1195 = vunpack.c.0.s8 %v1194
          %v1196 = vlaneseq
          %v1197 = vshrl.u32 %v1196, 7
          %v1198 = vsub.s32 %v1195, %v1197
          %v1199 = vrot.slane %v1191, %v1198
          %v1201 = vunpack.c.l.s4 1934713408
          %v1202 = vunpack.c.0.s8 %v1201
          %v1203 = vlaneseq
          %v1204 = vshrl.u32 %v1203, 7
          %v1205 = vsub.s32 %v1202, %v1204
          %v1206 = vrot.slane %v1192, %v1205
          %v1207 = vcombine.low %v1142, %v1158
          %v1208 = vcombine.high %v1142, %v1158
          %v1210 = vunpack.c.l.s4 1934713408
          %v1211 = vunpack.c.0.s8 %v1210
          %v1212 = vlaneseq
          %v1213 = vshrl.u32 %v1212, 7
          %v1214 = vsub.s32 %v1211, %v1213
          %v1215 = vrot.slane %v1207, %v1214
          %v1217 = vunpack.c.l.s4 1934713408
          %v1218 = vunpack.c.0.s8 %v1217
          %v1219 = vlaneseq
          %v1220 = vshrl.u32 %v1219, 7
          %v1221 = vsub.s32 %v1218, %v1220
          %v1222 = vrot.slane %v1208, %v1221
          %v1223 = vcombine.low %v1167, %v1199
          %v1224 = vcombine.high %v1167, %v1199
          %v1225 = vcombine.low %v1174, %v1206
          %v1226 = vcombine.high %v1174, %v1206
          %v1227 = vcombine.low %v1183, %v1215
          %v1228 = vcombine.high %v1183, %v1215
          %v1229 = vcombine.low %v1190, %v1222
          %v1230 = vcombine.high %v1190, %v1222
          %v1231 = vcombine.low %v1223, %v1225
          %v1232 = vcombine.high %v1223, %v1225
          %v1234 = vunpack.c.l.s4 1983009808
          %v1235 = vunpack.c.0.s8 %v1234
          %v1236 = vlaneseq
          %v1237 = vshrl.u32 %v1236, 7
          %v1238 = vsub.s32 %v1235, %v1237
          %v1239 = vrot.slane %v1231, %v1238
          %v1241 = vunpack.c.l.s4 1983009808
          %v1242 = vunpack.c.0.s8 %v1241
          %v1243 = vlaneseq
          %v1244 = vshrl.u32 %v1243, 7
          %v1245 = vsub.s32 %v1242, %v1244
          %v1246 = vrot.slane %v1232, %v1245
          %v1247 = vcombine.low %v1224, %v1226
          %v1248 = vcombine.high %v1224, %v1226
          %v1250 = vunpack.c.l.s4 1983009808
          %v1251 = vunpack.c.0.s8 %v1250
          %v1252 = vlaneseq
          %v1253 = vshrl.u32 %v1252, 7
          %v1254 = vsub.s32 %v1251, %v1253
          %v1255 = vrot.slane %v1247, %v1254
          %v1257 = vunpack.c.l.s4 1983009808
          %v1258 = vunpack.c.0.s8 %v1257
          %v1259 = vlaneseq
          %v1260 = vshrl.u32 %v1259, 7
          %v1261 = vsub.s32 %v1258, %v1260
          %v1262 = vrot.slane %v1248, %v1261
          %v1263 = vcombine.low %v1227, %v1229
          %v1264 = vcombine.high %v1227, %v1229
          %v1266 = vunpack.c.l.s4 1983009808
          %v1267 = vunpack.c.0.s8 %v1266
          %v1268 = vlaneseq
          %v1269 = vshrl.u32 %v1268, 7
          %v1270 = vsub.s32 %v1267, %v1269
          %v1271 = vrot.slane %v1263, %v1270
          %v1273 = vunpack.c.l.s4 1983009808
          %v1274 = vunpack.c.0.s8 %v1273
          %v1275 = vlaneseq
          %v1276 = vshrl.u32 %v1275, 7
          %v1277 = vsub.s32 %v1274, %v1276
          %v1278 = vrot.slane %v1264, %v1277
          %v1279 = vcombine.low %v1228, %v1230
          %v1280 = vcombine.high %v1228, %v1230
          %v1282 = vunpack.c.l.s4 1983009808
          %v1283 = vunpack.c.0.s8 %v1282
          %v1284 = vlaneseq
          %v1285 = vshrl.u32 %v1284, 7
          %v1286 = vsub.s32 %v1283, %v1285
          %v1287 = vrot.slane %v1279, %v1286
          %v1289 = vunpack.c.l.s4 1983009808
          %v1290 = vunpack.c.0.s8 %v1289
          %v1291 = vlaneseq
          %v1292 = vshrl.u32 %v1291, 7
          %v1293 = vsub.s32 %v1290, %v1292
          %v1294 = vrot.slane %v1280, %v1293
          %v1295 = vcombine.low %v1239, %v1255
          %v1296 = vcombine.high %v1239, %v1255
          %v1298 = vunpack.c.l.s4 1934713408
          %v1299 = vunpack.c.0.s8 %v1298
          %v1300 = vlaneseq
          %v1301 = vshrl.u32 %v1300, 7
          %v1302 = vsub.s32 %v1299, %v1301
          %v1303 = vrot.slane %v1295, %v1302
          %v1305 = vunpack.c.l.s4 1934713408
          %v1306 = vunpack.c.0.s8 %v1305
          %v1307 = vlaneseq
          %v1308 = vshrl.u32 %v1307, 7
          %v1309 = vsub.s32 %v1306, %v1308
          %v1310 = vrot.slane %v1296, %v1309
          %v1311 = vcombine.low %v1246, %v1262
          %v1312 = vcombine.high %v1246, %v1262
          %v1314 = vunpack.c.l.s4 1934713408
          %v1315 = vunpack.c.0.s8 %v1314
          %v1316 = vlaneseq
          %v1317 = vshrl.u32 %v1316, 7
          %v1318 = vsub.s32 %v1315, %v1317
          %v1319 = vrot.slane %v1311, %v1318
          %v1321 = vunpack.c.l.s4 1934713408
          %v1322 = vunpack.c.0.s8 %v1321
          %v1323 = vlaneseq
          %v1324 = vshrl.u32 %v1323, 7
          %v1325 = vsub.s32 %v1322, %v1324
          %v1326 = vrot.slane %v1312, %v1325
          %v1327 = vcombine.low %v1271, %v1287
          %v1328 = vcombine.high %v1271, %v1287
          %v1330 = vunpack.c.l.s4 1934713408
          %v1331 = vunpack.c.0.s8 %v1330
          %v1332 = vlaneseq
          %v1333 = vshrl.u32 %v1332, 7
          %v1334 = vsub.s32 %v1331, %v1333
          %v1335 = vrot.slane %v1327, %v1334
          %v1337 = vunpack.c.l.s4 1934713408
          %v1338 = vunpack.c.0.s8 %v1337
          %v1339 = vlaneseq
          %v1340 = vshrl.u32 %v1339, 7
          %v1341 = vsub.s32 %v1338, %v1340
          %v1342 = vrot.slane %v1328, %v1341
          %v1343 = vcombine.low %v1278, %v1294
          %v1344 = vcombine.high %v1278, %v1294
          %v1346 = vunpack.c.l.s4 1934713408
          %v1347 = vunpack.c.0.s8 %v1346
          %v1348 = vlaneseq
          %v1349 = vshrl.u32 %v1348, 7
          %v1350 = vsub.s32 %v1347, %v1349
          %v1351 = vrot.slane %v1343, %v1350
          %v1353 = vunpack.c.l.s4 1934713408
          %v1354 = vunpack.c.0.s8 %v1353
          %v1355 = vlaneseq
          %v1356 = vshrl.u32 %v1355, 7
          %v1357 = vsub.s32 %v1354, %v1356
          %v1358 = vrot.slane %v1344, %v1357
          %v1359 = vcombine.low %v1303, %v1335
          %v1360 = vcombine.high %v1303, %v1335
          %v1361 = vcombine.low %v1310, %v1342
          %v1362 = vcombine.high %v1310, %v1342
          %v1363 = vcombine.low %v1319, %v1351
          %v1364 = vcombine.high %v1319, %v1351
          %v1365 = vcombine.low %v1326, %v1358
          %v1366 = vcombine.high %v1326, %v1358
          %v1367 = vpack.c.bf16 %v1359, %v1359
          %v1368 = vpack.c.bf16 %v1360, %v1360
          %v1369 = vpack.c.bf16 %v1361, %v1361
          %v1370 = vpack.c.bf16 %v1362, %v1362
          %v1371 = vpack.c.bf16 %v1363, %v1363
          %v1372 = vpack.c.bf16 %v1364, %v1364
          %v1373 = vpack.c.bf16 %v1365, %v1365
          %v1374 = vpack.c.bf16 %v1366, %v1366
          %1375 = vst.msk [vmem:[#allocation3] sm:$0xf] %vm1064, %v1367
          %1376 = vst.msk [vmem:[#allocation3 + $0x4] sm:$0xf] %vm1064, %v1368
          %1377 = vst.msk [vmem:[#allocation3 + $0x8] sm:$0xf] %vm1064, %v1369
          %1378 = vst.msk [vmem:[#allocation3 + $0xc] sm:$0xf] %vm1064, %v1370
          %1379 = vst.msk [vmem:[#allocation3 + $0x10] sm:$0xf] %vm1064, %v1371
          %1380 = vst.msk [vmem:[#allocation3 + $0x14] sm:$0xf] %vm1064, %v1372
          %1381 = vst.msk [vmem:[#allocation3 + $0x18] sm:$0xf] %vm1064, %v1373
          %1382 = vst.msk [vmem:[#allocation3 + $0x1c] sm:$0xf] %vm1064, %v1374
        $region112: #{tpu_custom_call.1} parent=87 // pred_fallthru
          _
        %s1383 = smul.u32 %s39, 8
        %s1384 = scalar_lea.vmem %s624, %s1383
        %v1385 = vld [vmem:[%s1384] sm:$0xff]
        %v1386 = vpack.c.bf16 %v1385, %v1385
        %v1387 = vld [vmem:[%s1] sm:$0xf]
        %v1388 = vld [vmem:[%s1 + $0x4] sm:$0xf]
        %v1389 = vld [vmem:[%s1 + $0x8] sm:$0xf]
        %v1390 = vld [vmem:[%s1 + $0xc] sm:$0xf]
        %v1391 = vld [vmem:[%s2] sm:$0x1]
        %v1393 = vlaneseq
        %v1394 = vshrl.u32 %v1393, 7
        %v1395 = vsub.s32 0, %v1394
        %v1396 = vrot.slane %v1391, %v1395
        %v1402 = vunpack.c.l.b16 %v1387
        %v1403 = vunpack.c.l.b16 %v1388
        %v1404 = vunpack.c.l.b16 %v1389
        %v1405 = vunpack.c.l.b16 %v1390
        %v1406 = vpack.c.b16 %v1403, %v1402
        %v1407 = vpack.c.b16 %v1405, %v1404
        %vm1410 = vcmask 261120
        %v1412 = vsel %vm1410, %v1386, 0
        %1414 = vmatprep.subr.bf16.mxu0 0
        %1415 = vmatpush1.bf16.msra.mxu0 %v1406
        %1416 = vmatprep.subr.bf16.mxu0 0
        %1417 = vmatpush1.bf16.msra.mxu0 %v1407
        %1418 = vmatprep.subr.bf16.mxu0 0
        %1419 = vmatpush1.bf16.msra.mxu0 0
        %1420 = vmatprep.subr.bf16.mxu0 0
        %1421 = vmatpush1.bf16.msra.mxu0 0
        %1422 = vmatprep.subr.bf16.mxu0 0
        %1423 = vmatpush1.bf16.msra.mxu0 0
        %1424 = vmatprep.subr.bf16.mxu0 0
        %1425 = vmatpush1.bf16.msra.mxu0 0
        %1426 = vmatprep.subr.bf16.mxu0 0
        %1427 = vmatpush1.bf16.msra.mxu0 0
        %1428 = vmatprep.subr.bf16.mxu0 0
        %1429 = vmatpush1.bf16.msra.mxu0 0
        %1430 = vmatprep.subr.bf16.mxu0 0
        %1431 = vmatpush1.bf16.msra.mxu0 0
        %1432 = vmatprep.subr.bf16.mxu0 0
        %1433 = vmatpush1.bf16.msra.mxu0 0
        %1434 = vmatprep.subr.bf16.mxu0 0
        %1435 = vmatpush1.bf16.msra.mxu0 0
        %1436 = vmatprep.subr.bf16.mxu0 0
        %1437 = vmatpush1.bf16.msra.mxu0 0
        %1438 = vmatprep.subr.bf16.mxu0 0
        %1439 = vmatpush1.bf16.msra.mxu0 0
        %1440 = vmatprep.subr.bf16.mxu0 0
        %1441 = vmatpush1.bf16.msra.mxu0 0
        %1442 = vmatprep.subr.bf16.mxu0 0
        %1443 = vmatpush1.bf16.msra.mxu0 0
        %1444 = vmatprep.subr.bf16.mxu0 0
        %1445 = vmatpush1.bf16.msra.mxu0 0
        %1446 = vmatprep.mubr.bf16.mxu0 0
        %1447 = vmatmul.mubr.bf16.gmra.mrb[0].mxu0 %v1412
        %v1448 = vpop.f32.mrb[0].mxu0
        %v1449 = vadd.f32 %v1396, %v1448
        %v1450 = vpop.f32.mrb[0].mxu0
        %v1451 = vpop.f32.mrb[0].mxu0
        %v1452 = vpop.f32.mrb[0].mxu0
        %1453 = vdwg.mxu0
        %v1454 = vmul.f32 %v1449, 0.5
        %v1455 = vpack.c.bf16 %v1454, %v1454
        %1457 = vrot.lane.b32.xlu0 %v1455, 124
        %v1458 = vpop.permute.xlu0 %1457
        %1460 = vrot.lane.b32.xlu0 %v1455, 120
        %v1461 = vpop.permute.xlu0 %1460
        %1463 = vrot.lane.b32.xlu0 %v1455, 116
        %v1464 = vpop.permute.xlu0 %1463
        %1466 = vrot.lane.b32.xlu0 %v1455, 112
        %v1467 = vpop.permute.xlu0 %1466
        %1469 = vrot.lane.b32.xlu0 %v1455, 108
        %v1470 = vpop.permute.xlu0 %1469
        %1472 = vrot.lane.b32.xlu0 %v1455, 104
        %v1473 = vpop.permute.xlu0 %1472
        %1475 = vrot.lane.b32.xlu0 %v1455, 100
        %v1476 = vpop.permute.xlu0 %1475
        %v1478 = vcombine.low %v1455, %v1467
        %v1480 = vunpack.c.l.s4 1983009808
        %v1481 = vunpack.c.0.s8 %v1480
        %v1482 = vlaneseq
        %v1483 = vshrl.u32 %v1482, 7
        %v1484 = vsub.s32 %v1481, %v1483
        %v1485 = vrot.slane %v1478, %v1484
        %v1486 = vcombine.low %v1461, %v1473
        %v1488 = vunpack.c.l.s4 1983009808
        %v1489 = vunpack.c.0.s8 %v1488
        %v1490 = vlaneseq
        %v1491 = vshrl.u32 %v1490, 7
        %v1492 = vsub.s32 %v1489, %v1491
        %v1493 = vrot.slane %v1486, %v1492
        %v1494 = vcombine.low %v1485, %v1493
        %v1495 = vcombine.high %v1485, %v1493
        %v1497 = vunpack.c.l.s4 1934713408
        %v1498 = vunpack.c.0.s8 %v1497
        %v1499 = vlaneseq
        %v1500 = vshrl.u32 %v1499, 7
        %v1501 = vsub.s32 %v1498, %v1500
        %v1502 = vrot.slane %v1494, %v1501
        %v1504 = vunpack.c.l.s4 1934713408
        %v1505 = vunpack.c.0.s8 %v1504
        %v1506 = vlaneseq
        %v1507 = vshrl.u32 %v1506, 7
        %v1508 = vsub.s32 %v1505, %v1507
        %v1509 = vrot.slane %v1495, %v1508
        %v1510 = vcombine.high %v1502, 0
        %v1511 = vcombine.high %v1509, 0
        %v1512 = vcombine.low %v1458, %v1470
        %v1514 = vunpack.c.l.s4 1983009808
        %v1515 = vunpack.c.0.s8 %v1514
        %v1516 = vlaneseq
        %v1517 = vshrl.u32 %v1516, 7
        %v1518 = vsub.s32 %v1515, %v1517
        %v1519 = vrot.slane %v1512, %v1518
        %v1520 = vcombine.low %v1464, %v1476
        %v1522 = vunpack.c.l.s4 1983009808
        %v1523 = vunpack.c.0.s8 %v1522
        %v1524 = vlaneseq
        %v1525 = vshrl.u32 %v1524, 7
        %v1526 = vsub.s32 %v1523, %v1525
        %v1527 = vrot.slane %v1520, %v1526
        %v1528 = vcombine.low %v1519, %v1527
        %v1529 = vcombine.high %v1519, %v1527
        %v1531 = vunpack.c.l.s4 1934713408
        %v1532 = vunpack.c.0.s8 %v1531
        %v1533 = vlaneseq
        %v1534 = vshrl.u32 %v1533, 7
        %v1535 = vsub.s32 %v1532, %v1534
        %v1536 = vrot.slane %v1528, %v1535
        %v1538 = vunpack.c.l.s4 1934713408
        %v1539 = vunpack.c.0.s8 %v1538
        %v1540 = vlaneseq
        %v1541 = vshrl.u32 %v1540, 7
        %v1542 = vsub.s32 %v1539, %v1541
        %v1543 = vrot.slane %v1529, %v1542
        %v1544 = vcombine.high %v1536, 0
        %v1545 = vcombine.high %v1543, 0
        %v1548 = vpack.i.b16 %v1536, %v1502
        %v1550 = vshrl.u32 %v1502, 16
        %v1551 = vshrl.u32 %v1536, 16
        %v1552 = vpack.i.b16 %v1551, %v1550
        %v1556 = vpack.i.b16 %v1544, %v1510
        %v1558 = vshrl.u32 %v1510, 16
        %v1559 = vshrl.u32 %v1544, 16
        %v1560 = vpack.i.b16 %v1559, %v1558
        %v1564 = vpack.i.b16 %v1543, %v1509
        %v1566 = vshrl.u32 %v1509, 16
        %v1567 = vshrl.u32 %v1543, 16
        %v1568 = vpack.i.b16 %v1567, %v1566
        %v1572 = vpack.i.b16 %v1545, %v1511
        %v1574 = vshrl.u32 %v1511, 16
        %v1575 = vshrl.u32 %v1545, 16
        %v1576 = vpack.i.b16 %v1575, %v1574
        %v1578 = vcombine.low %v1548, %v1564
        %v1580 = vunpack.c.l.s4 1983009808
        %v1581 = vunpack.c.0.s8 %v1580
        %v1582 = vlaneseq
        %v1583 = vshrl.u32 %v1582, 7
        %v1584 = vsub.s32 %v1581, %v1583
        %v1585 = vrot.slane %v1578, %v1584
        %v1586 = vcombine.low %v1556, %v1572
        %v1588 = vunpack.c.l.s4 1983009808
        %v1589 = vunpack.c.0.s8 %v1588
        %v1590 = vlaneseq
        %v1591 = vshrl.u32 %v1590, 7
        %v1592 = vsub.s32 %v1589, %v1591
        %v1593 = vrot.slane %v1586, %v1592
        %v1594 = vcombine.low %v1585, %v1593
        %v1595 = vcombine.high %v1585, %v1593
        %v1597 = vunpack.c.l.s4 1934713408
        %v1598 = vunpack.c.0.s8 %v1597
        %v1599 = vlaneseq
        %v1600 = vshrl.u32 %v1599, 7
        %v1601 = vsub.s32 %v1598, %v1600
        %v1602 = vrot.slane %v1594, %v1601
        %v1604 = vunpack.c.l.s4 1934713408
        %v1605 = vunpack.c.0.s8 %v1604
        %v1606 = vlaneseq
        %v1607 = vshrl.u32 %v1606, 7
        %v1608 = vsub.s32 %v1605, %v1607
        %v1609 = vrot.slane %v1595, %v1608
        %v1610 = vcombine.high %v1602, 0
        %v1611 = vcombine.high %v1609, 0
        %v1612 = vcombine.low %v1552, %v1568
        %v1614 = vunpack.c.l.s4 1983009808
        %v1615 = vunpack.c.0.s8 %v1614
        %v1616 = vlaneseq
        %v1617 = vshrl.u32 %v1616, 7
        %v1618 = vsub.s32 %v1615, %v1617
        %v1619 = vrot.slane %v1612, %v1618
        %v1620 = vcombine.low %v1560, %v1576
        %v1622 = vunpack.c.l.s4 1983009808
        %v1623 = vunpack.c.0.s8 %v1622
        %v1624 = vlaneseq
        %v1625 = vshrl.u32 %v1624, 7
        %v1626 = vsub.s32 %v1623, %v1625
        %v1627 = vrot.slane %v1620, %v1626
        %v1628 = vcombine.low %v1619, %v1627
        %v1629 = vcombine.high %v1619, %v1627
        %v1631 = vunpack.c.l.s4 1934713408
        %v1632 = vunpack.c.0.s8 %v1631
        %v1633 = vlaneseq
        %v1634 = vshrl.u32 %v1633, 7
        %v1635 = vsub.s32 %v1632, %v1634
        %v1636 = vrot.slane %v1628, %v1635
        %v1638 = vunpack.c.l.s4 1934713408
        %v1639 = vunpack.c.0.s8 %v1638
        %v1640 = vlaneseq
        %v1641 = vshrl.u32 %v1640, 7
        %v1642 = vsub.s32 %v1639, %v1641
        %v1643 = vrot.slane %v1629, %v1642
        %v1644 = vcombine.high %v1636, 0
        %v1645 = vcombine.high %v1643, 0
        %v1648 = vpack.i.b16 %v1636, %v1602
        %v1649 = vshrl.u32 %v1602, 16
        %v1650 = vshrl.u32 %v1636, 16
        %v1651 = vpack.i.b16 %v1650, %v1649
        %v1654 = vpack.i.b16 %v1644, %v1610
        %v1655 = vshrl.u32 %v1610, 16
        %v1656 = vshrl.u32 %v1644, 16
        %v1657 = vpack.i.b16 %v1656, %v1655
        %v1660 = vpack.i.b16 %v1643, %v1609
        %v1661 = vshrl.u32 %v1609, 16
        %v1662 = vshrl.u32 %v1643, 16
        %v1663 = vpack.i.b16 %v1662, %v1661
        %v1666 = vpack.i.b16 %v1645, %v1611
        %v1667 = vshrl.u32 %v1611, 16
        %v1668 = vshrl.u32 %v1645, 16
        %v1669 = vpack.i.b16 %v1668, %v1667
        %v1670 = vld [vmem:[#allocation2] sm:$0xf]
        %v1671 = vld [vmem:[#allocation2 + $0x4] sm:$0xf]
        %v1672 = vld [vmem:[#allocation2 + $0x8] sm:$0xf]
        %v1673 = vld [vmem:[#allocation2 + $0xc] sm:$0xf]
        %v1674 = vld [vmem:[#allocation2 + $0x10] sm:$0xf]
        %v1675 = vld [vmem:[#allocation2 + $0x14] sm:$0xf]
        %v1676 = vld [vmem:[#allocation2 + $0x18] sm:$0xf]
        %v1677 = vld [vmem:[#allocation2 + $0x1c] sm:$0xf]
        %vm1678 = vcmask 31744
        %v1680 = vsel %vm1678, %v1648, 0
        %v1683 = vsel %vm1678, %v1670, 0
        %1685 = vmatprep.subr.bf16.mxu0 0
        %1686 = vmatpush1.bf16.xpose.msra.mxu0 %v1683
        %1687 = vmatprep.subr.bf16.mxu0 0
        %1688 = vmatpush1.bf16.xpose.msra.mxu0 0
        %1689 = vmatprep.subr.bf16.mxu0 0
        %1690 = vmatpush1.bf16.xpose.msra.mxu0 0
        %1691 = vmatprep.subr.bf16.mxu0 0
        %1692 = vmatpush1.bf16.xpose.msra.mxu0 0
        %1693 = vmatprep.subr.bf16.mxu0 0
        %1694 = vmatpush1.bf16.xpose.msra.mxu0 0
        %1695 = vmatprep.subr.bf16.mxu0 0
        %1696 = vmatpush1.bf16.xpose.msra.mxu0 0
        %1697 = vmatprep.subr.bf16.mxu0 0
        %1698 = vmatpush1.bf16.xpose.msra.mxu0 0
        %1699 = vmatprep.subr.bf16.mxu0 0
        %1700 = vmatpush1.bf16.xpose.msra.mxu0 0
        %1701 = vmatprep.subr.bf16.mxu0 0
        %1702 = vmatpush1.bf16.xpose.msra.mxu0 0
        %1703 = vmatprep.subr.bf16.mxu0 0
        %1704 = vmatpush1.bf16.xpose.msra.mxu0 0
        %1705 = vmatprep.subr.bf16.mxu0 0
        %1706 = vmatpush1.bf16.xpose.msra.mxu0 0
        %1707 = vmatprep.subr.bf16.mxu0 0
        %1708 = vmatpush1.bf16.xpose.msra.mxu0 0
        %1709 = vmatprep.subr.bf16.mxu0 0
        %1710 = vmatpush1.bf16.xpose.msra.mxu0 0
        %1711 = vmatprep.subr.bf16.mxu0 0
        %1712 = vmatpush1.bf16.xpose.msra.mxu0 0
        %1713 = vmatprep.subr.bf16.mxu0 0
        %1714 = vmatpush1.bf16.xpose.msra.mxu0 0
        %1715 = vmatprep.subr.bf16.mxu0 0
        %1716 = vmatpush1.bf16.xpose.msra.mxu0 0
        %1717 = vmatprep.mubr.bf16.mxu0 0
        %1718 = vmatmul.mubr.bf16.gmra.mrb[0].mxu0 %v1680
        %v1719 = vpop.f32.mrb[0].mxu0
        %v1720 = vadd.f32 0.0, %v1719
        %v1721 = vpop.f32.mrb[0].mxu0
        %v1722 = vpop.f32.mrb[0].mxu0
        %v1723 = vpop.f32.mrb[0].mxu0
        %1724 = vdwg.mxu0
        %v1726 = vsel %vm1678, %v1651, 0
        %v1729 = vsel %vm1678, %v1671, 0
        %1731 = vmatprep.subr.bf16.mxu0 0
        %1732 = vmatpush1.bf16.xpose.msra.mxu0 %v1729
        %1733 = vmatprep.subr.bf16.mxu0 0
        %1734 = vmatpush1.bf16.xpose.msra.mxu0 0
        %1735 = vmatprep.subr.bf16.mxu0 0
        %1736 = vmatpush1.bf16.xpose.msra.mxu0 0
        %1737 = vmatprep.subr.bf16.mxu0 0
        %1738 = vmatpush1.bf16.xpose.msra.mxu0 0
        %1739 = vmatprep.subr.bf16.mxu0 0
        %1740 = vmatpush1.bf16.xpose.msra.mxu0 0
        %1741 = vmatprep.subr.bf16.mxu0 0
        %1742 = vmatpush1.bf16.xpose.msra.mxu0 0
        %1743 = vmatprep.subr.bf16.mxu0 0
        %1744 = vmatpush1.bf16.xpose.msra.mxu0 0
        %1745 = vmatprep.subr.bf16.mxu0 0
        %1746 = vmatpush1.bf16.xpose.msra.mxu0 0
        %1747 = vmatprep.subr.bf16.mxu0 0
        %1748 = vmatpush1.bf16.xpose.msra.mxu0 0
        %1749 = vmatprep.subr.bf16.mxu0 0
        %1750 = vmatpush1.bf16.xpose.msra.mxu0 0
        %1751 = vmatprep.subr.bf16.mxu0 0
        %1752 = vmatpush1.bf16.xpose.msra.mxu0 0
        %1753 = vmatprep.subr.bf16.mxu0 0
        %1754 = vmatpush1.bf16.xpose.msra.mxu0 0
        %1755 = vmatprep.subr.bf16.mxu0 0
        %1756 = vmatpush1.bf16.xpose.msra.mxu0 0
        %1757 = vmatprep.subr.bf16.mxu0 0
        %1758 = vmatpush1.bf16.xpose.msra.mxu0 0
        %1759 = vmatprep.subr.bf16.mxu0 0
        %1760 = vmatpush1.bf16.xpose.msra.mxu0 0
        %1761 = vmatprep.subr.bf16.mxu0 0
        %1762 = vmatpush1.bf16.xpose.msra.mxu0 0
        %1763 = vmatprep.mubr.bf16.mxu0 0
        %1764 = vmatmul.mubr.bf16.gmra.mrb[0].mxu0 %v1726
        %v1765 = vpop.f32.mrb[0].mxu0
        %v1766 = vadd.f32 0.0, %v1765
        %v1767 = vpop.f32.mrb[0].mxu0
        %v1768 = vpop.f32.mrb[0].mxu0
        %v1769 = vpop.f32.mrb[0].mxu0
        %1770 = vdwg.mxu0
        %v1772 = vsel %vm1678, %v1654, 0
        %v1775 = vsel %vm1678, %v1672, 0
        %1777 = vmatprep.subr.bf16.mxu0 0
        %1778 = vmatpush1.bf16.xpose.msra.mxu0 %v1775
        %1779 = vmatprep.subr.bf16.mxu0 0
        %1780 = vmatpush1.bf16.xpose.msra.mxu0 0
        %1781 = vmatprep.subr.bf16.mxu0 0
        %1782 = vmatpush1.bf16.xpose.msra.mxu0 0
        %1783 = vmatprep.subr.bf16.mxu0 0
        %1784 = vmatpush1.bf16.xpose.msra.mxu0 0
        %1785 = vmatprep.subr.bf16.mxu0 0
        %1786 = vmatpush1.bf16.xpose.msra.mxu0 0
        %1787 = vmatprep.subr.bf16.mxu0 0
        %1788 = vmatpush1.bf16.xpose.msra.mxu0 0
        %1789 = vmatprep.subr.bf16.mxu0 0
        %1790 = vmatpush1.bf16.xpose.msra.mxu0 0
        %1791 = vmatprep.subr.bf16.mxu0 0
        %1792 = vmatpush1.bf16.xpose.msra.mxu0 0
        %1793 = vmatprep.subr.bf16.mxu0 0
        %1794 = vmatpush1.bf16.xpose.msra.mxu0 0
        %1795 = vmatprep.subr.bf16.mxu0 0
        %1796 = vmatpush1.bf16.xpose.msra.mxu0 0
        %1797 = vmatprep.subr.bf16.mxu0 0
        %1798 = vmatpush1.bf16.xpose.msra.mxu0 0
        %1799 = vmatprep.subr.bf16.mxu0 0
        %1800 = vmatpush1.bf16.xpose.msra.mxu0 0
        %1801 = vmatprep.subr.bf16.mxu0 0
        %1802 = vmatpush1.bf16.xpose.msra.mxu0 0
        %1803 = vmatprep.subr.bf16.mxu0 0
        %1804 = vmatpush1.bf16.xpose.msra.mxu0 0
        %1805 = vmatprep.subr.bf16.mxu0 0
        %1806 = vmatpush1.bf16.xpose.msra.mxu0 0
        %1807 = vmatprep.subr.bf16.mxu0 0
        %1808 = vmatpush1.bf16.xpose.msra.mxu0 0
        %1809 = vmatprep.mubr.bf16.mxu0 0
        %1810 = vmatmul.mubr.bf16.gmra.mrb[0].mxu0 %v1772
        %v1811 = vpop.f32.mrb[0].mxu0
        %v1812 = vadd.f32 0.0, %v1811
        %v1813 = vpop.f32.mrb[0].mxu0
        %v1814 = vpop.f32.mrb[0].mxu0
        %v1815 = vpop.f32.mrb[0].mxu0
        %1816 = vdwg.mxu0
        %v1818 = vsel %vm1678, %v1657, 0
        %v1821 = vsel %vm1678, %v1673, 0
        %1823 = vmatprep.subr.bf16.mxu0 0
        %1824 = vmatpush1.bf16.xpose.msra.mxu0 %v1821
        %1825 = vmatprep.subr.bf16.mxu0 0
        %1826 = vmatpush1.bf16.xpose.msra.mxu0 0
        %1827 = vmatprep.subr.bf16.mxu0 0
        %1828 = vmatpush1.bf16.xpose.msra.mxu0 0
        %1829 = vmatprep.subr.bf16.mxu0 0
        %1830 = vmatpush1.bf16.xpose.msra.mxu0 0
        %1831 = vmatprep.subr.bf16.mxu0 0
        %1832 = vmatpush1.bf16.xpose.msra.mxu0 0
        %1833 = vmatprep.subr.bf16.mxu0 0
        %1834 = vmatpush1.bf16.xpose.msra.mxu0 0
        %1835 = vmatprep.subr.bf16.mxu0 0
        %1836 = vmatpush1.bf16.xpose.msra.mxu0 0
        %1837 = vmatprep.subr.bf16.mxu0 0
        %1838 = vmatpush1.bf16.xpose.msra.mxu0 0
        %1839 = vmatprep.subr.bf16.mxu0 0
        %1840 = vmatpush1.bf16.xpose.msra.mxu0 0
        %1841 = vmatprep.subr.bf16.mxu0 0
        %1842 = vmatpush1.bf16.xpose.msra.mxu0 0
        %1843 = vmatprep.subr.bf16.mxu0 0
        %1844 = vmatpush1.bf16.xpose.msra.mxu0 0
        %1845 = vmatprep.subr.bf16.mxu0 0
        %1846 = vmatpush1.bf16.xpose.msra.mxu0 0
        %1847 = vmatprep.subr.bf16.mxu0 0
        %1848 = vmatpush1.bf16.xpose.msra.mxu0 0
        %1849 = vmatprep.subr.bf16.mxu0 0
        %1850 = vmatpush1.bf16.xpose.msra.mxu0 0
        %1851 = vmatprep.subr.bf16.mxu0 0
        %1852 = vmatpush1.bf16.xpose.msra.mxu0 0
        %1853 = vmatprep.subr.bf16.mxu0 0
        %1854 = vmatpush1.bf16.xpose.msra.mxu0 0
        %1855 = vmatprep.mubr.bf16.mxu0 0
        %1856 = vmatmul.mubr.bf16.gmra.mrb[0].mxu0 %v1818
        %v1857 = vpop.f32.mrb[0].mxu0
        %v1858 = vadd.f32 0.0, %v1857
        %v1859 = vpop.f32.mrb[0].mxu0
        %v1860 = vpop.f32.mrb[0].mxu0
        %v1861 = vpop.f32.mrb[0].mxu0
        %1862 = vdwg.mxu0
        %v1864 = vsel %vm1678, %v1660, 0
        %v1867 = vsel %vm1678, %v1674, 0
        %1869 = vmatprep.subr.bf16.mxu0 0
        %1870 = vmatpush1.bf16.xpose.msra.mxu0 %v1867
        %1871 = vmatprep.subr.bf16.mxu0 0
        %1872 = vmatpush1.bf16.xpose.msra.mxu0 0
        %1873 = vmatprep.subr.bf16.mxu0 0
        %1874 = vmatpush1.bf16.xpose.msra.mxu0 0
        %1875 = vmatprep.subr.bf16.mxu0 0
        %1876 = vmatpush1.bf16.xpose.msra.mxu0 0
        %1877 = vmatprep.subr.bf16.mxu0 0
        %1878 = vmatpush1.bf16.xpose.msra.mxu0 0
        %1879 = vmatprep.subr.bf16.mxu0 0
        %1880 = vmatpush1.bf16.xpose.msra.mxu0 0
        %1881 = vmatprep.subr.bf16.mxu0 0
        %1882 = vmatpush1.bf16.xpose.msra.mxu0 0
        %1883 = vmatprep.subr.bf16.mxu0 0
        %1884 = vmatpush1.bf16.xpose.msra.mxu0 0
        %1885 = vmatprep.subr.bf16.mxu0 0
        %1886 = vmatpush1.bf16.xpose.msra.mxu0 0
        %1887 = vmatprep.subr.bf16.mxu0 0
        %1888 = vmatpush1.bf16.xpose.msra.mxu0 0
        %1889 = vmatprep.subr.bf16.mxu0 0
        %1890 = vmatpush1.bf16.xpose.msra.mxu0 0
        %1891 = vmatprep.subr.bf16.mxu0 0
        %1892 = vmatpush1.bf16.xpose.msra.mxu0 0
        %1893 = vmatprep.subr.bf16.mxu0 0
        %1894 = vmatpush1.bf16.xpose.msra.mxu0 0
        %1895 = vmatprep.subr.bf16.mxu0 0
        %1896 = vmatpush1.bf16.xpose.msra.mxu0 0
        %1897 = vmatprep.subr.bf16.mxu0 0
        %1898 = vmatpush1.bf16.xpose.msra.mxu0 0
        %1899 = vmatprep.subr.bf16.mxu0 0
        %1900 = vmatpush1.bf16.xpose.msra.mxu0 0
        %1901 = vmatprep.mubr.bf16.mxu0 0
        %1902 = vmatmul.mubr.bf16.gmra.mrb[0].mxu0 %v1864
        %v1903 = vpop.f32.mrb[0].mxu0
        %v1904 = vadd.f32 0.0, %v1903
        %v1905 = vpop.f32.mrb[0].mxu0
        %v1906 = vpop.f32.mrb[0].mxu0
        %v1907 = vpop.f32.mrb[0].mxu0
        %1908 = vdwg.mxu0
        %v1910 = vsel %vm1678, %v1663, 0
        %v1913 = vsel %vm1678, %v1675, 0
        %1915 = vmatprep.subr.bf16.mxu0 0
        %1916 = vmatpush1.bf16.xpose.msra.mxu0 %v1913
        %1917 = vmatprep.subr.bf16.mxu0 0
        %1918 = vmatpush1.bf16.xpose.msra.mxu0 0
        %1919 = vmatprep.subr.bf16.mxu0 0
        %1920 = vmatpush1.bf16.xpose.msra.mxu0 0
        %1921 = vmatprep.subr.bf16.mxu0 0
        %1922 = vmatpush1.bf16.xpose.msra.mxu0 0
        %1923 = vmatprep.subr.bf16.mxu0 0
        %1924 = vmatpush1.bf16.xpose.msra.mxu0 0
        %1925 = vmatprep.subr.bf16.mxu0 0
        %1926 = vmatpush1.bf16.xpose.msra.mxu0 0
        %1927 = vmatprep.subr.bf16.mxu0 0
        %1928 = vmatpush1.bf16.xpose.msra.mxu0 0
        %1929 = vmatprep.subr.bf16.mxu0 0
        %1930 = vmatpush1.bf16.xpose.msra.mxu0 0
        %1931 = vmatprep.subr.bf16.mxu0 0
        %1932 = vmatpush1.bf16.xpose.msra.mxu0 0
        %1933 = vmatprep.subr.bf16.mxu0 0
        %1934 = vmatpush1.bf16.xpose.msra.mxu0 0
        %1935 = vmatprep.subr.bf16.mxu0 0
        %1936 = vmatpush1.bf16.xpose.msra.mxu0 0
        %1937 = vmatprep.subr.bf16.mxu0 0
        %1938 = vmatpush1.bf16.xpose.msra.mxu0 0
        %1939 = vmatprep.subr.bf16.mxu0 0
        %1940 = vmatpush1.bf16.xpose.msra.mxu0 0
        %1941 = vmatprep.subr.bf16.mxu0 0
        %1942 = vmatpush1.bf16.xpose.msra.mxu0 0
        %1943 = vmatprep.subr.bf16.mxu0 0
        %1944 = vmatpush1.bf16.xpose.msra.mxu0 0
        %1945 = vmatprep.subr.bf16.mxu0 0
        %1946 = vmatpush1.bf16.xpose.msra.mxu0 0
        %1947 = vmatprep.mubr.bf16.mxu0 0
        %1948 = vmatmul.mubr.bf16.gmra.mrb[0].mxu0 %v1910
        %v1949 = vpop.f32.mrb[0].mxu0
        %v1950 = vadd.f32 0.0, %v1949
        %v1951 = vpop.f32.mrb[0].mxu0
        %v1952 = vpop.f32.mrb[0].mxu0
        %v1953 = vpop.f32.mrb[0].mxu0
        %1954 = vdwg.mxu0
        %v1956 = vsel %vm1678, %v1666, 0
        %v1959 = vsel %vm1678, %v1676, 0
        %1961 = vmatprep.subr.bf16.mxu0 0
        %1962 = vmatpush1.bf16.xpose.msra.mxu0 %v1959
        %1963 = vmatprep.subr.bf16.mxu0 0
        %1964 = vmatpush1.bf16.xpose.msra.mxu0 0
        %1965 = vmatprep.subr.bf16.mxu0 0
        %1966 = vmatpush1.bf16.xpose.msra.mxu0 0
        %1967 = vmatprep.subr.bf16.mxu0 0
        %1968 = vmatpush1.bf16.xpose.msra.mxu0 0
        %1969 = vmatprep.subr.bf16.mxu0 0
        %1970 = vmatpush1.bf16.xpose.msra.mxu0 0
        %1971 = vmatprep.subr.bf16.mxu0 0
        %1972 = vmatpush1.bf16.xpose.msra.mxu0 0
        %1973 = vmatprep.subr.bf16.mxu0 0
        %1974 = vmatpush1.bf16.xpose.msra.mxu0 0
        %1975 = vmatprep.subr.bf16.mxu0 0
        %1976 = vmatpush1.bf16.xpose.msra.mxu0 0
        %1977 = vmatprep.subr.bf16.mxu0 0
        %1978 = vmatpush1.bf16.xpose.msra.mxu0 0
        %1979 = vmatprep.subr.bf16.mxu0 0
        %1980 = vmatpush1.bf16.xpose.msra.mxu0 0
        %1981 = vmatprep.subr.bf16.mxu0 0
        %1982 = vmatpush1.bf16.xpose.msra.mxu0 0
        %1983 = vmatprep.subr.bf16.mxu0 0
        %1984 = vmatpush1.bf16.xpose.msra.mxu0 0
        %1985 = vmatprep.subr.bf16.mxu0 0
        %1986 = vmatpush1.bf16.xpose.msra.mxu0 0
        %1987 = vmatprep.subr.bf16.mxu0 0
        %1988 = vmatpush1.bf16.xpose.msra.mxu0 0
        %1989 = vmatprep.subr.bf16.mxu0 0
        %1990 = vmatpush1.bf16.xpose.msra.mxu0 0
        %1991 = vmatprep.subr.bf16.mxu0 0
        %1992 = vmatpush1.bf16.xpose.msra.mxu0 0
        %1993 = vmatprep.mubr.bf16.mxu0 0
        %1994 = vmatmul.mubr.bf16.gmra.mrb[0].mxu0 %v1956
        %v1995 = vpop.f32.mrb[0].mxu0
        %v1996 = vadd.f32 0.0, %v1995
        %v1997 = vpop.f32.mrb[0].mxu0
        %v1998 = vpop.f32.mrb[0].mxu0
        %v1999 = vpop.f32.mrb[0].mxu0
        %2000 = vdwg.mxu0
        %v2002 = vsel %vm1678, %v1669, 0
        %v2005 = vsel %vm1678, %v1677, 0
        %2007 = vmatprep.subr.bf16.mxu0 0
        %2008 = vmatpush1.bf16.xpose.msra.mxu0 %v2005
        %2009 = vmatprep.subr.bf16.mxu0 0
        %2010 = vmatpush1.bf16.xpose.msra.mxu0 0
        %2011 = vmatprep.subr.bf16.mxu0 0
        %2012 = vmatpush1.bf16.xpose.msra.mxu0 0
        %2013 = vmatprep.subr.bf16.mxu0 0
        %2014 = vmatpush1.bf16.xpose.msra.mxu0 0
        %2015 = vmatprep.subr.bf16.mxu0 0
        %2016 = vmatpush1.bf16.xpose.msra.mxu0 0
        %2017 = vmatprep.subr.bf16.mxu0 0
        %2018 = vmatpush1.bf16.xpose.msra.mxu0 0
        %2019 = vmatprep.subr.bf16.mxu0 0
        %2020 = vmatpush1.bf16.xpose.msra.mxu0 0
        %2021 = vmatprep.subr.bf16.mxu0 0
        %2022 = vmatpush1.bf16.xpose.msra.mxu0 0
        %2023 = vmatprep.subr.bf16.mxu0 0
        %2024 = vmatpush1.bf16.xpose.msra.mxu0 0
        %2025 = vmatprep.subr.bf16.mxu0 0
        %2026 = vmatpush1.bf16.xpose.msra.mxu0 0
        %2027 = vmatprep.subr.bf16.mxu0 0
        %2028 = vmatpush1.bf16.xpose.msra.mxu0 0
        %2029 = vmatprep.subr.bf16.mxu0 0
        %2030 = vmatpush1.bf16.xpose.msra.mxu0 0
        %2031 = vmatprep.subr.bf16.mxu0 0
        %2032 = vmatpush1.bf16.xpose.msra.mxu0 0
        %2033 = vmatprep.subr.bf16.mxu0 0
        %2034 = vmatpush1.bf16.xpose.msra.mxu0 0
        %2035 = vmatprep.subr.bf16.mxu0 0
        %2036 = vmatpush1.bf16.xpose.msra.mxu0 0
        %2037 = vmatprep.subr.bf16.mxu0 0
        %2038 = vmatpush1.bf16.xpose.msra.mxu0 0
        %2039 = vmatprep.mubr.bf16.mxu0 0
        %2040 = vmatmul.mubr.bf16.gmra.mrb[0].mxu0 %v2002
        %v2041 = vpop.f32.mrb[0].mxu0
        %v2042 = vadd.f32 0.0, %v2041
        %v2043 = vpop.f32.mrb[0].mxu0
        %v2044 = vpop.f32.mrb[0].mxu0
        %v2045 = vpop.f32.mrb[0].mxu0
        %2046 = vdwg.mxu0
        %vm2047 = vcmask 64512
        %v2048 = vsel %vm2047, %v1720, -inf
        %2049 = vmax.xlane.f32.xlu0 %v2048
        %v2050 = vpop.xlane.xlu0 %2049
        %v2051 = vsel %vm2047, %v1766, -inf
        %2052 = vmax.xlane.f32.xlu0 %v2051
        %v2053 = vpop.xlane.xlu0 %2052
        %v2054 = vsel %vm2047, %v1812, -inf
        %2055 = vmax.xlane.f32.xlu0 %v2054
        %v2056 = vpop.xlane.xlu0 %2055
        %v2057 = vsel %vm2047, %v1858, -inf
        %2058 = vmax.xlane.f32.xlu0 %v2057
        %v2059 = vpop.xlane.xlu0 %2058
        %v2060 = vsel %vm2047, %v1904, -inf
        %2061 = vmax.xlane.f32.xlu0 %v2060
        %v2062 = vpop.xlane.xlu0 %2061
        %v2063 = vsel %vm2047, %v1950, -inf
        %2064 = vmax.xlane.f32.xlu0 %v2063
        %v2065 = vpop.xlane.xlu0 %2064
        %v2066 = vsel %vm2047, %v1996, -inf
        %2067 = vmax.xlane.f32.xlu0 %v2066
        %v2068 = vpop.xlane.xlu0 %2067
        %v2069 = vsel %vm2047, %v2042, -inf
        %2070 = vmax.xlane.f32.xlu0 %v2069
        %v2071 = vpop.xlane.xlu0 %2070
        %v2072 = vsub.f32 %v1720, %v2050
        %v2073 = vsub.f32 %v1766, %v2053
        %v2074 = vsub.f32 %v1812, %v2056
        %v2075 = vsub.f32 %v1858, %v2059
        %v2076 = vsub.f32 %v1904, %v2062
        %v2077 = vsub.f32 %v1950, %v2065
        %v2078 = vsub.f32 %v1996, %v2068
        %v2079 = vsub.f32 %v2042, %v2071
        %v2080 = vmul.f32 %v2072, 1.442695
        %v2081 = vpow.pop %v2080
        %v2082 = vmul.f32 %v2073, 1.442695
        %v2083 = vpow.pop %v2082
        %v2084 = vmul.f32 %v2074, 1.442695
        %v2085 = vpow.pop %v2084
        %v2086 = vmul.f32 %v2075, 1.442695
        %v2087 = vpow.pop %v2086
        %v2088 = vmul.f32 %v2076, 1.442695
        %v2089 = vpow.pop %v2088
        %v2090 = vmul.f32 %v2077, 1.442695
        %v2091 = vpow.pop %v2090
        %v2092 = vmul.f32 %v2078, 1.442695
        %v2093 = vpow.pop %v2092
        %v2094 = vmul.f32 %v2079, 1.442695
        %v2095 = vpow.pop %v2094
        %v2096 = vsel %vm2047, %v2081, 0.0
        %2097 = vadd.xlane.f32.xlu0 %v2096
        %v2098 = vpop.xlane.xlu0 %2097
        %v2099 = vsel %vm2047, %v2083, 0.0
        %2100 = vadd.xlane.f32.xlu0 %v2099
        %v2101 = vpop.xlane.xlu0 %2100
        %v2102 = vsel %vm2047, %v2085, 0.0
        %2103 = vadd.xlane.f32.xlu0 %v2102
        %v2104 = vpop.xlane.xlu0 %2103
        %v2105 = vsel %vm2047, %v2087, 0.0
        %2106 = vadd.xlane.f32.xlu0 %v2105
        %v2107 = vpop.xlane.xlu0 %2106
        %v2108 = vsel %vm2047, %v2089, 0.0
        %2109 = vadd.xlane.f32.xlu0 %v2108
        %v2110 = vpop.xlane.xlu0 %2109
        %v2111 = vsel %vm2047, %v2091, 0.0
        %2112 = vadd.xlane.f32.xlu0 %v2111
        %v2113 = vpop.xlane.xlu0 %2112
        %v2114 = vsel %vm2047, %v2093, 0.0
        %2115 = vadd.xlane.f32.xlu0 %v2114
        %v2116 = vpop.xlane.xlu0 %2115
        %v2117 = vsel %vm2047, %v2095, 0.0
        %2118 = vadd.xlane.f32.xlu0 %v2117
        %v2119 = vpop.xlane.xlu0 %2118
        %v2120 = vpack.c.bf16 %v2081, %v2081
        %v2121 = vpack.c.bf16 %v2083, %v2083
        %v2122 = vpack.c.bf16 %v2085, %v2085
        %v2123 = vpack.c.bf16 %v2087, %v2087
        %v2124 = vpack.c.bf16 %v2089, %v2089
        %v2125 = vpack.c.bf16 %v2091, %v2091
        %v2126 = vpack.c.bf16 %v2093, %v2093
        %v2127 = vpack.c.bf16 %v2095, %v2095
        %v2128 = vld [vmem:[#allocation3] sm:$0xf]
        %v2129 = vld [vmem:[#allocation3 + $0x4] sm:$0xf]
        %v2130 = vld [vmem:[#allocation3 + $0x8] sm:$0xf]
        %v2131 = vld [vmem:[#allocation3 + $0xc] sm:$0xf]
        %v2132 = vld [vmem:[#allocation3 + $0x10] sm:$0xf]
        %v2133 = vld [vmem:[#allocation3 + $0x14] sm:$0xf]
        %v2134 = vld [vmem:[#allocation3 + $0x18] sm:$0xf]
        %v2135 = vld [vmem:[#allocation3 + $0x1c] sm:$0xf]
        %v2137 = vsel %vm2047, %v2120, 0
        %vm2139 = vcmask 1043456
        %v2141 = vsel %vm2139, %v2128, 0
        %2143 = vmatprep.subr.bf16.mxu0 0
        %2144 = vmatpush1.bf16.msra.mxu0 %v2141
        %2145 = vmatprep.subr.bf16.mxu0 0
        %2146 = vmatpush1.bf16.msra.mxu0 0
        %2147 = vmatprep.subr.bf16.mxu0 0
        %2148 = vmatpush1.bf16.msra.mxu0 0
        %2149 = vmatprep.subr.bf16.mxu0 0
        %2150 = vmatpush1.bf16.msra.mxu0 0
        %2151 = vmatprep.subr.bf16.mxu0 0
        %2152 = vmatpush1.bf16.msra.mxu0 0
        %2153 = vmatprep.subr.bf16.mxu0 0
        %2154 = vmatpush1.bf16.msra.mxu0 0
        %2155 = vmatprep.subr.bf16.mxu0 0
        %2156 = vmatpush1.bf16.msra.mxu0 0
        %2157 = vmatprep.subr.bf16.mxu0 0
        %2158 = vmatpush1.bf16.msra.mxu0 0
        %2159 = vmatprep.subr.bf16.mxu0 0
        %2160 = vmatpush1.bf16.msra.mxu0 0
        %2161 = vmatprep.subr.bf16.mxu0 0
        %2162 = vmatpush1.bf16.msra.mxu0 0
        %2163 = vmatprep.subr.bf16.mxu0 0
        %2164 = vmatpush1.bf16.msra.mxu0 0
        %2165 = vmatprep.subr.bf16.mxu0 0
        %2166 = vmatpush1.bf16.msra.mxu0 0
        %2167 = vmatprep.subr.bf16.mxu0 0
        %2168 = vmatpush1.bf16.msra.mxu0 0
        %2169 = vmatprep.subr.bf16.mxu0 0
        %2170 = vmatpush1.bf16.msra.mxu0 0
        %2171 = vmatprep.subr.bf16.mxu0 0
        %2172 = vmatpush1.bf16.msra.mxu0 0
        %2173 = vmatprep.subr.bf16.mxu0 0
        %2174 = vmatpush1.bf16.msra.mxu0 0
        %2175 = vmatprep.mubr.bf16.mxu0 0
        %2176 = vmatmul.mubr.bf16.gmra.mrb[0].mxu0 %v2137
        %v2177 = vpop.f32.mrb[0].mxu0
        %v2178 = vadd.f32 0.0, %v2177
        %v2179 = vpop.f32.mrb[0].mxu0
        %v2180 = vpop.f32.mrb[0].mxu0
        %v2181 = vpop.f32.mrb[0].mxu0
        %2182 = vdwg.mxu0
        %v2184 = vsel %vm2047, %v2121, 0
        %v2187 = vsel %vm2139, %v2129, 0
        %2189 = vmatprep.subr.bf16.mxu0 0
        %2190 = vmatpush1.bf16.msra.mxu0 %v2187
        %2191 = vmatprep.subr.bf16.mxu0 0
        %2192 = vmatpush1.bf16.msra.mxu0 0
        %2193 = vmatprep.subr.bf16.mxu0 0
        %2194 = vmatpush1.bf16.msra.mxu0 0
        %2195 = vmatprep.subr.bf16.mxu0 0
        %2196 = vmatpush1.bf16.msra.mxu0 0
        %2197 = vmatprep.subr.bf16.mxu0 0
        %2198 = vmatpush1.bf16.msra.mxu0 0
        %2199 = vmatprep.subr.bf16.mxu0 0
        %2200 = vmatpush1.bf16.msra.mxu0 0
        %2201 = vmatprep.subr.bf16.mxu0 0
        %2202 = vmatpush1.bf16.msra.mxu0 0
        %2203 = vmatprep.subr.bf16.mxu0 0
        %2204 = vmatpush1.bf16.msra.mxu0 0
        %2205 = vmatprep.subr.bf16.mxu0 0
        %2206 = vmatpush1.bf16.msra.mxu0 0
        %2207 = vmatprep.subr.bf16.mxu0 0
        %2208 = vmatpush1.bf16.msra.mxu0 0
        %2209 = vmatprep.subr.bf16.mxu0 0
        %2210 = vmatpush1.bf16.msra.mxu0 0
        %2211 = vmatprep.subr.bf16.mxu0 0
        %2212 = vmatpush1.bf16.msra.mxu0 0
        %2213 = vmatprep.subr.bf16.mxu0 0
        %2214 = vmatpush1.bf16.msra.mxu0 0
        %2215 = vmatprep.subr.bf16.mxu0 0
        %2216 = vmatpush1.bf16.msra.mxu0 0
        %2217 = vmatprep.subr.bf16.mxu0 0
        %2218 = vmatpush1.bf16.msra.mxu0 0
        %2219 = vmatprep.subr.bf16.mxu0 0
        %2220 = vmatpush1.bf16.msra.mxu0 0
        %2221 = vmatprep.mubr.bf16.mxu0 0
        %2222 = vmatmul.mubr.bf16.gmra.mrb[0].mxu0 %v2184
        %v2223 = vpop.f32.mrb[0].mxu0
        %v2224 = vadd.f32 0.0, %v2223
        %v2225 = vpop.f32.mrb[0].mxu0
        %v2226 = vpop.f32.mrb[0].mxu0
        %v2227 = vpop.f32.mrb[0].mxu0
        %2228 = vdwg.mxu0
        %v2230 = vsel %vm2047, %v2122, 0
        %v2233 = vsel %vm2139, %v2130, 0
        %2235 = vmatprep.subr.bf16.mxu0 0
        %2236 = vmatpush1.bf16.msra.mxu0 %v2233
        %2237 = vmatprep.subr.bf16.mxu0 0
        %2238 = vmatpush1.bf16.msra.mxu0 0
        %2239 = vmatprep.subr.bf16.mxu0 0
        %2240 = vmatpush1.bf16.msra.mxu0 0
        %2241 = vmatprep.subr.bf16.mxu0 0
        %2242 = vmatpush1.bf16.msra.mxu0 0
        %2243 = vmatprep.subr.bf16.mxu0 0
        %2244 = vmatpush1.bf16.msra.mxu0 0
        %2245 = vmatprep.subr.bf16.mxu0 0
        %2246 = vmatpush1.bf16.msra.mxu0 0
        %2247 = vmatprep.subr.bf16.mxu0 0
        %2248 = vmatpush1.bf16.msra.mxu0 0
        %2249 = vmatprep.subr.bf16.mxu0 0
        %2250 = vmatpush1.bf16.msra.mxu0 0
        %2251 = vmatprep.subr.bf16.mxu0 0
        %2252 = vmatpush1.bf16.msra.mxu0 0
        %2253 = vmatprep.subr.bf16.mxu0 0
        %2254 = vmatpush1.bf16.msra.mxu0 0
        %2255 = vmatprep.subr.bf16.mxu0 0
        %2256 = vmatpush1.bf16.msra.mxu0 0
        %2257 = vmatprep.subr.bf16.mxu0 0
        %2258 = vmatpush1.bf16.msra.mxu0 0
        %2259 = vmatprep.subr.bf16.mxu0 0
        %2260 = vmatpush1.bf16.msra.mxu0 0
        %2261 = vmatprep.subr.bf16.mxu0 0
        %2262 = vmatpush1.bf16.msra.mxu0 0
        %2263 = vmatprep.subr.bf16.mxu0 0
        %2264 = vmatpush1.bf16.msra.mxu0 0
        %2265 = vmatprep.subr.bf16.mxu0 0
        %2266 = vmatpush1.bf16.msra.mxu0 0
        %2267 = vmatprep.mubr.bf16.mxu0 0
        %2268 = vmatmul.mubr.bf16.gmra.mrb[0].mxu0 %v2230
        %v2269 = vpop.f32.mrb[0].mxu0
        %v2270 = vadd.f32 0.0, %v2269
        %v2271 = vpop.f32.mrb[0].mxu0
        %v2272 = vpop.f32.mrb[0].mxu0
        %v2273 = vpop.f32.mrb[0].mxu0
        %2274 = vdwg.mxu0
        %v2276 = vsel %vm2047, %v2123, 0
        %v2279 = vsel %vm2139, %v2131, 0
        %2281 = vmatprep.subr.bf16.mxu0 0
        %2282 = vmatpush1.bf16.msra.mxu0 %v2279
        %2283 = vmatprep.subr.bf16.mxu0 0
        %2284 = vmatpush1.bf16.msra.mxu0 0
        %2285 = vmatprep.subr.bf16.mxu0 0
        %2286 = vmatpush1.bf16.msra.mxu0 0
        %2287 = vmatprep.subr.bf16.mxu0 0
        %2288 = vmatpush1.bf16.msra.mxu0 0
        %2289 = vmatprep.subr.bf16.mxu0 0
        %2290 = vmatpush1.bf16.msra.mxu0 0
        %2291 = vmatprep.subr.bf16.mxu0 0
        %2292 = vmatpush1.bf16.msra.mxu0 0
        %2293 = vmatprep.subr.bf16.mxu0 0
        %2294 = vmatpush1.bf16.msra.mxu0 0
        %2295 = vmatprep.subr.bf16.mxu0 0
        %2296 = vmatpush1.bf16.msra.mxu0 0
        %2297 = vmatprep.subr.bf16.mxu0 0
        %2298 = vmatpush1.bf16.msra.mxu0 0
        %2299 = vmatprep.subr.bf16.mxu0 0
        %2300 = vmatpush1.bf16.msra.mxu0 0
        %2301 = vmatprep.subr.bf16.mxu0 0
        %2302 = vmatpush1.bf16.msra.mxu0 0
        %2303 = vmatprep.subr.bf16.mxu0 0
        %2304 = vmatpush1.bf16.msra.mxu0 0
        %2305 = vmatprep.subr.bf16.mxu0 0
        %2306 = vmatpush1.bf16.msra.mxu0 0
        %2307 = vmatprep.subr.bf16.mxu0 0
        %2308 = vmatpush1.bf16.msra.mxu0 0
        %2309 = vmatprep.subr.bf16.mxu0 0
        %2310 = vmatpush1.bf16.msra.mxu0 0
        %2311 = vmatprep.subr.bf16.mxu0 0
        %2312 = vmatpush1.bf16.msra.mxu0 0
        %2313 = vmatprep.mubr.bf16.mxu0 0
        %2314 = vmatmul.mubr.bf16.gmra.mrb[0].mxu0 %v2276
        %v2315 = vpop.f32.mrb[0].mxu0
        %v2316 = vadd.f32 0.0, %v2315
        %v2317 = vpop.f32.mrb[0].mxu0
        %v2318 = vpop.f32.mrb[0].mxu0
        %v2319 = vpop.f32.mrb[0].mxu0
        %2320 = vdwg.mxu0
        %v2322 = vsel %vm2047, %v2124, 0
        %v2325 = vsel %vm2139, %v2132, 0
        %2327 = vmatprep.subr.bf16.mxu0 0
        %2328 = vmatpush1.bf16.msra.mxu0 %v2325
        %2329 = vmatprep.subr.bf16.mxu0 0
        %2330 = vmatpush1.bf16.msra.mxu0 0
        %2331 = vmatprep.subr.bf16.mxu0 0
        %2332 = vmatpush1.bf16.msra.mxu0 0
        %2333 = vmatprep.subr.bf16.mxu0 0
        %2334 = vmatpush1.bf16.msra.mxu0 0
        %2335 = vmatprep.subr.bf16.mxu0 0
        %2336 = vmatpush1.bf16.msra.mxu0 0
        %2337 = vmatprep.subr.bf16.mxu0 0
        %2338 = vmatpush1.bf16.msra.mxu0 0
        %2339 = vmatprep.subr.bf16.mxu0 0
        %2340 = vmatpush1.bf16.msra.mxu0 0
        %2341 = vmatprep.subr.bf16.mxu0 0
        %2342 = vmatpush1.bf16.msra.mxu0 0
        %2343 = vmatprep.subr.bf16.mxu0 0
        %2344 = vmatpush1.bf16.msra.mxu0 0
        %2345 = vmatprep.subr.bf16.mxu0 0
        %2346 = vmatpush1.bf16.msra.mxu0 0
        %2347 = vmatprep.subr.bf16.mxu0 0
        %2348 = vmatpush1.bf16.msra.mxu0 0
        %2349 = vmatprep.subr.bf16.mxu0 0
        %2350 = vmatpush1.bf16.msra.mxu0 0
        %2351 = vmatprep.subr.bf16.mxu0 0
        %2352 = vmatpush1.bf16.msra.mxu0 0
        %2353 = vmatprep.subr.bf16.mxu0 0
        %2354 = vmatpush1.bf16.msra.mxu0 0
        %2355 = vmatprep.subr.bf16.mxu0 0
        %2356 = vmatpush1.bf16.msra.mxu0 0
        %2357 = vmatprep.subr.bf16.mxu0 0
        %2358 = vmatpush1.bf16.msra.mxu0 0
        %2359 = vmatprep.mubr.bf16.mxu0 0
        %2360 = vmatmul.mubr.bf16.gmra.mrb[0].mxu0 %v2322
        %v2361 = vpop.f32.mrb[0].mxu0
        %v2362 = vadd.f32 0.0, %v2361
        %v2363 = vpop.f32.mrb[0].mxu0
        %v2364 = vpop.f32.mrb[0].mxu0
        %v2365 = vpop.f32.mrb[0].mxu0
        %2366 = vdwg.mxu0
        %v2368 = vsel %vm2047, %v2125, 0
        %v2371 = vsel %vm2139, %v2133, 0
        %2373 = vmatprep.subr.bf16.mxu0 0
        %2374 = vmatpush1.bf16.msra.mxu0 %v2371
        %2375 = vmatprep.subr.bf16.mxu0 0
        %2376 = vmatpush1.bf16.msra.mxu0 0
        %2377 = vmatprep.subr.bf16.mxu0 0
        %2378 = vmatpush1.bf16.msra.mxu0 0
        %2379 = vmatprep.subr.bf16.mxu0 0
        %2380 = vmatpush1.bf16.msra.mxu0 0
        %2381 = vmatprep.subr.bf16.mxu0 0
        %2382 = vmatpush1.bf16.msra.mxu0 0
        %2383 = vmatprep.subr.bf16.mxu0 0
        %2384 = vmatpush1.bf16.msra.mxu0 0
        %2385 = vmatprep.subr.bf16.mxu0 0
        %2386 = vmatpush1.bf16.msra.mxu0 0
        %2387 = vmatprep.subr.bf16.mxu0 0
        %2388 = vmatpush1.bf16.msra.mxu0 0
        %2389 = vmatprep.subr.bf16.mxu0 0
        %2390 = vmatpush1.bf16.msra.mxu0 0
        %2391 = vmatprep.subr.bf16.mxu0 0
        %2392 = vmatpush1.bf16.msra.mxu0 0
        %2393 = vmatprep.subr.bf16.mxu0 0
        %2394 = vmatpush1.bf16.msra.mxu0 0
        %2395 = vmatprep.subr.bf16.mxu0 0
        %2396 = vmatpush1.bf16.msra.mxu0 0
        %2397 = vmatprep.subr.bf16.mxu0 0
        %2398 = vmatpush1.bf16.msra.mxu0 0
        %2399 = vmatprep.subr.bf16.mxu0 0
        %2400 = vmatpush1.bf16.msra.mxu0 0
        %2401 = vmatprep.subr.bf16.mxu0 0
        %2402 = vmatpush1.bf16.msra.mxu0 0
        %2403 = vmatprep.subr.bf16.mxu0 0
        %2404 = vmatpush1.bf16.msra.mxu0 0
        %2405 = vmatprep.mubr.bf16.mxu0 0
        %2406 = vmatmul.mubr.bf16.gmra.mrb[0].mxu0 %v2368
        %v2407 = vpop.f32.mrb[0].mxu0
        %v2408 = vadd.f32 0.0, %v2407
        %v2409 = vpop.f32.mrb[0].mxu0
        %v2410 = vpop.f32.mrb[0].mxu0
        %v2411 = vpop.f32.mrb[0].mxu0
        %2412 = vdwg.mxu0
        %v2414 = vsel %vm2047, %v2126, 0
        %v2417 = vsel %vm2139, %v2134, 0
        %2419 = vmatprep.subr.bf16.mxu0 0
        %2420 = vmatpush1.bf16.msra.mxu0 %v2417
        %2421 = vmatprep.subr.bf16.mxu0 0
        %2422 = vmatpush1.bf16.msra.mxu0 0
        %2423 = vmatprep.subr.bf16.mxu0 0
        %2424 = vmatpush1.bf16.msra.mxu0 0
        %2425 = vmatprep.subr.bf16.mxu0 0
        %2426 = vmatpush1.bf16.msra.mxu0 0
        %2427 = vmatprep.subr.bf16.mxu0 0
        %2428 = vmatpush1.bf16.msra.mxu0 0
        %2429 = vmatprep.subr.bf16.mxu0 0
        %2430 = vmatpush1.bf16.msra.mxu0 0
        %2431 = vmatprep.subr.bf16.mxu0 0
        %2432 = vmatpush1.bf16.msra.mxu0 0
        %2433 = vmatprep.subr.bf16.mxu0 0
        %2434 = vmatpush1.bf16.msra.mxu0 0
        %2435 = vmatprep.subr.bf16.mxu0 0
        %2436 = vmatpush1.bf16.msra.mxu0 0
        %2437 = vmatprep.subr.bf16.mxu0 0
        %2438 = vmatpush1.bf16.msra.mxu0 0
        %2439 = vmatprep.subr.bf16.mxu0 0
        %2440 = vmatpush1.bf16.msra.mxu0 0
        %2441 = vmatprep.subr.bf16.mxu0 0
        %2442 = vmatpush1.bf16.msra.mxu0 0
        %2443 = vmatprep.subr.bf16.mxu0 0
        %2444 = vmatpush1.bf16.msra.mxu0 0
        %2445 = vmatprep.subr.bf16.mxu0 0
        %2446 = vmatpush1.bf16.msra.mxu0 0
        %2447 = vmatprep.subr.bf16.mxu0 0
        %2448 = vmatpush1.bf16.msra.mxu0 0
        %2449 = vmatprep.subr.bf16.mxu0 0
        %2450 = vmatpush1.bf16.msra.mxu0 0
        %2451 = vmatprep.mubr.bf16.mxu0 0
        %2452 = vmatmul.mubr.bf16.gmra.mrb[0].mxu0 %v2414
        %v2453 = vpop.f32.mrb[0].mxu0
        %v2454 = vadd.f32 0.0, %v2453
        %v2455 = vpop.f32.mrb[0].mxu0
        %v2456 = vpop.f32.mrb[0].mxu0
        %v2457 = vpop.f32.mrb[0].mxu0
        %2458 = vdwg.mxu0
        %v2460 = vsel %vm2047, %v2127, 0
        %v2463 = vsel %vm2139, %v2135, 0
        %2465 = vmatprep.subr.bf16.mxu0 0
        %2466 = vmatpush1.bf16.msra.mxu0 %v2463
        %2467 = vmatprep.subr.bf16.mxu0 0
        %2468 = vmatpush1.bf16.msra.mxu0 0
        %2469 = vmatprep.subr.bf16.mxu0 0
        %2470 = vmatpush1.bf16.msra.mxu0 0
        %2471 = vmatprep.subr.bf16.mxu0 0
        %2472 = vmatpush1.bf16.msra.mxu0 0
        %2473 = vmatprep.subr.bf16.mxu0 0
        %2474 = vmatpush1.bf16.msra.mxu0 0
        %2475 = vmatprep.subr.bf16.mxu0 0
        %2476 = vmatpush1.bf16.msra.mxu0 0
        %2477 = vmatprep.subr.bf16.mxu0 0
        %2478 = vmatpush1.bf16.msra.mxu0 0
        %2479 = vmatprep.subr.bf16.mxu0 0
        %2480 = vmatpush1.bf16.msra.mxu0 0
        %2481 = vmatprep.subr.bf16.mxu0 0
        %2482 = vmatpush1.bf16.msra.mxu0 0
        %2483 = vmatprep.subr.bf16.mxu0 0
        %2484 = vmatpush1.bf16.msra.mxu0 0
        %2485 = vmatprep.subr.bf16.mxu0 0
        %2486 = vmatpush1.bf16.msra.mxu0 0
        %2487 = vmatprep.subr.bf16.mxu0 0
        %2488 = vmatpush1.bf16.msra.mxu0 0
        %2489 = vmatprep.subr.bf16.mxu0 0
        %2490 = vmatpush1.bf16.msra.mxu0 0
        %2491 = vmatprep.subr.bf16.mxu0 0
        %2492 = vmatpush1.bf16.msra.mxu0 0
        %2493 = vmatprep.subr.bf16.mxu0 0
        %2494 = vmatpush1.bf16.msra.mxu0 0
        %2495 = vmatprep.subr.bf16.mxu0 0
        %2496 = vmatpush1.bf16.msra.mxu0 0
        %2497 = vmatprep.mubr.bf16.mxu0 0
        %2498 = vmatmul.mubr.bf16.gmra.mrb[0].mxu0 %v2460
        %v2499 = vpop.f32.mrb[0].mxu0
        %v2500 = vadd.f32 0.0, %v2499
        %v2501 = vpop.f32.mrb[0].mxu0
        %v2502 = vpop.f32.mrb[0].mxu0
        %v2503 = vpop.f32.mrb[0].mxu0
        %2504 = vdwg.mxu0
        %v2505 = vrcp.pop %v2098
        %v2506 = vrcp.pop %v2101
        %v2507 = vrcp.pop %v2104
        %v2508 = vrcp.pop %v2107
        %v2509 = vrcp.pop %v2110
        %v2510 = vrcp.pop %v2113
        %v2511 = vrcp.pop %v2116
        %v2512 = vrcp.pop %v2119
        %v2513 = vmul.f32 %v2178, %v2505
        %v2514 = vmul.f32 %v2224, %v2506
        %v2515 = vmul.f32 %v2270, %v2507
        %v2516 = vmul.f32 %v2316, %v2508
        %v2517 = vmul.f32 %v2362, %v2509
        %v2518 = vmul.f32 %v2408, %v2510
        %v2519 = vmul.f32 %v2454, %v2511
        %v2520 = vmul.f32 %v2500, %v2512
        %v2521 = vcombine.low %v2513, %v2515
        %v2522 = vcombine.high %v2513, %v2515
        %v2524 = vunpack.c.l.s4 1983009808
        %v2525 = vunpack.c.0.s8 %v2524
        %v2526 = vlaneseq
        %v2527 = vshrl.u32 %v2526, 7
        %v2528 = vsub.s32 %v2525, %v2527
        %v2529 = vrot.slane %v2521, %v2528
        %v2531 = vunpack.c.l.s4 1983009808
        %v2532 = vunpack.c.0.s8 %v2531
        %v2533 = vlaneseq
        %v2534 = vshrl.u32 %v2533, 7
        %v2535 = vsub.s32 %v2532, %v2534
        %v2536 = vrot.slane %v2522, %v2535
        %v2537 = vcombine.low %v2514, %v2516
        %v2538 = vcombine.high %v2514, %v2516
        %v2540 = vunpack.c.l.s4 1983009808
        %v2541 = vunpack.c.0.s8 %v2540
        %v2542 = vlaneseq
        %v2543 = vshrl.u32 %v2542, 7
        %v2544 = vsub.s32 %v2541, %v2543
        %v2545 = vrot.slane %v2537, %v2544
        %v2547 = vunpack.c.l.s4 1983009808
        %v2548 = vunpack.c.0.s8 %v2547
        %v2549 = vlaneseq
        %v2550 = vshrl.u32 %v2549, 7
        %v2551 = vsub.s32 %v2548, %v2550
        %v2552 = vrot.slane %v2538, %v2551
        %v2553 = vcombine.low %v2517, %v2519
        %v2554 = vcombine.high %v2517, %v2519
        %v2556 = vunpack.c.l.s4 1983009808
        %v2557 = vunpack.c.0.s8 %v2556
        %v2558 = vlaneseq
        %v2559 = vshrl.u32 %v2558, 7
        %v2560 = vsub.s32 %v2557, %v2559
        %v2561 = vrot.slane %v2553, %v2560
        %v2563 = vunpack.c.l.s4 1983009808
        %v2564 = vunpack.c.0.s8 %v2563
        %v2565 = vlaneseq
        %v2566 = vshrl.u32 %v2565, 7
        %v2567 = vsub.s32 %v2564, %v2566
        %v2568 = vrot.slane %v2554, %v2567
        %v2569 = vcombine.low %v2518, %v2520
        %v2570 = vcombine.high %v2518, %v2520
        %v2572 = vunpack.c.l.s4 1983009808
        %v2573 = vunpack.c.0.s8 %v2572
        %v2574 = vlaneseq
        %v2575 = vshrl.u32 %v2574, 7
        %v2576 = vsub.s32 %v2573, %v2575
        %v2577 = vrot.slane %v2569, %v2576
        %v2579 = vunpack.c.l.s4 1983009808
        %v2580 = vunpack.c.0.s8 %v2579
        %v2581 = vlaneseq
        %v2582 = vshrl.u32 %v2581, 7
        %v2583 = vsub.s32 %v2580, %v2582
        %v2584 = vrot.slane %v2570, %v2583
        %v2585 = vcombine.low %v2529, %v2545
        %v2586 = vcombine.high %v2529, %v2545
        %v2588 = vunpack.c.l.s4 1934713408
        %v2589 = vunpack.c.0.s8 %v2588
        %v2590 = vlaneseq
        %v2591 = vshrl.u32 %v2590, 7
        %v2592 = vsub.s32 %v2589, %v2591
        %v2593 = vrot.slane %v2585, %v2592
        %v2595 = vunpack.c.l.s4 1934713408
        %v2596 = vunpack.c.0.s8 %v2595
        %v2597 = vlaneseq
        %v2598 = vshrl.u32 %v2597, 7
        %v2599 = vsub.s32 %v2596, %v2598
        %v2600 = vrot.slane %v2586, %v2599
        %v2601 = vcombine.low %v2536, %v2552
        %v2602 = vcombine.high %v2536, %v2552
        %v2604 = vunpack.c.l.s4 1934713408
        %v2605 = vunpack.c.0.s8 %v2604
        %v2606 = vlaneseq
        %v2607 = vshrl.u32 %v2606, 7
        %v2608 = vsub.s32 %v2605, %v2607
        %v2609 = vrot.slane %v2601, %v2608
        %v2611 = vunpack.c.l.s4 1934713408
        %v2612 = vunpack.c.0.s8 %v2611
        %v2613 = vlaneseq
        %v2614 = vshrl.u32 %v2613, 7
        %v2615 = vsub.s32 %v2612, %v2614
        %v2616 = vrot.slane %v2602, %v2615
        %v2617 = vcombine.low %v2561, %v2577
        %v2618 = vcombine.high %v2561, %v2577
        %v2620 = vunpack.c.l.s4 1934713408
        %v2621 = vunpack.c.0.s8 %v2620
        %v2622 = vlaneseq
        %v2623 = vshrl.u32 %v2622, 7
        %v2624 = vsub.s32 %v2621, %v2623
        %v2625 = vrot.slane %v2617, %v2624
        %v2627 = vunpack.c.l.s4 1934713408
        %v2628 = vunpack.c.0.s8 %v2627
        %v2629 = vlaneseq
        %v2630 = vshrl.u32 %v2629, 7
        %v2631 = vsub.s32 %v2628, %v2630
        %v2632 = vrot.slane %v2618, %v2631
        %v2633 = vcombine.low %v2568, %v2584
        %v2634 = vcombine.high %v2568, %v2584
        %v2636 = vunpack.c.l.s4 1934713408
        %v2637 = vunpack.c.0.s8 %v2636
        %v2638 = vlaneseq
        %v2639 = vshrl.u32 %v2638, 7
        %v2640 = vsub.s32 %v2637, %v2639
        %v2641 = vrot.slane %v2633, %v2640
        %v2643 = vunpack.c.l.s4 1934713408
        %v2644 = vunpack.c.0.s8 %v2643
        %v2645 = vlaneseq
        %v2646 = vshrl.u32 %v2645, 7
        %v2647 = vsub.s32 %v2644, %v2646
        %v2648 = vrot.slane %v2634, %v2647
        %v2649 = vcombine.low %v2593, %v2625
        %v2650 = vcombine.high %v2593, %v2625
        %v2651 = vcombine.low %v2600, %v2632
        %v2652 = vcombine.high %v2600, %v2632
        %v2653 = vcombine.low %v2609, %v2641
        %v2654 = vcombine.high %v2609, %v2641
        %v2655 = vcombine.low %v2616, %v2648
        %v2656 = vcombine.high %v2616, %v2648
        %v2657 = vcombine.low %v2649, %v2651
        %v2658 = vcombine.high %v2649, %v2651
        %v2660 = vunpack.c.l.s4 1983009808
        %v2661 = vunpack.c.0.s8 %v2660
        %v2662 = vlaneseq
        %v2663 = vshrl.u32 %v2662, 7
        %v2664 = vsub.s32 %v2661, %v2663
        %v2665 = vrot.slane %v2657, %v2664
        %v2667 = vunpack.c.l.s4 1983009808
        %v2668 = vunpack.c.0.s8 %v2667
        %v2669 = vlaneseq
        %v2670 = vshrl.u32 %v2669, 7
        %v2671 = vsub.s32 %v2668, %v2670
        %v2672 = vrot.slane %v2658, %v2671
        %v2673 = vcombine.low %v2650, %v2652
        %v2674 = vcombine.high %v2650, %v2652
        %v2676 = vunpack.c.l.s4 1983009808
        %v2677 = vunpack.c.0.s8 %v2676
        %v2678 = vlaneseq
        %v2679 = vshrl.u32 %v2678, 7
        %v2680 = vsub.s32 %v2677, %v2679
        %v2681 = vrot.slane %v2673, %v2680
        %v2683 = vunpack.c.l.s4 1983009808
        %v2684 = vunpack.c.0.s8 %v2683
        %v2685 = vlaneseq
        %v2686 = vshrl.u32 %v2685, 7
        %v2687 = vsub.s32 %v2684, %v2686
        %v2688 = vrot.slane %v2674, %v2687
        %v2689 = vcombine.low %v2653, %v2655
        %v2690 = vcombine.high %v2653, %v2655
        %v2692 = vunpack.c.l.s4 1983009808
        %v2693 = vunpack.c.0.s8 %v2692
        %v2694 = vlaneseq
        %v2695 = vshrl.u32 %v2694, 7
        %v2696 = vsub.s32 %v2693, %v2695
        %v2697 = vrot.slane %v2689, %v2696
        %v2699 = vunpack.c.l.s4 1983009808
        %v2700 = vunpack.c.0.s8 %v2699
        %v2701 = vlaneseq
        %v2702 = vshrl.u32 %v2701, 7
        %v2703 = vsub.s32 %v2700, %v2702
        %v2704 = vrot.slane %v2690, %v2703
        %v2705 = vcombine.low %v2654, %v2656
        %v2706 = vcombine.high %v2654, %v2656
        %v2708 = vunpack.c.l.s4 1983009808
        %v2709 = vunpack.c.0.s8 %v2708
        %v2710 = vlaneseq
        %v2711 = vshrl.u32 %v2710, 7
        %v2712 = vsub.s32 %v2709, %v2711
        %v2713 = vrot.slane %v2705, %v2712
        %v2715 = vunpack.c.l.s4 1983009808
        %v2716 = vunpack.c.0.s8 %v2715
        %v2717 = vlaneseq
        %v2718 = vshrl.u32 %v2717, 7
        %v2719 = vsub.s32 %v2716, %v2718
        %v2720 = vrot.slane %v2706, %v2719
        %v2721 = vcombine.low %v2665, %v2681
        %v2722 = vcombine.high %v2665, %v2681
        %v2724 = vunpack.c.l.s4 1934713408
        %v2725 = vunpack.c.0.s8 %v2724
        %v2726 = vlaneseq
        %v2727 = vshrl.u32 %v2726, 7
        %v2728 = vsub.s32 %v2725, %v2727
        %v2729 = vrot.slane %v2721, %v2728
        %v2731 = vunpack.c.l.s4 1934713408
        %v2732 = vunpack.c.0.s8 %v2731
        %v2733 = vlaneseq
        %v2734 = vshrl.u32 %v2733, 7
        %v2735 = vsub.s32 %v2732, %v2734
        %v2736 = vrot.slane %v2722, %v2735
        %v2737 = vcombine.low %v2672, %v2688
        %v2738 = vcombine.high %v2672, %v2688
        %v2740 = vunpack.c.l.s4 1934713408
        %v2741 = vunpack.c.0.s8 %v2740
        %v2742 = vlaneseq
        %v2743 = vshrl.u32 %v2742, 7
        %v2744 = vsub.s32 %v2741, %v2743
        %v2745 = vrot.slane %v2737, %v2744
        %v2747 = vunpack.c.l.s4 1934713408
        %v2748 = vunpack.c.0.s8 %v2747
        %v2749 = vlaneseq
        %v2750 = vshrl.u32 %v2749, 7
        %v2751 = vsub.s32 %v2748, %v2750
        %v2752 = vrot.slane %v2738, %v2751
        %v2753 = vcombine.low %v2697, %v2713
        %v2754 = vcombine.high %v2697, %v2713
        %v2756 = vunpack.c.l.s4 1934713408
        %v2757 = vunpack.c.0.s8 %v2756
        %v2758 = vlaneseq
        %v2759 = vshrl.u32 %v2758, 7
        %v2760 = vsub.s32 %v2757, %v2759
        %v2761 = vrot.slane %v2753, %v2760
        %v2763 = vunpack.c.l.s4 1934713408
        %v2764 = vunpack.c.0.s8 %v2763
        %v2765 = vlaneseq
        %v2766 = vshrl.u32 %v2765, 7
        %v2767 = vsub.s32 %v2764, %v2766
        %v2768 = vrot.slane %v2754, %v2767
        %v2769 = vcombine.low %v2704, %v2720
        %v2770 = vcombine.high %v2704, %v2720
        %v2772 = vunpack.c.l.s4 1934713408
        %v2773 = vunpack.c.0.s8 %v2772
        %v2774 = vlaneseq
        %v2775 = vshrl.u32 %v2774, 7
        %v2776 = vsub.s32 %v2773, %v2775
        %v2777 = vrot.slane %v2769, %v2776
        %v2779 = vunpack.c.l.s4 1934713408
        %v2780 = vunpack.c.0.s8 %v2779
        %v2781 = vlaneseq
        %v2782 = vshrl.u32 %v2781, 7
        %v2783 = vsub.s32 %v2780, %v2782
        %v2784 = vrot.slane %v2770, %v2783
        %v2785 = vcombine.low %v2729, %v2761
        %v2786 = vcombine.high %v2729, %v2761
        %v2787 = vcombine.low %v2736, %v2768
        %v2788 = vcombine.high %v2736, %v2768
        %v2789 = vcombine.low %v2745, %v2777
        %v2790 = vcombine.high %v2745, %v2777
        %v2791 = vcombine.low %v2752, %v2784
        %v2792 = vcombine.high %v2752, %v2784
        %2794 = vrot.lane.b32.xlu0 %v2786, 4
        %v2795 = vpop.permute.xlu0 %2794
        %2798 = vrot.lane.b32.xlu0 %v2787, 8
        %v2799 = vpop.permute.xlu0 %2798
        %2802 = vrot.lane.b32.xlu0 %v2788, 12
        %v2803 = vpop.permute.xlu0 %2802
        %2806 = vrot.lane.b32.xlu0 %v2789, 16
        %v2807 = vpop.permute.xlu0 %2806
        %2810 = vrot.lane.b32.xlu0 %v2790, 20
        %v2811 = vpop.permute.xlu0 %2810
        %2814 = vrot.lane.b32.xlu0 %v2791, 24
        %v2815 = vpop.permute.xlu0 %2814
        %2818 = vrot.lane.b32.xlu0 %v2792, 28
        %v2819 = vpop.permute.xlu0 %2818
        %v2821 = vsel %vm1678, %v2785, %v2795
        %v2822 = vsel %vm2047, %v2821, %v2799
        %vm2823 = vcmask 97280
        %v2824 = vsel %vm2823, %v2822, %v2803
        %vm2825 = vcmask 130048
        %v2826 = vsel %vm2825, %v2824, %v2807
        %vm2827 = vcmask 162816
        %v2828 = vsel %vm2827, %v2826, %v2811
        %vm2829 = vcmask 195584
        %v2830 = vsel %vm2829, %v2828, %v2815
        %vm2831 = vcmask 228352
        %v2832 = vsel %vm2831, %v2830, %v2819
        %v2833 = vpack.c.bf16 %v2832, %v2832
        %v2834 = vld [vmem:[#allocation9] sm:$0xf]
        %v2835 = vld [vmem:[#allocation9 + $0x4] sm:$0xf]
        %v2836 = vld [vmem:[#allocation9 + $0x8] sm:$0xf]
        %v2837 = vld [vmem:[#allocation9 + $0xc] sm:$0xf]
        %v2838 = vld [vmem:[#allocation10] sm:$0x1]
        %v2840 = vlaneseq
        %v2841 = vshrl.u32 %v2840, 7
        %v2842 = vsub.s32 0, %v2841
        %v2843 = vrot.slane %v2838, %v2842
        %v2849 = vunpack.c.l.b16 %v2834
        %v2850 = vunpack.c.l.b16 %v2835
        %v2851 = vunpack.c.l.b16 %v2836
        %v2852 = vunpack.c.l.b16 %v2837
        %v2853 = vpack.c.b16 %v2850, %v2849
        %v2854 = vpack.c.b16 %v2852, %v2851
        %v2858 = vsel %vm1410, %v2833, 0
        %2860 = vmatprep.subr.bf16.mxu0 0
        %2861 = vmatpush1.bf16.msra.mxu0 %v2853
        %2862 = vmatprep.subr.bf16.mxu0 0
        %2863 = vmatpush1.bf16.msra.mxu0 %v2854
        %2864 = vmatprep.subr.bf16.mxu0 0
        %2865 = vmatpush1.bf16.msra.mxu0 0
        %2866 = vmatprep.subr.bf16.mxu0 0
        %2867 = vmatpush1.bf16.msra.mxu0 0
        %2868 = vmatprep.subr.bf16.mxu0 0
        %2869 = vmatpush1.bf16.msra.mxu0 0
        %2870 = vmatprep.subr.bf16.mxu0 0
        %2871 = vmatpush1.bf16.msra.mxu0 0
        %2872 = vmatprep.subr.bf16.mxu0 0
        %2873 = vmatpush1.bf16.msra.mxu0 0
        %2874 = vmatprep.subr.bf16.mxu0 0
        %2875 = vmatpush1.bf16.msra.mxu0 0
        %2876 = vmatprep.subr.bf16.mxu0 0
        %2877 = vmatpush1.bf16.msra.mxu0 0
        %2878 = vmatprep.subr.bf16.mxu0 0
        %2879 = vmatpush1.bf16.msra.mxu0 0
        %2880 = vmatprep.subr.bf16.mxu0 0
        %2881 = vmatpush1.bf16.msra.mxu0 0
        %2882 = vmatprep.subr.bf16.mxu0 0
        %2883 = vmatpush1.bf16.msra.mxu0 0
        %2884 = vmatprep.subr.bf16.mxu0 0
        %2885 = vmatpush1.bf16.msra.mxu0 0
        %2886 = vmatprep.subr.bf16.mxu0 0
        %2887 = vmatpush1.bf16.msra.mxu0 0
        %2888 = vmatprep.subr.bf16.mxu0 0
        %2889 = vmatpush1.bf16.msra.mxu0 0
        %2890 = vmatprep.subr.bf16.mxu0 0
        %2891 = vmatpush1.bf16.msra.mxu0 0
        %2892 = vmatprep.mubr.bf16.mxu0 0
        %2893 = vmatmul.mubr.bf16.gmra.mrb[0].mxu0 %v2858
        %v2894 = vpop.f32.mrb[0].mxu0
        %v2895 = vadd.f32 %v2843, %v2894
        %v2896 = vpop.f32.mrb[0].mxu0
        %v2897 = vpop.f32.mrb[0].mxu0
        %v2898 = vpop.f32.mrb[0].mxu0
        %2899 = vdwg.mxu0
        %v2900 = vadd.f32 %v1385, %v2895
        %v2901 = vsel %vm1410, %v2900, 0.0
        %2902 = vadd.xlane.f32.xlu0 %v2901
        %v2903 = vpop.xlane.xlu0 %2902
        %v2904 = vrcp.pop 32.0
        %v2905 = vmul.f32 %v2903, %v2904
        %v2906 = vmul.f32 %v2900, %v2900
        %v2907 = vsel %vm1410, %v2906, 0.0
        %2908 = vadd.xlane.f32.xlu0 %v2907
        %v2909 = vpop.xlane.xlu0 %2908
        %v2910 = vmul.f32 %v2909, %v2904
        %v2911 = vmul.f32 %v2905, %v2905
        %v2912 = vsub.f32 %v2910, %v2911
        %v2913 = vmax.f32 %v2912, 0.0
        %v2914 = vadd.f32 %v2913, 1e-05
        %v2915 = vrsqrt.pop %v2914
        %v2916 = vsub.f32 %v2900, %v2905
        %v2917 = vmul.f32 %v2916, %v2915
        %v2918 = vld [vmem:[#allocation12] sm:$0x1]
        %v2920 = vlaneseq
        %v2921 = vshrl.u32 %v2920, 7
        %v2922 = vsub.s32 0, %v2921
        %v2923 = vrot.slane %v2918, %v2922
        %v2925 = vmul.f32 %v2917, %v2923
        %v2926 = vld [vmem:[%s10] sm:$0x1]
        %v2928 = vlaneseq
        %v2929 = vshrl.u32 %v2928, 7
        %v2930 = vsub.s32 0, %v2929
        %v2931 = vrot.slane %v2926, %v2930
        %v2933 = vadd.f32 %v2925, %v2931
        %v2934 = vpack.c.bf16 %v2933, %v2933
        %v2935 = vld [vmem:[%s13] sm:$0xf]
        %v2936 = vld [vmem:[%s13 + $0x4] sm:$0xf]
        %v2937 = vld [vmem:[%s13 + $0x8] sm:$0xf]
        %v2938 = vld [vmem:[%s13 + $0xc] sm:$0xf]
        %v2939 = vld [vmem:[%s14] sm:$0x1]
        %v2941 = vlaneseq
        %v2942 = vshrl.u32 %v2941, 7
        %v2943 = vsub.s32 0, %v2942
        %v2944 = vrot.slane %v2939, %v2943
        %v2950 = vunpack.c.l.b16 %v2935
        %v2951 = vunpack.c.l.b16 %v2936
        %v2952 = vunpack.c.l.b16 %v2937
        %v2953 = vunpack.c.l.b16 %v2938
        %v2954 = vpack.c.b16 %v2951, %v2950
        %v2955 = vpack.c.b16 %v2953, %v2952
        %v2959 = vsel %vm1410, %v2934, 0
        %2961 = vmatprep.subr.bf16.mxu0 0
        %2962 = vmatpush1.bf16.msra.mxu0 %v2954
        %2963 = vmatprep.subr.bf16.mxu0 0
        %2964 = vmatpush1.bf16.msra.mxu0 %v2955
        %2965 = vmatprep.subr.bf16.mxu0 0
        %2966 = vmatpush1.bf16.msra.mxu0 0
        %2967 = vmatprep.subr.bf16.mxu0 0
        %2968 = vmatpush1.bf16.msra.mxu0 0
        %2969 = vmatprep.subr.bf16.mxu0 0
        %2970 = vmatpush1.bf16.msra.mxu0 0
        %2971 = vmatprep.subr.bf16.mxu0 0
        %2972 = vmatpush1.bf16.msra.mxu0 0
        %2973 = vmatprep.subr.bf16.mxu0 0
        %2974 = vmatpush1.bf16.msra.mxu0 0
        %2975 = vmatprep.subr.bf16.mxu0 0
        %2976 = vmatpush1.bf16.msra.mxu0 0
        %2977 = vmatprep.subr.bf16.mxu0 0
        %2978 = vmatpush1.bf16.msra.mxu0 0
        %2979 = vmatprep.subr.bf16.mxu0 0
        %2980 = vmatpush1.bf16.msra.mxu0 0
        %2981 = vmatprep.subr.bf16.mxu0 0
        %2982 = vmatpush1.bf16.msra.mxu0 0
        %2983 = vmatprep.subr.bf16.mxu0 0
        %2984 = vmatpush1.bf16.msra.mxu0 0
        %2985 = vmatprep.subr.bf16.mxu0 0
        %2986 = vmatpush1.bf16.msra.mxu0 0
        %2987 = vmatprep.subr.bf16.mxu0 0
        %2988 = vmatpush1.bf16.msra.mxu0 0
        %2989 = vmatprep.subr.bf16.mxu0 0
        %2990 = vmatpush1.bf16.msra.mxu0 0
        %2991 = vmatprep.subr.bf16.mxu0 0
        %2992 = vmatpush1.bf16.msra.mxu0 0
        %2993 = vmatprep.mubr.bf16.mxu0 0
        %2994 = vmatmul.mubr.bf16.gmra.mrb[0].mxu0 %v2959
        %v2995 = vpop.f32.mrb[0].mxu0
        %v2996 = vadd.f32 %v2944, %v2995
        %v2997 = vpop.f32.mrb[0].mxu0
        %v2998 = vpop.f32.mrb[0].mxu0
        %v2999 = vpop.f32.mrb[0].mxu0
        %3000 = vdwg.mxu0
        %v3001 = vmax.f32 %v2996, 0.0
        %v3002 = vpack.c.bf16 %v3001, %v3001
        %v3003 = vld [vmem:[%s15] sm:$0xf]
        %v3004 = vld [vmem:[%s15 + $0x4] sm:$0xf]
        %v3005 = vld [vmem:[%s15 + $0x8] sm:$0xf]
        %v3006 = vld [vmem:[%s15 + $0xc] sm:$0xf]
        %v3007 = vld [vmem:[%s15 + $0x10] sm:$0xf]
        %v3008 = vld [vmem:[%s15 + $0x14] sm:$0xf]
        %v3009 = vld [vmem:[%s15 + $0x18] sm:$0xf]
        %v3010 = vld [vmem:[%s15 + $0x1c] sm:$0xf]
        %v3011 = vld [vmem:[%s16] sm:$0x1]
        %v3013 = vlaneseq
        %v3014 = vshrl.u32 %v3013, 7
        %v3015 = vsub.s32 0, %v3014
        %v3016 = vrot.slane %v3011, %v3015
        %v3026 = vunpack.c.l.b16 %v3003
        %v3027 = vunpack.c.l.b16 %v3004
        %v3028 = vunpack.c.l.b16 %v3005
        %v3029 = vunpack.c.l.b16 %v3006
        %v3030 = vunpack.c.l.b16 %v3007
        %v3031 = vunpack.c.l.b16 %v3008
        %v3032 = vunpack.c.l.b16 %v3009
        %v3033 = vunpack.c.l.b16 %v3010
        %v3034 = vpack.c.b16 %v3027, %v3026
        %v3035 = vpack.c.b16 %v3029, %v3028
        %v3036 = vpack.c.b16 %v3031, %v3030
        %v3037 = vpack.c.b16 %v3033, %v3032
        %vm3042 = vcmask 523264
        %v3044 = vsel %vm3042, %v3002, 0
        %3046 = vmatprep.subr.bf16.mxu0 0
        %3047 = vmatpush1.bf16.msra.mxu0 %v3034
        %3048 = vmatprep.subr.bf16.mxu0 0
        %3049 = vmatpush1.bf16.msra.mxu0 %v3035
        %3050 = vmatprep.subr.bf16.mxu0 0
        %3051 = vmatpush1.bf16.msra.mxu0 %v3036
        %3052 = vmatprep.subr.bf16.mxu0 0
        %3053 = vmatpush1.bf16.msra.mxu0 %v3037
        %3054 = vmatprep.subr.bf16.mxu0 0
        %3055 = vmatpush1.bf16.msra.mxu0 0
        %3056 = vmatprep.subr.bf16.mxu0 0
        %3057 = vmatpush1.bf16.msra.mxu0 0
        %3058 = vmatprep.subr.bf16.mxu0 0
        %3059 = vmatpush1.bf16.msra.mxu0 0
        %3060 = vmatprep.subr.bf16.mxu0 0
        %3061 = vmatpush1.bf16.msra.mxu0 0
        %3062 = vmatprep.subr.bf16.mxu0 0
        %3063 = vmatpush1.bf16.msra.mxu0 0
        %3064 = vmatprep.subr.bf16.mxu0 0
        %3065 = vmatpush1.bf16.msra.mxu0 0
        %3066 = vmatprep.subr.bf16.mxu0 0
        %3067 = vmatpush1.bf16.msra.mxu0 0
        %3068 = vmatprep.subr.bf16.mxu0 0
        %3069 = vmatpush1.bf16.msra.mxu0 0
        %3070 = vmatprep.subr.bf16.mxu0 0
        %3071 = vmatpush1.bf16.msra.mxu0 0
        %3072 = vmatprep.subr.bf16.mxu0 0
        %3073 = vmatpush1.bf16.msra.mxu0 0
        %3074 = vmatprep.subr.bf16.mxu0 0
        %3075 = vmatpush1.bf16.msra.mxu0 0
        %3076 = vmatprep.subr.bf16.mxu0 0
        %3077 = vmatpush1.bf16.msra.mxu0 0
        %3078 = vmatprep.mubr.bf16.mxu0 0
        %3079 = vmatmul.mubr.bf16.gmra.mrb[0].mxu0 %v3044
        %v3080 = vpop.f32.mrb[0].mxu0
        %v3081 = vadd.f32 %v3016, %v3080
        %v3082 = vpop.f32.mrb[0].mxu0
        %v3083 = vpop.f32.mrb[0].mxu0
        %v3084 = vpop.f32.mrb[0].mxu0
        %3085 = vdwg.mxu0
        %v3086 = vadd.f32 %v2933, %v3081
        %v3087 = vsel %vm1410, %v3086, 0.0
        %3088 = vadd.xlane.f32.xlu0 %v3087
        %v3089 = vpop.xlane.xlu0 %3088
        %v3090 = vmul.f32 %v3089, %v2904
        %v3091 = vmul.f32 %v3086, %v3086
        %v3092 = vsel %vm1410, %v3091, 0.0
        %3093 = vadd.xlane.f32.xlu0 %v3092
        %v3094 = vpop.xlane.xlu0 %3093
        %v3095 = vmul.f32 %v3094, %v2904
        %v3096 = vmul.f32 %v3090, %v3090
        %v3097 = vsub.f32 %v3095, %v3096
        %v3098 = vmax.f32 %v3097, 0.0
        %v3099 = vadd.f32 %v3098, 1e-05
        %v3100 = vrsqrt.pop %v3099
        %v3101 = vsub.f32 %v3086, %v3090
        %v3102 = vmul.f32 %v3101, %v3100
        %v3103 = vld [vmem:[%s11] sm:$0x1]
        %v3105 = vlaneseq
        %v3106 = vshrl.u32 %v3105, 7
        %v3107 = vsub.s32 0, %v3106
        %v3108 = vrot.slane %v3103, %v3107
        %v3110 = vmul.f32 %v3102, %v3108
        %v3111 = vld [vmem:[%s12] sm:$0x1]
        %v3113 = vlaneseq
        %v3114 = vshrl.u32 %v3113, 7
        %v3115 = vsub.s32 0, %v3114
        %v3116 = vrot.slane %v3111, %v3115
        %v3118 = vadd.f32 %v3110, %v3116
        %3119 = vst.msk [vmem:[%s620] sm:$0xff] %vm1410, %v3118
        %s3120 = sand.u32 %s418, 1
        %s3121 = scalar_lea.sflag [#allocation6], %s3120
        %s3122 = sand.u32 %s418, 1
        %s3123 = smul.addr %s3122, 8
        %s3124 = scalar_lea.vmem [#allocation13], %s3123
        // Predicated region
        $region113: #{tpu_custom_call.1} parent=87 // pred_check
          %p3125 = pneg %p428
        $region114: #{tpu_custom_call.1} parent=87 // pred_check_branch
          %3127 = sbr.rel (%p3125) target = $region116
        $region115: #{tpu_custom_call.1} parent=87 // pred_region
          %s3129 = ssub.s32 128, 128
          %3130 = vsyncadd %s3121, %s3129
          %s3131 = sadd.s32 %s39, %s38
          %s3132 = smul.addr %s3131, 128
          %s3133 = scalar_lea.hbm %s17, %s3132
          %s3135 = sshll.u32 %s3124, 4
          %s3136 = int_to_ptr.vmem [resolvable:$true] %s3135
          %3138 = dma.vmem_to_hbm [thread:$0]  %s3136, 128, %s3133, %s3121
        $region116: #{tpu_custom_call.1} parent=87 // pred_fallthru
          _
      $region88: #{tpu_custom_call.1} parent=5 // pred_fallthru
        _
      %p3139 = scmp.le.s32.totalorder 2, %s29
      // Predicated region
      $region117: #{tpu_custom_call.1} parent=5 // pred_check
        %p3140 = pneg %p3139
      $region118: #{tpu_custom_call.1} parent=5 // pred_check_branch
        %3142 = sbr.rel (%p3140) target = $region120
      $region119: #{tpu_custom_call.1} parent=5 // pred_region
        %s3143 = ssub.s32 %s29, 2
        // Predicated region
        $region121: #{tpu_custom_call.1} parent=119 // pred_check
          %p3144 = pneg %p434
        $region122: #{tpu_custom_call.1} parent=119 // pred_check_branch
          %3146 = sbr.rel (%p3144) target = $region124
        $region123: #{tpu_custom_call.1} parent=119 // pred_region
          %s3147 = sand.u32 %s419, 1
          %s3148 = scalar_lea.sflag [#allocation6], %s3147
          %s3149 = sand.u32 %s419, 1
          %s3150 = smul.addr %s3149, 8
          %s3151 = scalar_lea.vmem [#allocation13], %s3150
          %3152 = dma.done %s3148, 128
        $region124: #{tpu_custom_call.1} parent=119 // pred_fallthru
          _
      $region120: #{tpu_custom_call.1} parent=5 // pred_fallthru
        _
    $region6: #{tpu_custom_call.1} parent=1 // loop_footer
      %s33 = sadd.s32 1, %s29
    $region7: #{tpu_custom_call.1} parent=1 // loop_footer_branch
      %28 = sbr.rel target = $region3
    $region8: #{tpu_custom_call.1} parent=1 // loop_exit
      _
    %3153 = vsyncpa [#allocation5], 1
    %s3154 = scalar_lea.sflag [#allocation5], 1
    %3155 = vsyncpa %s3154, 1
    %3156 = vsyncpa [#allocation8], 1
    %3157 = vsyncpa [#allocation11], 1
    %3158 = vsyncpa [#allocation6], 1
    %s3159 = scalar_lea.sflag [#allocation6], 1
    %3160 = vsyncpa %s3159, 1

</llo_original>
